<compile_context>
chip_gen: v7x
topology: tpu7x:2x2x1
jax: 0.10.0
libtpu: 0.0.40
codegen_flags: <defaults>
</compile_context>

<pallas_src>
import functools

import jax
import jax.numpy as jnp
from jax import lax
from jax.experimental import pallas as pl
from jax.experimental.pallas import tpu as pltpu

BN_EPS = 1e-5


# ----------------------------------------------------------------------------
# helpers
# ----------------------------------------------------------------------------
def _pick_tile(m, target=256):
    """Largest divisor of m that is <= target and a multiple of 8 (else m)."""
    if m <= target:
        return m
    for t in range(target, 7, -1):
        if m % t == 0 and t % 8 == 0:
            return t
    return m


def _block_diag_weight(w, groups):
    """PyTorch OIHW grouped-conv weight -> per-tap block-diagonal (kh*kw, Cin, Cout)."""
    co, cg, kh, kw = w.shape
    cog = co // groups
    wg = w.reshape(groups, cog, cg, kh, kw)
    wg = jnp.transpose(wg, (0, 3, 4, 2, 1))                       # (G, kh, kw, Cg, Cog)
    out = jnp.zeros((kh, kw, groups, cg, groups, cog), w.dtype)
    gidx = jnp.arange(groups)
    out = out.at[:, :, gidx, :, gidx, :].set(wg)
    return out.reshape(kh * kw, groups * cg, co)


def _affine_from_stats(stats, count, gamma, beta):
    """(tiles, 2, C) partial [sum, sumsq] -> per-channel (scale, shift) for BN."""
    s = jnp.sum(stats, axis=0)                                    # (2, C)
    mean = s[0] / count
    var = jnp.maximum(s[1] / count - mean * mean, 0.0)            # biased, like PyTorch BN
    scale = gamma * lax.rsqrt(var + BN_EPS)
    shift = beta - mean * scale
    return scale.reshape(1, -1), shift.reshape(1, -1)


def _pad_and_phase(a, *, pad, stride):
    """Zero-pad NHWC and split into stride*stride spatial phases.

    Returns (stride*stride, N, Hq, Wq, C); phase p = padded[:, (p//s)::s, (p%s)::s, :].
    Taps of a strided conv then become contiguous stride-1 windows of a phase.
    """
    n, h, w, c = a.shape
    hp, wp = h + 2 * pad, w + 2 * pad
    hq = -(-hp // stride)
    wq = -(-wp // stride)
    ap = jnp.pad(a, ((0, 0),
                     (pad, hq * stride - hp + pad),
                     (pad, wq * stride - wp + pad),
                     (0, 0)))
    phases = [ap[:, i::stride, j::stride, :]
              for i in range(stride) for j in range(stride)]
    return jnp.stack(phases, axis=0)


# ----------------------------------------------------------------------------
# Pallas kernels
# ----------------------------------------------------------------------------
def _matmul_stats_kernel(x_ref, w_ref, *rest, fuse_in):
    """1x1 grouped conv as block-diagonal matmul (+ optional fused input BN+ReLU).

    Emits pre-BN output tile and per-tile column [sum, sumsq] for the BN stats.
    """
    if fuse_in:
        in_scale_ref, in_shift_ref, y_ref, stats_ref = rest
    else:
        y_ref, stats_ref = rest
    x = x_ref[...]
    if fuse_in:
        x = jnp.maximum(x * in_scale_ref[...] + in_shift_ref[...], 0.0)
    y = jnp.dot(x, w_ref[...], preferred_element_type=jnp.float32)
    y_ref[...] = y
    ssum = jnp.sum(y, axis=0, keepdims=True)
    ssq = jnp.sum(y * y, axis=0, keepdims=True)
    stats_ref[0] = jnp.concatenate([ssum, ssq], axis=0)


def _spatial_matmul_stats_kernel(xph_ref, w_ref, y_ref, stats_ref, *,
                                 kh, kw, stride, ho, wo):
    """kh x kw strided conv: in-kernel tap accumulation on phase-decomposed input."""
    cin = xph_ref.shape[-1]
    co = w_ref.shape[-1]
    acc = jnp.zeros((ho * wo, co), jnp.float32)
    for ih in range(kh):
        for iw in range(kw):
            p = (ih % stride) * stride + (iw % stride)
            qh, qw = ih // stride, iw // stride
            xt = xph_ref[p, 0, qh:qh + ho, qw:qw + wo, :]          # (ho, wo, Cin)
            xt = xt.reshape(ho * wo, cin)
            acc = acc + jnp.dot(xt, w_ref[ih * kw + iw],
                                preferred_element_type=jnp.float32)
    y_ref[...] = acc
    ssum = jnp.sum(acc, axis=0, keepdims=True)
    ssq = jnp.sum(acc * acc, axis=0, keepdims=True)
    stats_ref[0] = jnp.concatenate([ssum, ssq], axis=0)


def _bn_relu_kernel(y_ref, scale_ref, shift_ref, out_ref):
    out_ref[...] = jnp.maximum(y_ref[...] * scale_ref[...] + shift_ref[...], 0.0)


def _bn_add_relu_kernel(y_ref, res_ref, y_scale_ref, y_shift_ref,
                        r_scale_ref, r_shift_ref, out_ref):
    main = y_ref[...] * y_scale_ref[...] + y_shift_ref[...]
    res = res_ref[...] * r_scale_ref[...] + r_shift_ref[...]
    out_ref[...] = jnp.maximum(main + res, 0.0)


# ----------------------------------------------------------------------------
# pallas_call wrappers
# ----------------------------------------------------------------------------
def _conv1x1_stats(x, w_bd, in_affine=None):
    m, k = x.shape
    co = w_bd.shape[1]
    tm = _pick_tile(m)
    nt = m // tm
    in_specs = [pl.BlockSpec((tm, k), lambda i: (i, 0)),
                pl.BlockSpec((k, co), lambda i: (0, 0))]           # weight resident
    args = [x, w_bd]
    if in_affine is not None:
        in_specs += [pl.BlockSpec((1, k), lambda i: (0, 0)),
                     pl.BlockSpec((1, k), lambda i: (0, 0))]
        args += [in_affine[0], in_affine[1]]
    kernel = functools.partial(_matmul_stats_kernel, fuse_in=in_affine is not None)
    y, stats = pl.pallas_call(
        kernel,
        grid=(nt,),
        in_specs=in_specs,
        out_specs=(pl.BlockSpec((tm, co), lambda i: (i, 0)),
                   pl.BlockSpec((1, 2, co), lambda i: (i, 0, 0))),
        out_shape=(jax.ShapeDtypeStruct((m, co), jnp.float32),
                   jax.ShapeDtypeStruct((nt, 2, co), jnp.float32)),
        compiler_params=pltpu.CompilerParams(dimension_semantics=("parallel",)),
    )(*args)
    return y, stats


def _conv_spatial_stats(xph, w_taps, *, kh, kw, stride, ho, wo):
    ph, n, hq, wq, cin = xph.shape
    co = w_taps.shape[-1]
    m = n * ho * wo
    kernel = functools.partial(_spatial_matmul_stats_kernel,
                               kh=kh, kw=kw, stride=stride, ho=ho, wo=wo)
    y, stats = pl.pallas_call(
        kernel,
        grid=(n,),
        in_specs=[pl.BlockSpec((ph, 1, hq, wq, cin), lambda i: (0, i, 0, 0, 0)),
                  pl.BlockSpec((kh * kw, cin, co), lambda i: (0, 0, 0))],
        out_specs=(pl.BlockSpec((ho * wo, co), lambda i: (i, 0)),
                   pl.BlockSpec((1, 2, co), lambda i: (i, 0, 0))),
        out_shape=(jax.ShapeDtypeStruct((m, co), jnp.float32),
                   jax.ShapeDtypeStruct((n, 2, co), jnp.float32)),
        compiler_params=pltpu.CompilerParams(dimension_semantics=("parallel",)),
    )(xph, w_taps)
    return y, stats


def _bn_relu(y, scale, shift):
    m, c = y.shape
    tm = _pick_tile(m)
    nt = m // tm
    return pl.pallas_call(
        _bn_relu_kernel,
        grid=(nt,),
        in_specs=[pl.BlockSpec((tm, c), lambda i: (i, 0)),
                  pl.BlockSpec((1, c), lambda i: (0, 0)),
                  pl.BlockSpec((1, c), lambda i: (0, 0))],
        out_specs=pl.BlockSpec((tm, c), lambda i: (i, 0)),
        out_shape=jax.ShapeDtypeStruct((m, c), jnp.float32),
        compiler_params=pltpu.CompilerParams(dimension_semantics=("parallel",)),
    )(y, scale, shift)


def _bn_add_relu(y, res, y_aff, r_aff):
    m, c = y.shape
    tm = _pick_tile(m)
    nt = m // tm
    return pl.pallas_call(
        _bn_add_relu_kernel,
        grid=(nt,),
        in_specs=[pl.BlockSpec((tm, c), lambda i: (i, 0)),
                  pl.BlockSpec((tm, c), lambda i: (i, 0)),
                  pl.BlockSpec((1, c), lambda i: (0, 0)),
                  pl.BlockSpec((1, c), lambda i: (0, 0)),
                  pl.BlockSpec((1, c), lambda i: (0, 0)),
                  pl.BlockSpec((1, c), lambda i: (0, 0))],
        out_specs=pl.BlockSpec((tm, c), lambda i: (i, 0)),
        out_shape=jax.ShapeDtypeStruct((m, c), jnp.float32),
        compiler_params=pltpu.CompilerParams(dimension_semantics=("parallel",)),
    )(y, res, y_aff[0], y_aff[1], r_aff[0], r_aff[1])


# ----------------------------------------------------------------------------
# _Bottleneck forward
# ----------------------------------------------------------------------------
def bottleneck_forward(x_nchw, params, *, stride, groups1, groups2):
    x = jnp.transpose(x_nchw, (0, 2, 3, 1))                       # -> NHWC (once)
    n, h, w, c_in = x.shape
    c_mid = params["w1"].shape[0]
    c_out = params["w3"].shape[0]
    kh = params["w2"].shape[2]
    pad = 1
    ho = (h + 2 * pad - kh) // stride + 1
    wo = (w + 2 * pad - kh) // stride + 1
    m1 = n * h * w
    m2 = n * ho * wo

    x_flat = x.reshape(m1, c_in)

    # conv1 (1x1, block-diag groups) -> pre-BN y1 + per-tile BN partials
    w1 = _block_diag_weight(params["w1"], groups1)[0]
    y1, st1 = _conv1x1_stats(x_flat, w1)
    s1, b1 = _affine_from_stats(st1, m1, params["bn1_w"], params["bn1_b"])

    # bn1 + relu must be materialized before conv2's zero padding
    a1 = _bn_relu(y1, s1, b1).reshape(n, h, w, c_mid)

    # conv2 (3x3, stride, pad=1): in-kernel 9-tap accumulation, no 9x im2col
    w2 = _block_diag_weight(params["w2"], groups2)
    xph = _pad_and_phase(a1, pad=pad, stride=stride)
    y2, st2 = _conv_spatial_stats(xph, w2, kh=kh, kw=kh, stride=stride, ho=ho, wo=wo)
    s2, b2 = _affine_from_stats(st2, m2, params["bn2_w"], params["bn2_b"])
    # TODO(synk): Dropout2d p > 0 (training) would need a per-channel PRNG mask
    #             here; dropout_rate == 0.0 so it is the identity.

    # conv3 (1x1): bn2 + relu fused into its input load (A2 never hits HBM)
    w3 = _block_diag_weight(params["w3"], groups2)[0]
    y3, st3 = _conv1x1_stats(y2, w3, in_affine=(s2, b2))
    s3, b3 = _affine_from_stats(st3, m2, params["bn3_w"], params["bn3_b"])

    # shortcut
    if stride != 1 or c_in != c_out:
        xs = x[:, ::stride, ::stride, :].reshape(m2, c_in) if stride != 1 else x_flat
        # TODO(synk): the strided subsample could be folded into the shortcut
        #             kernel's index_map instead of an XLA strided slice.
        wsc = _block_diag_weight(params["wsc"], groups2)[0]
        ysc, stsc = _conv1x1_stats(xs, wsc)
        ss, bs = _affine_from_stats(stsc, m2, params["bnsc_w"], params["bnsc_b"])
    else:
        ysc = x_flat
        ss = jnp.ones((1, c_out), jnp.float32)
        bs = jnp.zeros((1, c_out), jnp.float32)

    # bn3 + shortcut-bn + residual add + relu, fused
    out = _bn_add_relu(y3, ysc, (s3, b3), (ss, bs))
    return jnp.transpose(out.reshape(n, ho, wo, c_out), (0, 3, 1, 2))  # -> NCHW


# ----------------------------------------------------------------------------
# Pure-JAX reference (for correctness check)
# ----------------------------------------------------------------------------
def bottleneck_ref(x, params, *, stride, groups1, groups2):
    def conv(v, wt, s, p, g):
        return lax.conv_general_dilated(v, wt, (s, s), [(p, p), (p, p)],
                                        feature_group_count=g,
                                        dimension_numbers=("NCHW", "OIHW", "NCHW"))

    def bn(v, wt, b):
        mean = jnp.mean(v, axis=(0, 2, 3), keepdims=True)
        var = jnp.mean(jnp.square(v - mean), axis=(0, 2, 3), keepdims=True)
        return (v - mean) * lax.rsqrt(var + BN_EPS) * wt.reshape(1, -1, 1, 1) + b.reshape(1, -1, 1, 1)

    out = jax.nn.relu(bn(conv(x, params["w1"], 1, 0, groups1), params["bn1_w"], params["bn1_b"]))
    out = jax.nn.relu(bn(conv(out, params["w2"], stride, 1, groups2), params["bn2_w"], params["bn2_b"]))
    out = bn(conv(out, params["w3"], 1, 0, groups2), params["bn3_w"], params["bn3_b"])
    if stride != 1 or x.shape[1] != params["w3"].shape[0]:
        sc = bn(conv(x, params["wsc"], stride, 0, groups2), params["bnsc_w"], params["bnsc_b"])
    else:
        sc = x
    return jax.nn.relu(out + sc)


# ----------------------------------------------------------------------------
if __name__ == "__main__":
    # _Bottleneck hyper-parameters (small, deterministic)
    in_planes, planes, stride = 8, 8, 2
    alpha, num_estimators, conv_gamma, groups = 2, 2, 1, 1
    expansion = 4

    c_in = int(in_planes * alpha)                 # 16
    c_mid = int(planes * alpha)                   # 16
    c_out = int(expansion * planes * alpha)       # 64
    groups1 = 1 * groups * num_estimators         # conv1 uses gamma=1
    groups2 = conv_gamma * groups * num_estimators

    key = jax.random.PRNGKey(0)
    ks = jax.random.split(key, 13)
    params = {
        "w1": 0.2 * jax.random.normal(ks[0], (c_mid, c_in // groups1, 1, 1), jnp.float32),
        "w2": 0.2 * jax.random.normal(ks[1], (c_mid, c_mid // groups2, 3, 3), jnp.float32),
        "w3": 0.2 * jax.random.normal(ks[2], (c_out, c_mid // groups2, 1, 1), jnp.float32),
        "wsc": 0.2 * jax.random.normal(ks[3], (c_out, c_in // groups2, 1, 1), jnp.float32),
        "bn1_w": 1.0 + 0.1 * jax.random.normal(ks[4], (c_mid,), jnp.float32),
        "bn1_b": 0.1 * jax.random.normal(ks[5], (c_mid,), jnp.float32),
        "bn2_w": 1.0 + 0.1 * jax.random.normal(ks[6], (c_mid,), jnp.float32),
        "bn2_b": 0.1 * jax.random.normal(ks[7], (c_mid,), jnp.float32),
        "bn3_w": 1.0 + 0.1 * jax.random.normal(ks[8], (c_out,), jnp.float32),
        "bn3_b": 0.1 * jax.random.normal(ks[9], (c_out,), jnp.float32),
        "bnsc_w": 1.0 + 0.1 * jax.random.normal(ks[10], (c_out,), jnp.float32),
        "bnsc_b": 0.1 * jax.random.normal(ks[11], (c_out,), jnp.float32),
    }

    x = jax.random.normal(ks[12], (2, c_in, 16, 16), jnp.float32)  # NCHW

    fwd = jax.jit(functools.partial(bottleneck_forward, stride=stride,
                                    groups1=groups1, groups2=groups2))
    out = jax.block_until_ready(fwd(x, params))

    ref = jax.block_until_ready(
        bottleneck_ref(x, params, stride=stride, groups1=groups1, groups2=groups2))

    assert out.shape == (2, c_out, 16 // stride, 16 // stride), out.shape
    if not jnp.allclose(out, ref, atol=1e-2, rtol=1e-2):
        raise AssertionError(
            f"mismatch: max abs err {float(jnp.max(jnp.abs(out - ref))):.3e}")

    print("KERNEL_OK")
</pallas_src>

<mosaic_0001>
module attributes {stable_mosaic.version = 11 : i64} {
  func.func @_matmul_stats_kernel(%arg0: i32, %arg1: memref<256x16xf32, #tpu.memory_space<vmem>>, %arg2: memref<16x16xf32, #tpu.memory_space<vmem>>, %arg3: memref<256x16xf32, #tpu.memory_space<vmem>>, %arg4: memref<1x2x16xf32, #tpu.memory_space<vmem>>) attributes {dimension_semantics = [#tpu.dimension_semantics<parallel>], iteration_bounds = array<i64: 2>, scalar_prefetch = 0 : i64, scratch_operands = 0 : i64, tpu.core_type = #tpu.core_type<tc>, window_params = [{transform_indices = @transform_0, window_bounds = array<i64: 256, 16>}, {pipeline_mode = #tpu.pipeline_mode<synchronous>, transform_indices = @transform_1, window_bounds = array<i64: 16, 16>}, {transform_indices = @transform_2, window_bounds = array<i64: 256, 16>}, {transform_indices = @transform_3, window_bounds = array<i64: 1, 2, 16>}]} {
    %c0 = arith.constant 0 : index
    %c0_0 = arith.constant 0 : index
    %0 = vector.load %arg1[%c0, %c0_0] : memref<256x16xf32, #tpu.memory_space<vmem>>, vector<256x16xf32>
    %c0_1 = arith.constant 0 : index
    %c0_2 = arith.constant 0 : index
    %1 = vector.load %arg2[%c0_1, %c0_2] : memref<16x16xf32, #tpu.memory_space<vmem>>, vector<16x16xf32>
    %cst = arith.constant dense<0.000000e+00> : vector<256x16xf32>
    %2 = tpu.matmul %0, %1, %cst {dimension_numbers = #tpu.dot_dimension_numbers<[1], [0], [0], [1], [0, 0, 1, 1], [], []>} : vector<256x16xf32>, vector<16x16xf32>, vector<256x16xf32> -> vector<256x16xf32>
    %c0_3 = arith.constant 0 : index
    %c0_4 = arith.constant 0 : index
    %3 = vector.load %arg3[%c0_3, %c0_4] : memref<256x16xf32, #tpu.memory_space<vmem>>, vector<256x16xf32>
    tpu.vector_store %arg3[%c0_3, %c0_4], %2 {strides = array<i32>} : memref<256x16xf32, #tpu.memory_space<vmem>>, vector<256x16xf32>,
    %cst_5 = arith.constant dense<0.000000e+00> : vector<16xf32>
    %4 = vector.multi_reduction <add>, %2, %cst_5 [0] : vector<256x16xf32> to vector<16xf32>
    %5 = vector.shape_cast %4 : vector<16xf32> to vector<1x16xf32>
    %6 = arith.mulf %2, %2 : vector<256x16xf32>
    %cst_6 = arith.constant dense<0.000000e+00> : vector<16xf32>
    %7 = vector.multi_reduction <add>, %6, %cst_6 [0] : vector<256x16xf32> to vector<16xf32>
    %8 = vector.shape_cast %7 : vector<16xf32> to vector<1x16xf32>
    %9 = tpu.concatenate %5, %8 in 0 : vector<1x16xf32>, vector<1x16xf32> -> vector<2x16xf32>
    %c0_7 = arith.constant 0 : index
    %c0_8 = arith.constant 0 : index
    %c0_9 = arith.constant 0 : index
    %10 = vector.load %arg4[%c0_7, %c0_8, %c0_9] : memref<1x2x16xf32, #tpu.memory_space<vmem>>, vector<1x2x16xf32>
    %11 = vector.shape_cast %10 : vector<1x2x16xf32> to vector<2x16xf32>
    %12 = vector.shape_cast %9 : vector<2x16xf32> to vector<1x2x16xf32>
    tpu.vector_store %arg4[%c0_7, %c0_8, %c0_9], %12 {strides = array<i32>} : memref<1x2x16xf32, #tpu.memory_space<vmem>>, vector<1x2x16xf32>,
    return
  }
  func.func @transform_0(%arg0: i32) -> (i32, i32) {
    %c0_i32 = arith.constant 0 : i32
    %c0_i32_0 = arith.constant 0 : i32
    return %arg0, %c0_i32 : i32, i32
  }
  func.func @transform_1(%arg0: i32) -> (i32, i32) {
    %c0_i32 = arith.constant 0 : i32
    %c0_i32_0 = arith.constant 0 : i32
    %c0_i32_1 = arith.constant 0 : i32
    return %c0_i32, %c0_i32_0 : i32, i32
  }
  func.func @transform_2(%arg0: i32) -> (i32, i32) {
    %c0_i32 = arith.constant 0 : i32
    %c0_i32_0 = arith.constant 0 : i32
    return %arg0, %c0_i32 : i32, i32
  }
  func.func @transform_3(%arg0: i32) -> (i32, i32, i32) {
    %c0_i32 = arith.constant 0 : i32
    %c0_i32_0 = arith.constant 0 : i32
    %c0_i32_1 = arith.constant 0 : i32
    return %arg0, %c0_i32, %c0_i32_0 : i32, i32, i32
  }
}

module attributes {stable_mosaic.version = 11 : i64} {
  func.func @_bn_relu_kernel(%arg0: i32, %arg1: memref<256x16xf32, #tpu.memory_space<vmem>>, %arg2: memref<1x16xf32, #tpu.memory_space<vmem>>, %arg3: memref<1x16xf32, #tpu.memory_space<vmem>>, %arg4: memref<256x16xf32, #tpu.memory_space<vmem>>) attributes {dimension_semantics = [#tpu.dimension_semantics<parallel>], iteration_bounds = array<i64: 2>, scalar_prefetch = 0 : i64, scratch_operands = 0 : i64, tpu.core_type = #tpu.core_type<tc>, window_params = [{transform_indices = @transform_0, window_bounds = array<i64: 256, 16>}, {pipeline_mode = #tpu.pipeline_mode<synchronous>, transform_indices = @transform_1, window_bounds = array<i64: 1, 16>}, {pipeline_mode = #tpu.pipeline_mode<synchronous>, transform_indices = @transform_2, window_bounds = array<i64: 1, 16>}, {transform_indices = @transform_3, window_bounds = array<i64: 256, 16>}]} {
    %c0 = arith.constant 0 : index
    %c0_0 = arith.constant 0 : index
    %0 = vector.load %arg1[%c0, %c0_0] : memref<256x16xf32, #tpu.memory_space<vmem>>, vector<256x16xf32>
    %c0_1 = arith.constant 0 : index
    %c0_2 = arith.constant 0 : index
    %1 = vector.load %arg2[%c0_1, %c0_2] : memref<1x16xf32, #tpu.memory_space<vmem>>, vector<1x16xf32>
    %2 = vector.broadcast %1 : vector<1x16xf32> to vector<256x16xf32>
    %3 = arith.mulf %0, %2 : vector<256x16xf32>
    %c0_3 = arith.constant 0 : index
    %c0_4 = arith.constant 0 : index
    %4 = vector.load %arg3[%c0_3, %c0_4] : memref<1x16xf32, #tpu.memory_space<vmem>>, vector<1x16xf32>
    %5 = vector.broadcast %4 : vector<1x16xf32> to vector<256x16xf32>
    %6 = arith.addf %3, %5 : vector<256x16xf32>
    %cst = arith.constant 0.000000e+00 : f32
    %7 = vector.broadcast %cst : f32 to vector<256x16xf32>
    %8 = arith.maximumf %6, %7 : vector<256x16xf32>
    %c0_5 = arith.constant 0 : index
    %c0_6 = arith.constant 0 : index
    %9 = vector.load %arg4[%c0_5, %c0_6] : memref<256x16xf32, #tpu.memory_space<vmem>>, vector<256x16xf32>
    tpu.vector_store %arg4[%c0_5, %c0_6], %8 {strides = array<i32>} : memref<256x16xf32, #tpu.memory_space<vmem>>, vector<256x16xf32>,
    return
  }
  func.func @transform_0(%arg0: i32) -> (i32, i32) {
    %c0_i32 = arith.constant 0 : i32
    %c0_i32_0 = arith.constant 0 : i32
    return %arg0, %c0_i32 : i32, i32
  }
  func.func @transform_1(%arg0: i32) -> (i32, i32) {
    %c0_i32 = arith.constant 0 : i32
    %c0_i32_0 = arith.constant 0 : i32
    %c0_i32_1 = arith.constant 0 : i32
    return %c0_i32, %c0_i32_0 : i32, i32
  }
  func.func @transform_2(%arg0: i32) -> (i32, i32) {
    %c0_i32 = arith.constant 0 : i32
    %c0_i32_0 = arith.constant 0 : i32
    %c0_i32_1 = arith.constant 0 : i32
    return %c0_i32, %c0_i32_0 : i32, i32
  }
  func.func @transform_3(%arg0: i32) -> (i32, i32) {
    %c0_i32 = arith.constant 0 : i32
    %c0_i32_0 = arith.constant 0 : i32
    return %arg0, %c0_i32 : i32, i32
  }
}

module attributes {stable_mosaic.version = 11 : i64} {
  func.func @_spatial_matmul_stats_kernel(%arg0: i32, %arg1: memref<4x1x9x9x16xf32, #tpu.memory_space<vmem>>, %arg2: memref<9x16x16xf32, #tpu.memory_space<vmem>>, %arg3: memref<64x16xf32, #tpu.memory_space<vmem>>, %arg4: memref<1x2x16xf32, #tpu.memory_space<vmem>>) attributes {dimension_semantics = [#tpu.dimension_semantics<parallel>], iteration_bounds = array<i64: 2>, scalar_prefetch = 0 : i64, scratch_operands = 0 : i64, tpu.core_type = #tpu.core_type<tc>, window_params = [{transform_indices = @transform_0, window_bounds = array<i64: 4, 1, 9, 9, 16>}, {pipeline_mode = #tpu.pipeline_mode<synchronous>, transform_indices = @transform_1, window_bounds = array<i64: 9, 16, 16>}, {transform_indices = @transform_2, window_bounds = array<i64: 64, 16>}, {transform_indices = @transform_3, window_bounds = array<i64: 1, 2, 16>}]} {
    %cst = arith.constant 0.000000e+00 : f32
    %0 = vector.broadcast %cst : f32 to vector<64x16xf32>
    %c0 = arith.constant 0 : index
    %c0_0 = arith.constant 0 : index
    %c0_1 = arith.constant 0 : index
    %c0_2 = arith.constant 0 : index
    %c0_3 = arith.constant 0 : index
    %1 = vector.load %arg1[%c0, %c0_0, %c0_1, %c0_2, %c0_3] : memref<4x1x9x9x16xf32, #tpu.memory_space<vmem>>, vector<1x1x8x8x16xf32>
    %2 = vector.shape_cast %1 : vector<1x1x8x8x16xf32> to vector<8x8x16xf32>
    %3 = vector.shape_cast %2 : vector<8x8x16xf32> to vector<64x16xf32>
    %c0_4 = arith.constant 0 : index
    %c0_5 = arith.constant 0 : index
    %c0_6 = arith.constant 0 : index
    %4 = vector.load %arg2[%c0_4, %c0_5, %c0_6] : memref<9x16x16xf32, #tpu.memory_space<vmem>>, vector<1x16x16xf32>
    %5 = vector.shape_cast %4 : vector<1x16x16xf32> to vector<16x16xf32>
    %cst_7 = arith.constant dense<0.000000e+00> : vector<64x16xf32>
    %6 = tpu.matmul %3, %5, %cst_7 {dimension_numbers = #tpu.dot_dimension_numbers<[1], [0], [0], [1], [0, 0, 1, 1], [], []>} : vector<64x16xf32>, vector<16x16xf32>, vector<64x16xf32> -> vector<64x16xf32>
    %7 = arith.addf %0, %6 : vector<64x16xf32>
    %c1 = arith.constant 1 : index
    %c0_8 = arith.constant 0 : index
    %c0_9 = arith.constant 0 : index
    %c0_10 = arith.constant 0 : index
    %c0_11 = arith.constant 0 : index
    %8 = vector.load %arg1[%c1, %c0_8, %c0_9, %c0_10, %c0_11] : memref<4x1x9x9x16xf32, #tpu.memory_space<vmem>>, vector<1x1x8x8x16xf32>
    %9 = vector.shape_cast %8 : vector<1x1x8x8x16xf32> to vector<8x8x16xf32>
    %10 = vector.shape_cast %9 : vector<8x8x16xf32> to vector<64x16xf32>
    %c1_12 = arith.constant 1 : index
    %c0_13 = arith.constant 0 : index
    %c0_14 = arith.constant 0 : index
    %11 = vector.load %arg2[%c1_12, %c0_13, %c0_14] : memref<9x16x16xf32, #tpu.memory_space<vmem>>, vector<1x16x16xf32>
    %12 = vector.shape_cast %11 : vector<1x16x16xf32> to vector<16x16xf32>
    %cst_15 = arith.constant dense<0.000000e+00> : vector<64x16xf32>
    %13 = tpu.matmul %10, %12, %cst_15 {dimension_numbers = #tpu.dot_dimension_numbers<[1], [0], [0], [1], [0, 0, 1, 1], [], []>} : vector<64x16xf32>, vector<16x16xf32>, vector<64x16xf32> -> vector<64x16xf32>
    %14 = arith.addf %7, %13 : vector<64x16xf32>
    %c0_16 = arith.constant 0 : index
    %c0_17 = arith.constant 0 : index
    %c0_18 = arith.constant 0 : index
    %c1_19 = arith.constant 1 : index
    %c0_20 = arith.constant 0 : index
    %15 = vector.load %arg1[%c0_16, %c0_17, %c0_18, %c1_19, %c0_20] : memref<4x1x9x9x16xf32, #tpu.memory_space<vmem>>, vector<1x1x8x8x16xf32>
    %16 = vector.shape_cast %15 : vector<1x1x8x8x16xf32> to vector<8x8x16xf32>
    %17 = vector.shape_cast %16 : vector<8x8x16xf32> to vector<64x16xf32>
    %c2 = arith.constant 2 : index
    %c0_21 = arith.constant 0 : index
    %c0_22 = arith.constant 0 : index
    %18 = vector.load %arg2[%c2, %c0_21, %c0_22] : memref<9x16x16xf32, #tpu.memory_space<vmem>>, vector<1x16x16xf32>
    %19 = vector.shape_cast %18 : vector<1x16x16xf32> to vector<16x16xf32>
    %cst_23 = arith.constant dense<0.000000e+00> : vector<64x16xf32>
    %20 = tpu.matmul %17, %19, %cst_23 {dimension_numbers = #tpu.dot_dimension_numbers<[1], [0], [0], [1], [0, 0, 1, 1], [], []>} : vector<64x16xf32>, vector<16x16xf32>, vector<64x16xf32> -> vector<64x16xf32>
    %21 = arith.addf %14, %20 : vector<64x16xf32>
    %c2_24 = arith.constant 2 : index
    %c0_25 = arith.constant 0 : index
    %c0_26 = arith.constant 0 : index
    %c0_27 = arith.constant 0 : index
    %c0_28 = arith.constant 0 : index
    %22 = vector.load %arg1[%c2_24, %c0_25, %c0_26, %c0_27, %c0_28] : memref<4x1x9x9x16xf32, #tpu.memory_space<vmem>>, vector<1x1x8x8x16xf32>
    %23 = vector.shape_cast %22 : vector<1x1x8x8x16xf32> to vector<8x8x16xf32>
    %24 = vector.shape_cast %23 : vector<8x8x16xf32> to vector<64x16xf32>
    %c3 = arith.constant 3 : index
    %c0_29 = arith.constant 0 : index
    %c0_30 = arith.constant 0 : index
    %25 = vector.load %arg2[%c3, %c0_29, %c0_30] : memref<9x16x16xf32, #tpu.memory_space<vmem>>, vector<1x16x16xf32>
    %26 = vector.shape_cast %25 : vector<1x16x16xf32> to vector<16x16xf32>
    %cst_31 = arith.constant dense<0.000000e+00> : vector<64x16xf32>
    %27 = tpu.matmul %24, %26, %cst_31 {dimension_numbers = #tpu.dot_dimension_numbers<[1], [0], [0], [1], [0, 0, 1, 1], [], []>} : vector<64x16xf32>, vector<16x16xf32>, vector<64x16xf32> -> vector<64x16xf32>
    %28 = arith.addf %21, %27 : vector<64x16xf32>
    %c3_32 = arith.constant 3 : index
    %c0_33 = arith.constant 0 : index
    %c0_34 = arith.constant 0 : index
    %c0_35 = arith.constant 0 : index
    %c0_36 = arith.constant 0 : index
    %29 = vector.load %arg1[%c3_32, %c0_33, %c0_34, %c0_35, %c0_36] : memref<4x1x9x9x16xf32, #tpu.memory_space<vmem>>, vector<1x1x8x8x16xf32>
    %30 = vector.shape_cast %29 : vector<1x1x8x8x16xf32> to vector<8x8x16xf32>
    %31 = vector.shape_cast %30 : vector<8x8x16xf32> to vector<64x16xf32>
    %c4 = arith.constant 4 : index
    %c0_37 = arith.constant 0 : index
    %c0_38 = arith.constant 0 : index
    %32 = vector.load %arg2[%c4, %c0_37, %c0_38] : memref<9x16x16xf32, #tpu.memory_space<vmem>>, vector<1x16x16xf32>
    %33 = vector.shape_cast %32 : vector<1x16x16xf32> to vector<16x16xf32>
    %cst_39 = arith.constant dense<0.000000e+00> : vector<64x16xf32>
    %34 = tpu.matmul %31, %33, %cst_39 {dimension_numbers = #tpu.dot_dimension_numbers<[1], [0], [0], [1], [0, 0, 1, 1], [], []>} : vector<64x16xf32>, vector<16x16xf32>, vector<64x16xf32> -> vector<64x16xf32>
    %35 = arith.addf %28, %34 : vector<64x16xf32>
    %c2_40 = arith.constant 2 : index
    %c0_41 = arith.constant 0 : index
    %c0_42 = arith.constant 0 : index
    %c1_43 = arith.constant 1 : index
    %c0_44 = arith.constant 0 : index
    %36 = vector.load %arg1[%c2_40, %c0_41, %c0_42, %c1_43, %c0_44] : memref<4x1x9x9x16xf32, #tpu.memory_space<vmem>>, vector<1x1x8x8x16xf32>
    %37 = vector.shape_cast %36 : vector<1x1x8x8x16xf32> to vector<8x8x16xf32>
    %38 = vector.shape_cast %37 : vector<8x8x16xf32> to vector<64x16xf32>
    %c5 = arith.constant 5 : index
    %c0_45 = arith.constant 0 : index
    %c0_46 = arith.constant 0 : index
    %39 = vector.load %arg2[%c5, %c0_45, %c0_46] : memref<9x16x16xf32, #tpu.memory_space<vmem>>, vector<1x16x16xf32>
    %40 = vector.shape_cast %39 : vector<1x16x16xf32> to vector<16x16xf32>
    %cst_47 = arith.constant dense<0.000000e+00> : vector<64x16xf32>
    %41 = tpu.matmul %38, %40, %cst_47 {dimension_numbers = #tpu.dot_dimension_numbers<[1], [0], [0], [1], [0, 0, 1, 1], [], []>} : vector<64x16xf32>, vector<16x16xf32>, vector<64x16xf32> -> vector<64x16xf32>
    %42 = arith.addf %35, %41 : vector<64x16xf32>
    %c0_48 = arith.constant 0 : index
    %c0_49 = arith.constant 0 : index
    %c1_50 = arith.constant 1 : index
    %c0_51 = arith.constant 0 : index
    %c0_52 = arith.constant 0 : index
    %43 = vector.load %arg1[%c0_48, %c0_49, %c1_50, %c0_51, %c0_52] : memref<4x1x9x9x16xf32, #tpu.memory_space<vmem>>, vector<1x1x8x8x16xf32>
    %44 = vector.shape_cast %43 : vector<1x1x8x8x16xf32> to vector<8x8x16xf32>
    %45 = vector.shape_cast %44 : vector<8x8x16xf32> to vector<64x16xf32>
    %c6 = arith.constant 6 : index
    %c0_53 = arith.constant 0 : index
    %c0_54 = arith.constant 0 : index
    %46 = vector.load %arg2[%c6, %c0_53, %c0_54] : memref<9x16x16xf32, #tpu.memory_space<vmem>>, vector<1x16x16xf32>
    %47 = vector.shape_cast %46 : vector<1x16x16xf32> to vector<16x16xf32>
    %cst_55 = arith.constant dense<0.000000e+00> : vector<64x16xf32>
    %48 = tpu.matmul %45, %47, %cst_55 {dimension_numbers = #tpu.dot_dimension_numbers<[1], [0], [0], [1], [0, 0, 1, 1], [], []>} : vector<64x16xf32>, vector<16x16xf32>, vector<64x16xf32> -> vector<64x16xf32>
    %49 = arith.addf %42, %48 : vector<64x16xf32>
    %c1_56 = arith.constant 1 : index
    %c0_57 = arith.constant 0 : index
    %c1_58 = arith.constant 1 : index
    %c0_59 = arith.constant 0 : index
    %c0_60 = arith.constant 0 : index
    %50 = vector.load %arg1[%c1_56, %c0_57, %c1_58, %c0_59, %c0_60] : memref<4x1x9x9x16xf32, #tpu.memory_space<vmem>>, vector<1x1x8x8x16xf32>
    %51 = vector.shape_cast %50 : vector<1x1x8x8x16xf32> to vector<8x8x16xf32>
    %52 = vector.shape_cast %51 : vector<8x8x16xf32> to vector<64x16xf32>
    %c7 = arith.constant 7 : index
    %c0_61 = arith.constant 0 : index
    %c0_62 = arith.constant 0 : index
    %53 = vector.load %arg2[%c7, %c0_61, %c0_62] : memref<9x16x16xf32, #tpu.memory_space<vmem>>, vector<1x16x16xf32>
    %54 = vector.shape_cast %53 : vector<1x16x16xf32> to vector<16x16xf32>
    %cst_63 = arith.constant dense<0.000000e+00> : vector<64x16xf32>
    %55 = tpu.matmul %52, %54, %cst_63 {dimension_numbers = #tpu.dot_dimension_numbers<[1], [0], [0], [1], [0, 0, 1, 1], [], []>} : vector<64x16xf32>, vector<16x16xf32>, vector<64x16xf32> -> vector<64x16xf32>
    %56 = arith.addf %49, %55 : vector<64x16xf32>
    %c0_64 = arith.constant 0 : index
    %c0_65 = arith.constant 0 : index
    %c1_66 = arith.constant 1 : index
    %c1_67 = arith.constant 1 : index
    %c0_68 = arith.constant 0 : index
    %57 = vector.load %arg1[%c0_64, %c0_65, %c1_66, %c1_67, %c0_68] : memref<4x1x9x9x16xf32, #tpu.memory_space<vmem>>, vector<1x1x8x8x16xf32>
    %58 = vector.shape_cast %57 : vector<1x1x8x8x16xf32> to vector<8x8x16xf32>
    %59 = vector.shape_cast %58 : vector<8x8x16xf32> to vector<64x16xf32>
    %c8 = arith.constant 8 : index
    %c0_69 = arith.constant 0 : index
    %c0_70 = arith.constant 0 : index
    %60 = vector.load %arg2[%c8, %c0_69, %c0_70] : memref<9x16x16xf32, #tpu.memory_space<vmem>>, vector<1x16x16xf32>
    %61 = vector.shape_cast %60 : vector<1x16x16xf32> to vector<16x16xf32>
    %cst_71 = arith.constant dense<0.000000e+00> : vector<64x16xf32>
    %62 = tpu.matmul %59, %61, %cst_71 {dimension_numbers = #tpu.dot_dimension_numbers<[1], [0], [0], [1], [0, 0, 1, 1], [], []>} : vector<64x16xf32>, vector<16x16xf32>, vector<64x16xf32> -> vector<64x16xf32>
    %63 = arith.addf %56, %62 : vector<64x16xf32>
    %c0_72 = arith.constant 0 : index
    %c0_73 = arith.constant 0 : index
    %64 = vector.load %arg3[%c0_72, %c0_73] : memref<64x16xf32, #tpu.memory_space<vmem>>, vector<64x16xf32>
    tpu.vector_store %arg3[%c0_72, %c0_73], %63 {strides = array<i32>} : memref<64x16xf32, #tpu.memory_space<vmem>>, vector<64x16xf32>,
    %cst_74 = arith.constant dense<0.000000e+00> : vector<16xf32>
    %65 = vector.multi_reduction <add>, %63, %cst_74 [0] : vector<64x16xf32> to vector<16xf32>
    %66 = vector.shape_cast %65 : vector<16xf32> to vector<1x16xf32>
    %67 = arith.mulf %63, %63 : vector<64x16xf32>
    %cst_75 = arith.constant dense<0.000000e+00> : vector<16xf32>
    %68 = vector.multi_reduction <add>, %67, %cst_75 [0] : vector<64x16xf32> to vector<16xf32>
    %69 = vector.shape_cast %68 : vector<16xf32> to vector<1x16xf32>
    %70 = tpu.concatenate %66, %69 in 0 : vector<1x16xf32>, vector<1x16xf32> -> vector<2x16xf32>
    %c0_76 = arith.constant 0 : index
    %c0_77 = arith.constant 0 : index
    %c0_78 = arith.constant 0 : index
    %71 = vector.load %arg4[%c0_76, %c0_77, %c0_78] : memref<1x2x16xf32, #tpu.memory_space<vmem>>, vector<1x2x16xf32>
    %72 = vector.shape_cast %71 : vector<1x2x16xf32> to vector<2x16xf32>
    %73 = vector.shape_cast %70 : vector<2x16xf32> to vector<1x2x16xf32>
    tpu.vector_store %arg4[%c0_76, %c0_77, %c0_78], %73 {strides = array<i32>} : memref<1x2x16xf32, #tpu.memory_space<vmem>>, vector<1x2x16xf32>,
    return
  }
  func.func @transform_0(%arg0: i32) -> (i32, i32, i32, i32, i32) {
    %c0_i32 = arith.constant 0 : i32
    %c0_i32_0 = arith.constant 0 : i32
    %c0_i32_1 = arith.constant 0 : i32
    %c0_i32_2 = arith.constant 0 : i32
    %c0_i32_3 = arith.constant 0 : i32
    return %c0_i32, %arg0, %c0_i32_0, %c0_i32_1, %c0_i32_2 : i32, i32, i32, i32, i32
  }
  func.func @transform_1(%arg0: i32) -> (i32, i32, i32) {
    %c0_i32 = arith.constant 0 : i32
    %c0_i32_0 = arith.constant 0 : i32
    %c0_i32_1 = arith.constant 0 : i32
    %c0_i32_2 = arith.constant 0 : i32
    return %c0_i32, %c0_i32_0, %c0_i32_1 : i32, i32, i32
  }
  func.func @transform_2(%arg0: i32) -> (i32, i32) {
    %c0_i32 = arith.constant 0 : i32
    %c0_i32_0 = arith.constant 0 : i32
    return %arg0, %c0_i32 : i32, i32
  }
  func.func @transform_3(%arg0: i32) -> (i32, i32, i32) {
    %c0_i32 = arith.constant 0 : i32
    %c0_i32_0 = arith.constant 0 : i32
    %c0_i32_1 = arith.constant 0 : i32
    return %arg0, %c0_i32, %c0_i32_0 : i32, i32, i32
  }
}

module attributes {stable_mosaic.version = 11 : i64} {
  func.func @_matmul_stats_kernel(%arg0: i32, %arg1: memref<128x16xf32, #tpu.memory_space<vmem>>, %arg2: memref<16x64xf32, #tpu.memory_space<vmem>>, %arg3: memref<1x16xf32, #tpu.memory_space<vmem>>, %arg4: memref<1x16xf32, #tpu.memory_space<vmem>>, %arg5: memref<128x64xf32, #tpu.memory_space<vmem>>, %arg6: memref<1x2x64xf32, #tpu.memory_space<vmem>>) attributes {dimension_semantics = [#tpu.dimension_semantics<parallel>], iteration_bounds = array<i64: 1>, scalar_prefetch = 0 : i64, scratch_operands = 0 : i64, tpu.core_type = #tpu.core_type<tc>, window_params = [{transform_indices = @transform_0, window_bounds = array<i64: 128, 16>}, {pipeline_mode = #tpu.pipeline_mode<synchronous>, transform_indices = @transform_1, window_bounds = array<i64: 16, 64>}, {pipeline_mode = #tpu.pipeline_mode<synchronous>, transform_indices = @transform_2, window_bounds = array<i64: 1, 16>}, {pipeline_mode = #tpu.pipeline_mode<synchronous>, transform_indices = @transform_3, window_bounds = array<i64: 1, 16>}, {transform_indices = @transform_4, window_bounds = array<i64: 128, 64>}, {transform_indices = @transform_5, window_bounds = array<i64: 1, 2, 64>}]} {
    %c0 = arith.constant 0 : index
    %c0_0 = arith.constant 0 : index
    %0 = vector.load %arg1[%c0, %c0_0] : memref<128x16xf32, #tpu.memory_space<vmem>>, vector<128x16xf32>
    %c0_1 = arith.constant 0 : index
    %c0_2 = arith.constant 0 : index
    %1 = vector.load %arg3[%c0_1, %c0_2] : memref<1x16xf32, #tpu.memory_space<vmem>>, vector<1x16xf32>
    %2 = vector.broadcast %1 : vector<1x16xf32> to vector<128x16xf32>
    %3 = arith.mulf %0, %2 : vector<128x16xf32>
    %c0_3 = arith.constant 0 : index
    %c0_4 = arith.constant 0 : index
    %4 = vector.load %arg4[%c0_3, %c0_4] : memref<1x16xf32, #tpu.memory_space<vmem>>, vector<1x16xf32>
    %5 = vector.broadcast %4 : vector<1x16xf32> to vector<128x16xf32>
    %6 = arith.addf %3, %5 : vector<128x16xf32>
    %cst = arith.constant 0.000000e+00 : f32
    %7 = vector.broadcast %cst : f32 to vector<128x16xf32>
    %8 = arith.maximumf %6, %7 : vector<128x16xf32>
    %c0_5 = arith.constant 0 : index
    %c0_6 = arith.constant 0 : index
    %9 = vector.load %arg2[%c0_5, %c0_6] : memref<16x64xf32, #tpu.memory_space<vmem>>, vector<16x64xf32>
    %cst_7 = arith.constant dense<0.000000e+00> : vector<128x64xf32>
    %10 = tpu.matmul %8, %9, %cst_7 {dimension_numbers = #tpu.dot_dimension_numbers<[1], [0], [0], [1], [0, 0, 1, 1], [], []>} : vector<128x16xf32>, vector<16x64xf32>, vector<128x64xf32> -> vector<128x64xf32>
    %c0_8 = arith.constant 0 : index
    %c0_9 = arith.constant 0 : index
    %11 = vector.load %arg5[%c0_8, %c0_9] : memref<128x64xf32, #tpu.memory_space<vmem>>, vector<128x64xf32>
    tpu.vector_store %arg5[%c0_8, %c0_9], %10 {strides = array<i32>} : memref<128x64xf32, #tpu.memory_space<vmem>>, vector<128x64xf32>,
    %cst_10 = arith.constant dense<0.000000e+00> : vector<64xf32>
    %12 = vector.multi_reduction <add>, %10, %cst_10 [0] : vector<128x64xf32> to vector<64xf32>
    %13 = vector.shape_cast %12 : vector<64xf32> to vector<1x64xf32>
    %14 = arith.mulf %10, %10 : vector<128x64xf32>
    %cst_11 = arith.constant dense<0.000000e+00> : vector<64xf32>
    %15 = vector.multi_reduction <add>, %14, %cst_11 [0] : vector<128x64xf32> to vector<64xf32>
    %16 = vector.shape_cast %15 : vector<64xf32> to vector<1x64xf32>
    %17 = tpu.concatenate %13, %16 in 0 : vector<1x64xf32>, vector<1x64xf32> -> vector<2x64xf32>
    %c0_12 = arith.constant 0 : index
    %c0_13 = arith.constant 0 : index
    %c0_14 = arith.constant 0 : index
    %18 = vector.load %arg6[%c0_12, %c0_13, %c0_14] : memref<1x2x64xf32, #tpu.memory_space<vmem>>, vector<1x2x64xf32>
    %19 = vector.shape_cast %18 : vector<1x2x64xf32> to vector<2x64xf32>
    %20 = vector.shape_cast %17 : vector<2x64xf32> to vector<1x2x64xf32>
    tpu.vector_store %arg6[%c0_12, %c0_13, %c0_14], %20 {strides = array<i32>} : memref<1x2x64xf32, #tpu.memory_space<vmem>>, vector<1x2x64xf32>,
    return
  }
  func.func @transform_0(%arg0: i32) -> (i32, i32) {
    %c0_i32 = arith.constant 0 : i32
    %c0_i32_0 = arith.constant 0 : i32
    return %arg0, %c0_i32 : i32, i32
  }
  func.func @transform_1(%arg0: i32) -> (i32, i32) {
    %c0_i32 = arith.constant 0 : i32
    %c0_i32_0 = arith.constant 0 : i32
    %c0_i32_1 = arith.constant 0 : i32
    return %c0_i32, %c0_i32_0 : i32, i32
  }
  func.func @transform_2(%arg0: i32) -> (i32, i32) {
    %c0_i32 = arith.constant 0 : i32
    %c0_i32_0 = arith.constant 0 : i32
    %c0_i32_1 = arith.constant 0 : i32
    return %c0_i32, %c0_i32_0 : i32, i32
  }
  func.func @transform_3(%arg0: i32) -> (i32, i32) {
    %c0_i32 = arith.constant 0 : i32
    %c0_i32_0 = arith.constant 0 : i32
    %c0_i32_1 = arith.constant 0 : i32
    return %c0_i32, %c0_i32_0 : i32, i32
  }
  func.func @transform_4(%arg0: i32) -> (i32, i32) {
    %c0_i32 = arith.constant 0 : i32
    %c0_i32_0 = arith.constant 0 : i32
    return %arg0, %c0_i32 : i32, i32
  }
  func.func @transform_5(%arg0: i32) -> (i32, i32, i32) {
    %c0_i32 = arith.constant 0 : i32
    %c0_i32_0 = arith.constant 0 : i32
    %c0_i32_1 = arith.constant 0 : i32
    return %arg0, %c0_i32, %c0_i32_0 : i32, i32, i32
  }
}

module attributes {stable_mosaic.version = 11 : i64} {
  func.func @_matmul_stats_kernel(%arg0: i32, %arg1: memref<128x16xf32, #tpu.memory_space<vmem>>, %arg2: memref<16x64xf32, #tpu.memory_space<vmem>>, %arg3: memref<128x64xf32, #tpu.memory_space<vmem>>, %arg4: memref<1x2x64xf32, #tpu.memory_space<vmem>>) attributes {dimension_semantics = [#tpu.dimension_semantics<parallel>], iteration_bounds = array<i64: 1>, scalar_prefetch = 0 : i64, scratch_operands = 0 : i64, tpu.core_type = #tpu.core_type<tc>, window_params = [{transform_indices = @transform_0, window_bounds = array<i64: 128, 16>}, {pipeline_mode = #tpu.pipeline_mode<synchronous>, transform_indices = @transform_1, window_bounds = array<i64: 16, 64>}, {transform_indices = @transform_2, window_bounds = array<i64: 128, 64>}, {transform_indices = @transform_3, window_bounds = array<i64: 1, 2, 64>}]} {
    %c0 = arith.constant 0 : index
    %c0_0 = arith.constant 0 : index
    %0 = vector.load %arg1[%c0, %c0_0] : memref<128x16xf32, #tpu.memory_space<vmem>>, vector<128x16xf32>
    %c0_1 = arith.constant 0 : index
    %c0_2 = arith.constant 0 : index
    %1 = vector.load %arg2[%c0_1, %c0_2] : memref<16x64xf32, #tpu.memory_space<vmem>>, vector<16x64xf32>
    %cst = arith.constant dense<0.000000e+00> : vector<128x64xf32>
    %2 = tpu.matmul %0, %1, %cst {dimension_numbers = #tpu.dot_dimension_numbers<[1], [0], [0], [1], [0, 0, 1, 1], [], []>} : vector<128x16xf32>, vector<16x64xf32>, vector<128x64xf32> -> vector<128x64xf32>
    %c0_3 = arith.constant 0 : index
    %c0_4 = arith.constant 0 : index
    %3 = vector.load %arg3[%c0_3, %c0_4] : memref<128x64xf32, #tpu.memory_space<vmem>>, vector<128x64xf32>
    tpu.vector_store %arg3[%c0_3, %c0_4], %2 {strides = array<i32>} : memref<128x64xf32, #tpu.memory_space<vmem>>, vector<128x64xf32>,
    %cst_5 = arith.constant dense<0.000000e+00> : vector<64xf32>
    %4 = vector.multi_reduction <add>, %2, %cst_5 [0] : vector<128x64xf32> to vector<64xf32>
    %5 = vector.shape_cast %4 : vector<64xf32> to vector<1x64xf32>
    %6 = arith.mulf %2, %2 : vector<128x64xf32>
    %cst_6 = arith.constant dense<0.000000e+00> : vector<64xf32>
    %7 = vector.multi_reduction <add>, %6, %cst_6 [0] : vector<128x64xf32> to vector<64xf32>
    %8 = vector.shape_cast %7 : vector<64xf32> to vector<1x64xf32>
    %9 = tpu.concatenate %5, %8 in 0 : vector<1x64xf32>, vector<1x64xf32> -> vector<2x64xf32>
    %c0_7 = arith.constant 0 : index
    %c0_8 = arith.constant 0 : index
    %c0_9 = arith.constant 0 : index
    %10 = vector.load %arg4[%c0_7, %c0_8, %c0_9] : memref<1x2x64xf32, #tpu.memory_space<vmem>>, vector<1x2x64xf32>
    %11 = vector.shape_cast %10 : vector<1x2x64xf32> to vector<2x64xf32>
    %12 = vector.shape_cast %9 : vector<2x64xf32> to vector<1x2x64xf32>
    tpu.vector_store %arg4[%c0_7, %c0_8, %c0_9], %12 {strides = array<i32>} : memref<1x2x64xf32, #tpu.memory_space<vmem>>, vector<1x2x64xf32>,
    return
  }
  func.func @transform_0(%arg0: i32) -> (i32, i32) {
    %c0_i32 = arith.constant 0 : i32
    %c0_i32_0 = arith.constant 0 : i32
    return %arg0, %c0_i32 : i32, i32
  }
  func.func @transform_1(%arg0: i32) -> (i32, i32) {
    %c0_i32 = arith.constant 0 : i32
    %c0_i32_0 = arith.constant 0 : i32
    %c0_i32_1 = arith.constant 0 : i32
    return %c0_i32, %c0_i32_0 : i32, i32
  }
  func.func @transform_2(%arg0: i32) -> (i32, i32) {
    %c0_i32 = arith.constant 0 : i32
    %c0_i32_0 = arith.constant 0 : i32
    return %arg0, %c0_i32 : i32, i32
  }
  func.func @transform_3(%arg0: i32) -> (i32, i32, i32) {
    %c0_i32 = arith.constant 0 : i32
    %c0_i32_0 = arith.constant 0 : i32
    %c0_i32_1 = arith.constant 0 : i32
    return %arg0, %c0_i32, %c0_i32_0 : i32, i32, i32
  }
}

module attributes {stable_mosaic.version = 11 : i64} {
  func.func @_bn_add_relu_kernel(%arg0: i32, %arg1: memref<128x64xf32, #tpu.memory_space<vmem>>, %arg2: memref<128x64xf32, #tpu.memory_space<vmem>>, %arg3: memref<1x64xf32, #tpu.memory_space<vmem>>, %arg4: memref<1x64xf32, #tpu.memory_space<vmem>>, %arg5: memref<1x64xf32, #tpu.memory_space<vmem>>, %arg6: memref<1x64xf32, #tpu.memory_space<vmem>>, %arg7: memref<128x64xf32, #tpu.memory_space<vmem>>) attributes {dimension_semantics = [#tpu.dimension_semantics<parallel>], iteration_bounds = array<i64: 1>, scalar_prefetch = 0 : i64, scratch_operands = 0 : i64, tpu.core_type = #tpu.core_type<tc>, window_params = [{transform_indices = @transform_0, window_bounds = array<i64: 128, 64>}, {transform_indices = @transform_1, window_bounds = array<i64: 128, 64>}, {pipeline_mode = #tpu.pipeline_mode<synchronous>, transform_indices = @transform_2, window_bounds = array<i64: 1, 64>}, {pipeline_mode = #tpu.pipeline_mode<synchronous>, transform_indices = @transform_3, window_bounds = array<i64: 1, 64>}, {pipeline_mode = #tpu.pipeline_mode<synchronous>, transform_indices = @transform_4, window_bounds = array<i64: 1, 64>}, {pipeline_mode = #tpu.pipeline_mode<synchronous>, transform_indices = @transform_5, window_bounds = array<i64: 1, 64>}, {transform_indices = @transform_6, window_bounds = array<i64: 128, 64>}]} {
    %c0 = arith.constant 0 : index
    %c0_0 = arith.constant 0 : index
    %0 = vector.load %arg1[%c0, %c0_0] : memref<128x64xf32, #tpu.memory_space<vmem>>, vector<128x64xf32>
    %c0_1 = arith.constant 0 : index
    %c0_2 = arith.constant 0 : index
    %1 = vector.load %arg3[%c0_1, %c0_2] : memref<1x64xf32, #tpu.memory_space<vmem>>, vector<1x64xf32>
    %2 = vector.broadcast %1 : vector<1x64xf32> to vector<128x64xf32>
    %3 = arith.mulf %0, %2 : vector<128x64xf32>
    %c0_3 = arith.constant 0 : index
    %c0_4 = arith.constant 0 : index
    %4 = vector.load %arg4[%c0_3, %c0_4] : memref<1x64xf32, #tpu.memory_space<vmem>>, vector<1x64xf32>
    %5 = vector.broadcast %4 : vector<1x64xf32> to vector<128x64xf32>
    %6 = arith.addf %3, %5 : vector<128x64xf32>
    %c0_5 = arith.constant 0 : index
    %c0_6 = arith.constant 0 : index
    %7 = vector.load %arg2[%c0_5, %c0_6] : memref<128x64xf32, #tpu.memory_space<vmem>>, vector<128x64xf32>
    %c0_7 = arith.constant 0 : index
    %c0_8 = arith.constant 0 : index
    %8 = vector.load %arg5[%c0_7, %c0_8] : memref<1x64xf32, #tpu.memory_space<vmem>>, vector<1x64xf32>
    %9 = vector.broadcast %8 : vector<1x64xf32> to vector<128x64xf32>
    %10 = arith.mulf %7, %9 : vector<128x64xf32>
    %c0_9 = arith.constant 0 : index
    %c0_10 = arith.constant 0 : index
    %11 = vector.load %arg6[%c0_9, %c0_10] : memref<1x64xf32, #tpu.memory_space<vmem>>, vector<1x64xf32>
    %12 = vector.broadcast %11 : vector<1x64xf32> to vector<128x64xf32>
    %13 = arith.addf %10, %12 : vector<128x64xf32>
    %14 = arith.addf %6, %13 : vector<128x64xf32>
    %cst = arith.constant 0.000000e+00 : f32
    %15 = vector.broadcast %cst : f32 to vector<128x64xf32>
    %16 = arith.maximumf %14, %15 : vector<128x64xf32>
    %c0_11 = arith.constant 0 : index
    %c0_12 = arith.constant 0 : index
    %17 = vector.load %arg7[%c0_11, %c0_12] : memref<128x64xf32, #tpu.memory_space<vmem>>, vector<128x64xf32>
    tpu.vector_store %arg7[%c0_11, %c0_12], %16 {strides = array<i32>} : memref<128x64xf32, #tpu.memory_space<vmem>>, vector<128x64xf32>,
    return
  }
  func.func @transform_0(%arg0: i32) -> (i32, i32) {
    %c0_i32 = arith.constant 0 : i32
    %c0_i32_0 = arith.constant 0 : i32
    return %arg0, %c0_i32 : i32, i32
  }
  func.func @transform_1(%arg0: i32) -> (i32, i32) {
    %c0_i32 = arith.constant 0 : i32
    %c0_i32_0 = arith.constant 0 : i32
    return %arg0, %c0_i32 : i32, i32
  }
  func.func @transform_2(%arg0: i32) -> (i32, i32) {
    %c0_i32 = arith.constant 0 : i32
    %c0_i32_0 = arith.constant 0 : i32
    %c0_i32_1 = arith.constant 0 : i32
    return %c0_i32, %c0_i32_0 : i32, i32
  }
  func.func @transform_3(%arg0: i32) -> (i32, i32) {
    %c0_i32 = arith.constant 0 : i32
    %c0_i32_0 = arith.constant 0 : i32
    %c0_i32_1 = arith.constant 0 : i32
    return %c0_i32, %c0_i32_0 : i32, i32
  }
  func.func @transform_4(%arg0: i32) -> (i32, i32) {
    %c0_i32 = arith.constant 0 : i32
    %c0_i32_0 = arith.constant 0 : i32
    %c0_i32_1 = arith.constant 0 : i32
    return %c0_i32, %c0_i32_0 : i32, i32
  }
  func.func @transform_5(%arg0: i32) -> (i32, i32) {
    %c0_i32 = arith.constant 0 : i32
    %c0_i32_0 = arith.constant 0 : i32
    %c0_i32_1 = arith.constant 0 : i32
    return %c0_i32, %c0_i32_0 : i32, i32
  }
  func.func @transform_6(%arg0: i32) -> (i32, i32) {
    %c0_i32 = arith.constant 0 : i32
    %c0_i32_0 = arith.constant 0 : i32
    return %arg0, %c0_i32 : i32, i32
  }
}

</mosaic_0001>

<llo_original>
// kernel: bottleneck_forward.7
$region0: #{bottleneck_forward.7}
  #allocation0 [shape = 'u32[]', space=smem, size = 0x4, offset = 0x4, fixed_abs, tag = 'smem constant byte address 0x4 - core index']
  #allocation1 [shape = 'u32[144,128]{1,0:T(1,128)}', space=vmem, size = 0x12000, scoped, tag = 'internal scratch']
  %s0 = inlined_call_operand.vmem [shape: f32[512,16], index: 0, kind: input, shape index: {}]
  %s1 = inlined_call_operand.vmem [shape: f32[1,16], index: 1, kind: input, shape index: {}]
  %s2 = inlined_call_operand.vmem [shape: f32[1,16], index: 2, kind: input, shape index: {}]
  %s3 = inlined_call_operand.vmem [shape: f32[512,16], index: 3, kind: output, shape index: {}]
  %s4 = sld [smem:[#allocation0]]
  $region45: #{bottleneck_forward.7} parent=0
    _
  %s6 = ssub.s32 1, %s4
  %s7 = scalar_select 0, %s6, %s4
  loop: start=0, step=1, limit=4
  $region2: #{bottleneck_forward.7} parent=0 // loop_pre_header
    _
  $region3: #{bottleneck_forward.7} parent=0 // loop_header
    %s9 = sphi 0, %s13
    %p10 = scmp.ge.s32.totalorder %s9, 4
    %s19 = sphi 0, %s21
    %s22 = sphi 0, %s19
    %s23 = sphi 0, %s22
    %s39 = sphi 0, %s23
    %s43 = sphi 0, %s43
    %s45 = sphi 0, %s43
    %s46 = sphi 0, %s45
    %s60 = sphi 0, %s46
    %s64 = sphi 0, %s64
    %s66 = sphi 0, %s64
    %s67 = sphi 0, %s66
    %s81 = sphi 0, %s67
    %s87 = sphi 0, %s89
    %s90 = sphi 0, %s87
    %s91 = sphi 0, %s90
    %s107 = sphi 0, %s91
  $region4: #{bottleneck_forward.7} parent=0 // loop_header_branch
    %12 = sbr.rel (%p10) target = $region8
  $region5: #{bottleneck_forward.7} parent=0 // loop_body
    %s14 = ssub.s32 %s9, 1
    %s15 = ssub.s32 %s9, 2
    %s16 = sadd.s32 %s9, 1
    %s17 = ssub.s32 %s9, %s16
    %p18 = scmp.eq.s32.totalorder %s17, 0
    %s20 = sadd.s32 %s19, 1
    %s21 = scalar_select %p18, %s19, %s20
    %p24 = pneg %p18
    %p25 = scmp.eq.s32.totalorder %s9, 1
    %p26 = por %p24, %p25
    %p27 = scmp.ne.s32.totalorder %s19, %s22
    %p28 = scmp.eq.s32.totalorder %s9, 0
    %p29 = por %p27, %p28
    %p30 = scmp.ne.s32.totalorder %s19, %s22
    %p31 = scmp.eq.s32.totalorder %s14, 1
    %p32 = por %p30, %p31
    %p33 = scmp.ne.s32.totalorder %s22, %s23
    %p34 = scmp.eq.s32.totalorder %s14, 0
    %p35 = por %p33, %p34
    %p36 = scmp.ne.s32.totalorder %s22, %s23
    %p37 = scmp.eq.s32.totalorder %s15, 1
    %p38 = por %p36, %p37
    %p40 = scmp.ne.s32.totalorder %s23, %s39
    %p41 = scmp.eq.s32.totalorder %s15, 0
    %p42 = por %p40, %p41
    %s44 = sadd.s32 %s43, 1
    %p47 = scmp.eq.s32.totalorder %s9, 1
    %p48 = scmp.ne.s32.totalorder %s43, %s45
    %p49 = scmp.eq.s32.totalorder %s9, 0
    %p50 = por %p48, %p49
    %p51 = scmp.ne.s32.totalorder %s43, %s45
    %p52 = scmp.eq.s32.totalorder %s14, 1
    %p53 = por %p51, %p52
    %p54 = scmp.ne.s32.totalorder %s45, %s46
    %p55 = scmp.eq.s32.totalorder %s14, 0
    %p56 = por %p54, %p55
    %p57 = scmp.ne.s32.totalorder %s45, %s46
    %p58 = scmp.eq.s32.totalorder %s15, 1
    %p59 = por %p57, %p58
    %p61 = scmp.ne.s32.totalorder %s46, %s60
    %p62 = scmp.eq.s32.totalorder %s15, 0
    %p63 = por %p61, %p62
    %s65 = sadd.s32 %s64, 1
    %p68 = scmp.eq.s32.totalorder %s9, 1
    %p69 = scmp.ne.s32.totalorder %s64, %s66
    %p70 = scmp.eq.s32.totalorder %s9, 0
    %p71 = por %p69, %p70
    %p72 = scmp.ne.s32.totalorder %s64, %s66
    %p73 = scmp.eq.s32.totalorder %s14, 1
    %p74 = por %p72, %p73
    %p75 = scmp.ne.s32.totalorder %s66, %s67
    %p76 = scmp.eq.s32.totalorder %s14, 0
    %p77 = por %p75, %p76
    %p78 = scmp.ne.s32.totalorder %s66, %s67
    %p79 = scmp.eq.s32.totalorder %s15, 1
    %p80 = por %p78, %p79
    %p82 = scmp.ne.s32.totalorder %s67, %s81
    %p83 = scmp.eq.s32.totalorder %s15, 0
    %p84 = por %p82, %p83
    %s85 = ssub.s32 %s9, %s16
    %p86 = scmp.eq.s32.totalorder %s85, 0
    %s88 = sadd.s32 %s87, 1
    %s89 = scalar_select %p86, %s87, %s88
    %p92 = pneg %p86
    %p93 = scmp.eq.s32.totalorder %s9, 1
    %p94 = por %p92, %p93
    %p95 = scmp.ne.s32.totalorder %s87, %s90
    %p96 = scmp.eq.s32.totalorder %s9, 0
    %p97 = por %p95, %p96
    %p98 = scmp.ne.s32.totalorder %s87, %s90
    %p99 = scmp.eq.s32.totalorder %s14, 1
    %p100 = por %p98, %p99
    %p101 = scmp.ne.s32.totalorder %s90, %s91
    %p102 = scmp.eq.s32.totalorder %s14, 0
    %p103 = por %p101, %p102
    %p104 = scmp.ne.s32.totalorder %s90, %s91
    %p105 = scmp.eq.s32.totalorder %s15, 1
    %p106 = por %p104, %p105
    %p108 = scmp.ne.s32.totalorder %s91, %s107
    %p109 = scmp.eq.s32.totalorder %s15, 0
    %p110 = por %p108, %p109
    %p111 = scmp.le.s32.totalorder 1, %s9
    %p112 = scmp.lt.s32.totalorder %s9, 3
    %p113 = pnand %p111, %p112
    %p114 = pneg %p113
    // Predicated region
    $region9: #{bottleneck_forward.7} parent=5 // pred_check
      _
    $region10: #{bottleneck_forward.7} parent=5 // pred_check_branch
      %116 = sbr.rel (%p113) target = $region12
    $region11: #{bottleneck_forward.7} parent=5 // pred_region
      %s117 = ssub.s32 %s9, 1
      // Predicated region
      $region13: #{bottleneck_forward.7} parent=11 // pred_check
        %p118 = pneg %p56
      $region14: #{bottleneck_forward.7} parent=11 // pred_check_branch
        %120 = sbr.rel (%p118) target = $region16
      $region15: #{bottleneck_forward.7} parent=11 // pred_region
        _
      $region16: #{bottleneck_forward.7} parent=11 // pred_fallthru
        _
      // Predicated region
      $region17: #{bottleneck_forward.7} parent=11 // pred_check
        %p121 = pneg %p77
      $region18: #{bottleneck_forward.7} parent=11 // pred_check_branch
        %123 = sbr.rel (%p121) target = $region20
      $region19: #{bottleneck_forward.7} parent=11 // pred_region
        _
      $region20: #{bottleneck_forward.7} parent=11 // pred_fallthru
        _
    $region12: #{bottleneck_forward.7} parent=5 // pred_fallthru
      _
    %p124 = scmp.lt.s32.totalorder %s9, 2
    // Predicated region
    $region21: #{bottleneck_forward.7} parent=5 // pred_check
      %p125 = pneg %p124
    $region22: #{bottleneck_forward.7} parent=5 // pred_check_branch
      %127 = sbr.rel (%p125) target = $region24
    $region23: #{bottleneck_forward.7} parent=5 // pred_region
      // Predicated region
      $region25: #{bottleneck_forward.7} parent=23 // pred_check
        %p128 = pneg %p29
      $region26: #{bottleneck_forward.7} parent=23 // pred_check_branch
        %130 = sbr.rel (%p128) target = $region28
      $region27: #{bottleneck_forward.7} parent=23 // pred_region
        %s131 = smul.u32 32, %s9
        %p132 = scmp.lt.s32.totalorder %s131, 63
        %s133 = scalar_select %p132, %s131, 63
        %s134 = smul.addr %s133, 8
        %s135 = scalar_lea.vmem %s0, %s134
        %s136 = smul.u32 32, %s9
      $region28: #{bottleneck_forward.7} parent=23 // pred_fallthru
        _
    $region24: #{bottleneck_forward.7} parent=5 // pred_fallthru
      _
    %p137 = scmp.le.s32.totalorder 1, %s9
    %p138 = scmp.lt.s32.totalorder %s9, 3
    %p139 = pnand %p137, %p138
    %p140 = pneg %p139
    // Predicated region
    $region29: #{bottleneck_forward.7} parent=5 // pred_check
      _
    $region30: #{bottleneck_forward.7} parent=5 // pred_check_branch
      %142 = sbr.rel (%p139) target = $region32
    $region31: #{bottleneck_forward.7} parent=5 // pred_region
      %s143 = ssub.s32 %s9, 1
      %s144 = smul.u32 32, %s14
      %p145 = scmp.lt.s32.totalorder %s144, 63
      %s146 = scalar_select %p145, %s144, 63
      %s147 = smul.addr %s146, 8
      %s148 = scalar_lea.vmem %s0, %s147
      %p149 = pneg %p35
      %p150 = pneg %p32
      %p151 = pneg %p56
      %p152 = pneg %p53
      %p153 = pneg %p77
      %p154 = pneg %p74
      %p155 = pneg %p103
      %p156 = pneg %p100
      %s157 = smul.u32 32, %s14
      %p158 = scmp.lt.s32.totalorder %s157, 63
      %s159 = scalar_select %p158, %s157, 63
      %s160 = smul.addr %s159, 8
      %s161 = scalar_lea.vmem %s3, %s160
      %s162 = smul.u32 32, %s14
      %p163 = scmp.lt.s32.totalorder %s162, 63
      %s164 = scalar_select %p163, %s162, 63
      %s165 = smul.addr %s164, 8
      %s166 = scalar_lea.vmem %s0, %s165
      %s167 = smul.u32 32, %s14
      %s168 = smul.u32 32, %s14
      %p169 = scmp.lt.s32.totalorder %s168, 63
      %s170 = scalar_select %p169, %s168, 63
      %s171 = smul.addr %s170, 8
      %s172 = scalar_lea.vmem %s3, %s171
      %s173 = smul.u32 32, %s14
      %v174 = vld [vmem:[%s166] sm:$0xff]
      %v175 = vld [vmem:[%s166 + $0x8] sm:$0xff]
      %v176 = vld [vmem:[%s166 + $0x10] sm:$0xff]
      %v177 = vld [vmem:[%s166 + $0x18] sm:$0xff]
      %v178 = vld [vmem:[%s166 + $0x20] sm:$0xff]
      %v179 = vld [vmem:[%s166 + $0x28] sm:$0xff]
      %v180 = vld [vmem:[%s166 + $0x30] sm:$0xff]
      %v181 = vld [vmem:[%s166 + $0x38] sm:$0xff]
      %v182 = vld [vmem:[%s166 + $0x40] sm:$0xff]
      %v183 = vld [vmem:[%s166 + $0x48] sm:$0xff]
      %v184 = vld [vmem:[%s166 + $0x50] sm:$0xff]
      %v185 = vld [vmem:[%s166 + $0x58] sm:$0xff]
      %v186 = vld [vmem:[%s166 + $0x60] sm:$0xff]
      %v187 = vld [vmem:[%s166 + $0x68] sm:$0xff]
      %v188 = vld [vmem:[%s166 + $0x70] sm:$0xff]
      %v189 = vld [vmem:[%s166 + $0x78] sm:$0xff]
      %v190 = vld [vmem:[%s166 + $0x80] sm:$0xff]
      %v191 = vld [vmem:[%s166 + $0x88] sm:$0xff]
      %v192 = vld [vmem:[%s166 + $0x90] sm:$0xff]
      %v193 = vld [vmem:[%s166 + $0x98] sm:$0xff]
      %v194 = vld [vmem:[%s166 + $0xa0] sm:$0xff]
      %v195 = vld [vmem:[%s166 + $0xa8] sm:$0xff]
      %v196 = vld [vmem:[%s166 + $0xb0] sm:$0xff]
      %v197 = vld [vmem:[%s166 + $0xb8] sm:$0xff]
      %v198 = vld [vmem:[%s166 + $0xc0] sm:$0xff]
      %v199 = vld [vmem:[%s166 + $0xc8] sm:$0xff]
      %v200 = vld [vmem:[%s166 + $0xd0] sm:$0xff]
      %v201 = vld [vmem:[%s166 + $0xd8] sm:$0xff]
      %v202 = vld [vmem:[%s166 + $0xe0] sm:$0xff]
      %v203 = vld [vmem:[%s166 + $0xe8] sm:$0xff]
      %v204 = vld [vmem:[%s166 + $0xf0] sm:$0xff]
      %v205 = vld [vmem:[%s166 + $0xf8] sm:$0xff]
      %v206 = vld [vmem:[%s1] sm:$0x1]
      %v208 = vlaneseq
      %v209 = vshrl.u32 %v208, 7
      %v210 = vsub.s32 0, %v209
      %v211 = vrot.slane %v206, %v210
      %v213 = vmul.f32 %v174, %v211
      %v214 = vmul.f32 %v175, %v211
      %v215 = vmul.f32 %v176, %v211
      %v216 = vmul.f32 %v177, %v211
      %v217 = vmul.f32 %v178, %v211
      %v218 = vmul.f32 %v179, %v211
      %v219 = vmul.f32 %v180, %v211
      %v220 = vmul.f32 %v181, %v211
      %v221 = vmul.f32 %v182, %v211
      %v222 = vmul.f32 %v183, %v211
      %v223 = vmul.f32 %v184, %v211
      %v224 = vmul.f32 %v185, %v211
      %v225 = vmul.f32 %v186, %v211
      %v226 = vmul.f32 %v187, %v211
      %v227 = vmul.f32 %v188, %v211
      %v228 = vmul.f32 %v189, %v211
      %v229 = vmul.f32 %v190, %v211
      %v230 = vmul.f32 %v191, %v211
      %v231 = vmul.f32 %v192, %v211
      %v232 = vmul.f32 %v193, %v211
      %v233 = vmul.f32 %v194, %v211
      %v234 = vmul.f32 %v195, %v211
      %v235 = vmul.f32 %v196, %v211
      %v236 = vmul.f32 %v197, %v211
      %v237 = vmul.f32 %v198, %v211
      %v238 = vmul.f32 %v199, %v211
      %v239 = vmul.f32 %v200, %v211
      %v240 = vmul.f32 %v201, %v211
      %v241 = vmul.f32 %v202, %v211
      %v242 = vmul.f32 %v203, %v211
      %v243 = vmul.f32 %v204, %v211
      %v244 = vmul.f32 %v205, %v211
      %v245 = vld [vmem:[%s2] sm:$0x1]
      %v247 = vlaneseq
      %v248 = vshrl.u32 %v247, 7
      %v249 = vsub.s32 0, %v248
      %v250 = vrot.slane %v245, %v249
      %v252 = vadd.f32 %v213, %v250
      %v253 = vadd.f32 %v214, %v250
      %v254 = vadd.f32 %v215, %v250
      %v255 = vadd.f32 %v216, %v250
      %v256 = vadd.f32 %v217, %v250
      %v257 = vadd.f32 %v218, %v250
      %v258 = vadd.f32 %v219, %v250
      %v259 = vadd.f32 %v220, %v250
      %v260 = vadd.f32 %v221, %v250
      %v261 = vadd.f32 %v222, %v250
      %v262 = vadd.f32 %v223, %v250
      %v263 = vadd.f32 %v224, %v250
      %v264 = vadd.f32 %v225, %v250
      %v265 = vadd.f32 %v226, %v250
      %v266 = vadd.f32 %v227, %v250
      %v267 = vadd.f32 %v228, %v250
      %v268 = vadd.f32 %v229, %v250
      %v269 = vadd.f32 %v230, %v250
      %v270 = vadd.f32 %v231, %v250
      %v271 = vadd.f32 %v232, %v250
      %v272 = vadd.f32 %v233, %v250
      %v273 = vadd.f32 %v234, %v250
      %v274 = vadd.f32 %v235, %v250
      %v275 = vadd.f32 %v236, %v250
      %v276 = vadd.f32 %v237, %v250
      %v277 = vadd.f32 %v238, %v250
      %v278 = vadd.f32 %v239, %v250
      %v279 = vadd.f32 %v240, %v250
      %v280 = vadd.f32 %v241, %v250
      %v281 = vadd.f32 %v242, %v250
      %v282 = vadd.f32 %v243, %v250
      %v283 = vadd.f32 %v244, %v250
      %v284 = vmax.f32 %v252, 0.0
      %v285 = vmax.f32 %v253, 0.0
      %v286 = vmax.f32 %v254, 0.0
      %v287 = vmax.f32 %v255, 0.0
      %v288 = vmax.f32 %v256, 0.0
      %v289 = vmax.f32 %v257, 0.0
      %v290 = vmax.f32 %v258, 0.0
      %v291 = vmax.f32 %v259, 0.0
      %v292 = vmax.f32 %v260, 0.0
      %v293 = vmax.f32 %v261, 0.0
      %v294 = vmax.f32 %v262, 0.0
      %v295 = vmax.f32 %v263, 0.0
      %v296 = vmax.f32 %v264, 0.0
      %v297 = vmax.f32 %v265, 0.0
      %v298 = vmax.f32 %v266, 0.0
      %v299 = vmax.f32 %v267, 0.0
      %v300 = vmax.f32 %v268, 0.0
      %v301 = vmax.f32 %v269, 0.0
      %v302 = vmax.f32 %v270, 0.0
      %v303 = vmax.f32 %v271, 0.0
      %v304 = vmax.f32 %v272, 0.0
      %v305 = vmax.f32 %v273, 0.0
      %v306 = vmax.f32 %v274, 0.0
      %v307 = vmax.f32 %v275, 0.0
      %v308 = vmax.f32 %v276, 0.0
      %v309 = vmax.f32 %v277, 0.0
      %v310 = vmax.f32 %v278, 0.0
      %v311 = vmax.f32 %v279, 0.0
      %v312 = vmax.f32 %v280, 0.0
      %v313 = vmax.f32 %v281, 0.0
      %v314 = vmax.f32 %v282, 0.0
      %v315 = vmax.f32 %v283, 0.0
      %vm316 = vcmask 130048
      %317 = vst.msk [vmem:[%s172] sm:$0xff] %vm316, %v284
      %318 = vst.msk [vmem:[%s172 + $0x8] sm:$0xff] %vm316, %v285
      %319 = vst.msk [vmem:[%s172 + $0x10] sm:$0xff] %vm316, %v286
      %320 = vst.msk [vmem:[%s172 + $0x18] sm:$0xff] %vm316, %v287
      %321 = vst.msk [vmem:[%s172 + $0x20] sm:$0xff] %vm316, %v288
      %322 = vst.msk [vmem:[%s172 + $0x28] sm:$0xff] %vm316, %v289
      %323 = vst.msk [vmem:[%s172 + $0x30] sm:$0xff] %vm316, %v290
      %324 = vst.msk [vmem:[%s172 + $0x38] sm:$0xff] %vm316, %v291
      %325 = vst.msk [vmem:[%s172 + $0x40] sm:$0xff] %vm316, %v292
      %326 = vst.msk [vmem:[%s172 + $0x48] sm:$0xff] %vm316, %v293
      %327 = vst.msk [vmem:[%s172 + $0x50] sm:$0xff] %vm316, %v294
      %328 = vst.msk [vmem:[%s172 + $0x58] sm:$0xff] %vm316, %v295
      %329 = vst.msk [vmem:[%s172 + $0x60] sm:$0xff] %vm316, %v296
      %330 = vst.msk [vmem:[%s172 + $0x68] sm:$0xff] %vm316, %v297
      %331 = vst.msk [vmem:[%s172 + $0x70] sm:$0xff] %vm316, %v298
      %332 = vst.msk [vmem:[%s172 + $0x78] sm:$0xff] %vm316, %v299
      %333 = vst.msk [vmem:[%s172 + $0x80] sm:$0xff] %vm316, %v300
      %334 = vst.msk [vmem:[%s172 + $0x88] sm:$0xff] %vm316, %v301
      %335 = vst.msk [vmem:[%s172 + $0x90] sm:$0xff] %vm316, %v302
      %336 = vst.msk [vmem:[%s172 + $0x98] sm:$0xff] %vm316, %v303
      %337 = vst.msk [vmem:[%s172 + $0xa0] sm:$0xff] %vm316, %v304
      %338 = vst.msk [vmem:[%s172 + $0xa8] sm:$0xff] %vm316, %v305
      %339 = vst.msk [vmem:[%s172 + $0xb0] sm:$0xff] %vm316, %v306
      %340 = vst.msk [vmem:[%s172 + $0xb8] sm:$0xff] %vm316, %v307
      %341 = vst.msk [vmem:[%s172 + $0xc0] sm:$0xff] %vm316, %v308
      %342 = vst.msk [vmem:[%s172 + $0xc8] sm:$0xff] %vm316, %v309
      %343 = vst.msk [vmem:[%s172 + $0xd0] sm:$0xff] %vm316, %v310
      %344 = vst.msk [vmem:[%s172 + $0xd8] sm:$0xff] %vm316, %v311
      %345 = vst.msk [vmem:[%s172 + $0xe0] sm:$0xff] %vm316, %v312
      %346 = vst.msk [vmem:[%s172 + $0xe8] sm:$0xff] %vm316, %v313
      %347 = vst.msk [vmem:[%s172 + $0xf0] sm:$0xff] %vm316, %v314
      %348 = vst.msk [vmem:[%s172 + $0xf8] sm:$0xff] %vm316, %v315
      %s349 = smul.u32 32, %s14
      %p350 = scmp.lt.s32.totalorder %s349, 63
      %s351 = scalar_select %p350, %s349, 63
      %s352 = smul.addr %s351, 8
      %s353 = scalar_lea.vmem %s3, %s352
      // Predicated region
      $region33: #{bottleneck_forward.7} parent=31 // pred_check
        %p354 = pneg %p100
      $region34: #{bottleneck_forward.7} parent=31 // pred_check_branch
        %356 = sbr.rel (%p354) target = $region36
      $region35: #{bottleneck_forward.7} parent=31 // pred_region
        %s357 = smul.u32 32, %s14
      $region36: #{bottleneck_forward.7} parent=31 // pred_fallthru
        _
    $region32: #{bottleneck_forward.7} parent=5 // pred_fallthru
      _
    %p358 = scmp.le.s32.totalorder 2, %s9
    // Predicated region
    $region37: #{bottleneck_forward.7} parent=5 // pred_check
      %p359 = pneg %p358
    $region38: #{bottleneck_forward.7} parent=5 // pred_check_branch
      %361 = sbr.rel (%p359) target = $region40
    $region39: #{bottleneck_forward.7} parent=5 // pred_region
      %s362 = ssub.s32 %s9, 2
      // Predicated region
      $region41: #{bottleneck_forward.7} parent=39 // pred_check
        %p363 = pneg %p106
      $region42: #{bottleneck_forward.7} parent=39 // pred_check_branch
        %365 = sbr.rel (%p363) target = $region44
      $region43: #{bottleneck_forward.7} parent=39 // pred_region
        %s366 = smul.u32 32, %s15
        %p367 = scmp.lt.s32.totalorder %s366, 63
        %s368 = scalar_select %p367, %s366, 63
        %s369 = smul.addr %s368, 8
        %s370 = scalar_lea.vmem %s3, %s369
      $region44: #{bottleneck_forward.7} parent=39 // pred_fallthru
        _
    $region40: #{bottleneck_forward.7} parent=5 // pred_fallthru
      _
  $region6: #{bottleneck_forward.7} parent=0 // loop_footer
    %s13 = sadd.s32 1, %s9
  $region7: #{bottleneck_forward.7} parent=0 // loop_footer_branch
    %8 = sbr.rel target = $region3
  $region8: #{bottleneck_forward.7} parent=0 // loop_exit
    _

// kernel: bottleneck_forward.6
$region0: #{bottleneck_forward.6}
  #allocation0 [shape = 'u32[]', space=smem, size = 0x4, offset = 0x4, fixed_abs, tag = 'smem constant byte address 0x4 - core index']
  #allocation1 [shape = 'u32[144,128]{1,0:T(1,128)}', space=vmem, size = 0x12000, scoped, tag = 'internal scratch']
  %s0 = inlined_call_operand.vmem [shape: f32[512,16], index: 0, kind: input, shape index: {}]
  %s1 = inlined_call_operand.vmem [shape: f32[16,16], index: 1, kind: input, shape index: {}]
  %s2 = inlined_call_operand.vmem [shape: f32[512,16], index: 2, kind: output, shape index: {0}]
  %s3 = inlined_call_operand.vmem [shape: f32[2,2,16], index: 3, kind: output, shape index: {1}]
  %4 = xla_tuple %s2, %s3
  %s5 = sld [smem:[#allocation0]]
  $region49: #{bottleneck_forward.6} parent=0
    _
  %s7 = ssub.s32 1, %s5
  %s8 = scalar_select 0, %s7, %s5
  loop: start=0, step=1, limit=4
  $region2: #{bottleneck_forward.6} parent=0 // loop_pre_header
    _
  $region3: #{bottleneck_forward.6} parent=0 // loop_header
    %s10 = sphi 0, %s14
    %p11 = scmp.ge.s32.totalorder %s10, 4
    %s20 = sphi 0, %s22
    %s23 = sphi 0, %s20
    %s24 = sphi 0, %s23
    %s40 = sphi 0, %s24
    %s44 = sphi 0, %s44
    %s46 = sphi 0, %s44
    %s47 = sphi 0, %s46
    %s61 = sphi 0, %s47
    %s67 = sphi 0, %s69
    %s70 = sphi 0, %s67
    %s71 = sphi 0, %s70
    %s87 = sphi 0, %s71
    %s93 = sphi 0, %s95
    %s96 = sphi 0, %s93
    %s97 = sphi 0, %s96
    %s113 = sphi 0, %s97
  $region4: #{bottleneck_forward.6} parent=0 // loop_header_branch
    %13 = sbr.rel (%p11) target = $region8
  $region5: #{bottleneck_forward.6} parent=0 // loop_body
    %s15 = ssub.s32 %s10, 1
    %s16 = ssub.s32 %s10, 2
    %s17 = sadd.s32 %s10, 1
    %s18 = ssub.s32 %s10, %s17
    %p19 = scmp.eq.s32.totalorder %s18, 0
    %s21 = sadd.s32 %s20, 1
    %s22 = scalar_select %p19, %s20, %s21
    %p25 = pneg %p19
    %p26 = scmp.eq.s32.totalorder %s10, 1
    %p27 = por %p25, %p26
    %p28 = scmp.ne.s32.totalorder %s20, %s23
    %p29 = scmp.eq.s32.totalorder %s10, 0
    %p30 = por %p28, %p29
    %p31 = scmp.ne.s32.totalorder %s20, %s23
    %p32 = scmp.eq.s32.totalorder %s15, 1
    %p33 = por %p31, %p32
    %p34 = scmp.ne.s32.totalorder %s23, %s24
    %p35 = scmp.eq.s32.totalorder %s15, 0
    %p36 = por %p34, %p35
    %p37 = scmp.ne.s32.totalorder %s23, %s24
    %p38 = scmp.eq.s32.totalorder %s16, 1
    %p39 = por %p37, %p38
    %p41 = scmp.ne.s32.totalorder %s24, %s40
    %p42 = scmp.eq.s32.totalorder %s16, 0
    %p43 = por %p41, %p42
    %s45 = sadd.s32 %s44, 1
    %p48 = scmp.eq.s32.totalorder %s10, 1
    %p49 = scmp.ne.s32.totalorder %s44, %s46
    %p50 = scmp.eq.s32.totalorder %s10, 0
    %p51 = por %p49, %p50
    %p52 = scmp.ne.s32.totalorder %s44, %s46
    %p53 = scmp.eq.s32.totalorder %s15, 1
    %p54 = por %p52, %p53
    %p55 = scmp.ne.s32.totalorder %s46, %s47
    %p56 = scmp.eq.s32.totalorder %s15, 0
    %p57 = por %p55, %p56
    %p58 = scmp.ne.s32.totalorder %s46, %s47
    %p59 = scmp.eq.s32.totalorder %s16, 1
    %p60 = por %p58, %p59
    %p62 = scmp.ne.s32.totalorder %s47, %s61
    %p63 = scmp.eq.s32.totalorder %s16, 0
    %p64 = por %p62, %p63
    %s65 = ssub.s32 %s10, %s17
    %p66 = scmp.eq.s32.totalorder %s65, 0
    %s68 = sadd.s32 %s67, 1
    %s69 = scalar_select %p66, %s67, %s68
    %p72 = pneg %p66
    %p73 = scmp.eq.s32.totalorder %s10, 1
    %p74 = por %p72, %p73
    %p75 = scmp.ne.s32.totalorder %s67, %s70
    %p76 = scmp.eq.s32.totalorder %s10, 0
    %p77 = por %p75, %p76
    %p78 = scmp.ne.s32.totalorder %s67, %s70
    %p79 = scmp.eq.s32.totalorder %s15, 1
    %p80 = por %p78, %p79
    %p81 = scmp.ne.s32.totalorder %s70, %s71
    %p82 = scmp.eq.s32.totalorder %s15, 0
    %p83 = por %p81, %p82
    %p84 = scmp.ne.s32.totalorder %s70, %s71
    %p85 = scmp.eq.s32.totalorder %s16, 1
    %p86 = por %p84, %p85
    %p88 = scmp.ne.s32.totalorder %s71, %s87
    %p89 = scmp.eq.s32.totalorder %s16, 0
    %p90 = por %p88, %p89
    %s91 = ssub.s32 %s10, %s17
    %p92 = scmp.eq.s32.totalorder %s91, 0
    %s94 = sadd.s32 %s93, 1
    %s95 = scalar_select %p92, %s93, %s94
    %p98 = pneg %p92
    %p99 = scmp.eq.s32.totalorder %s10, 1
    %p100 = por %p98, %p99
    %p101 = scmp.ne.s32.totalorder %s93, %s96
    %p102 = scmp.eq.s32.totalorder %s10, 0
    %p103 = por %p101, %p102
    %p104 = scmp.ne.s32.totalorder %s93, %s96
    %p105 = scmp.eq.s32.totalorder %s15, 1
    %p106 = por %p104, %p105
    %p107 = scmp.ne.s32.totalorder %s96, %s97
    %p108 = scmp.eq.s32.totalorder %s15, 0
    %p109 = por %p107, %p108
    %p110 = scmp.ne.s32.totalorder %s96, %s97
    %p111 = scmp.eq.s32.totalorder %s16, 1
    %p112 = por %p110, %p111
    %p114 = scmp.ne.s32.totalorder %s97, %s113
    %p115 = scmp.eq.s32.totalorder %s16, 0
    %p116 = por %p114, %p115
    %p117 = scmp.le.s32.totalorder 1, %s10
    %p118 = scmp.lt.s32.totalorder %s10, 3
    %p119 = pnand %p117, %p118
    %p120 = pneg %p119
    // Predicated region
    $region9: #{bottleneck_forward.6} parent=5 // pred_check
      _
    $region10: #{bottleneck_forward.6} parent=5 // pred_check_branch
      %122 = sbr.rel (%p119) target = $region12
    $region11: #{bottleneck_forward.6} parent=5 // pred_region
      %s123 = ssub.s32 %s10, 1
      // Predicated region
      $region13: #{bottleneck_forward.6} parent=11 // pred_check
        %p124 = pneg %p57
      $region14: #{bottleneck_forward.6} parent=11 // pred_check_branch
        %126 = sbr.rel (%p124) target = $region16
      $region15: #{bottleneck_forward.6} parent=11 // pred_region
        _
      $region16: #{bottleneck_forward.6} parent=11 // pred_fallthru
        _
    $region12: #{bottleneck_forward.6} parent=5 // pred_fallthru
      _
    %p127 = scmp.lt.s32.totalorder %s10, 2
    // Predicated region
    $region17: #{bottleneck_forward.6} parent=5 // pred_check
      %p128 = pneg %p127
    $region18: #{bottleneck_forward.6} parent=5 // pred_check_branch
      %130 = sbr.rel (%p128) target = $region20
    $region19: #{bottleneck_forward.6} parent=5 // pred_region
      // Predicated region
      $region21: #{bottleneck_forward.6} parent=19 // pred_check
        %p131 = pneg %p30
      $region22: #{bottleneck_forward.6} parent=19 // pred_check_branch
        %133 = sbr.rel (%p131) target = $region24
      $region23: #{bottleneck_forward.6} parent=19 // pred_region
        %s134 = smul.u32 32, %s10
        %p135 = scmp.lt.s32.totalorder %s134, 63
        %s136 = scalar_select %p135, %s134, 63
        %s137 = smul.addr %s136, 8
        %s138 = scalar_lea.vmem %s0, %s137
        %s139 = smul.u32 32, %s10
      $region24: #{bottleneck_forward.6} parent=19 // pred_fallthru
        _
    $region20: #{bottleneck_forward.6} parent=5 // pred_fallthru
      _
    %p140 = scmp.le.s32.totalorder 1, %s10
    %p141 = scmp.lt.s32.totalorder %s10, 3
    %p142 = pnand %p140, %p141
    %p143 = pneg %p142
    // Predicated region
    $region25: #{bottleneck_forward.6} parent=5 // pred_check
      _
    $region26: #{bottleneck_forward.6} parent=5 // pred_check_branch
      %145 = sbr.rel (%p142) target = $region28
    $region27: #{bottleneck_forward.6} parent=5 // pred_region
      %s146 = ssub.s32 %s10, 1
      %s147 = smul.u32 32, %s15
      %p148 = scmp.lt.s32.totalorder %s147, 63
      %s149 = scalar_select %p148, %s147, 63
      %s150 = smul.addr %s149, 8
      %s151 = scalar_lea.vmem %s0, %s150
      %p152 = pneg %p36
      %p153 = pneg %p33
      %p154 = pneg %p57
      %p155 = pneg %p54
      %p156 = pneg %p83
      %p157 = pneg %p80
      %s158 = smul.u32 32, %s15
      %p159 = scmp.lt.s32.totalorder %s158, 63
      %s160 = scalar_select %p159, %s158, 63
      %s161 = smul.addr %s160, 8
      %s162 = scalar_lea.vmem %s2, %s161
      %p163 = pneg %p109
      %p164 = pneg %p106
      %p165 = scmp.lt.s32.totalorder %s15, 1
      %s166 = scalar_select %p165, %s15, 1
      %s167 = smul.addr %s166, 2
      %s168 = scalar_lea.vmem %s3, %s167
      %s169 = smul.u32 32, %s15
      %p170 = scmp.lt.s32.totalorder %s169, 63
      %s171 = scalar_select %p170, %s169, 63
      %s172 = smul.addr %s171, 8
      %s173 = scalar_lea.vmem %s0, %s172
      %s174 = smul.u32 32, %s15
      %s175 = smul.u32 32, %s15
      %p176 = scmp.lt.s32.totalorder %s175, 63
      %s177 = scalar_select %p176, %s175, 63
      %s178 = smul.addr %s177, 8
      %s179 = scalar_lea.vmem %s2, %s178
      %s180 = smul.u32 32, %s15
      %p181 = scmp.lt.s32.totalorder %s15, 1
      %s182 = scalar_select %p181, %s15, 1
      %s183 = smul.addr %s182, 2
      %s184 = scalar_lea.vmem %s3, %s183
      %v185 = vld [vmem:[%s173] sm:$0xff]
      %v186 = vld [vmem:[%s173 + $0x8] sm:$0xff]
      %v187 = vld [vmem:[%s173 + $0x10] sm:$0xff]
      %v188 = vld [vmem:[%s173 + $0x18] sm:$0xff]
      %v189 = vld [vmem:[%s173 + $0x20] sm:$0xff]
      %v190 = vld [vmem:[%s173 + $0x28] sm:$0xff]
      %v191 = vld [vmem:[%s173 + $0x30] sm:$0xff]
      %v192 = vld [vmem:[%s173 + $0x38] sm:$0xff]
      %v193 = vld [vmem:[%s173 + $0x40] sm:$0xff]
      %v194 = vld [vmem:[%s173 + $0x48] sm:$0xff]
      %v195 = vld [vmem:[%s173 + $0x50] sm:$0xff]
      %v196 = vld [vmem:[%s173 + $0x58] sm:$0xff]
      %v197 = vld [vmem:[%s173 + $0x60] sm:$0xff]
      %v198 = vld [vmem:[%s173 + $0x68] sm:$0xff]
      %v199 = vld [vmem:[%s173 + $0x70] sm:$0xff]
      %v200 = vld [vmem:[%s173 + $0x78] sm:$0xff]
      %v201 = vld [vmem:[%s173 + $0x80] sm:$0xff]
      %v202 = vld [vmem:[%s173 + $0x88] sm:$0xff]
      %v203 = vld [vmem:[%s173 + $0x90] sm:$0xff]
      %v204 = vld [vmem:[%s173 + $0x98] sm:$0xff]
      %v205 = vld [vmem:[%s173 + $0xa0] sm:$0xff]
      %v206 = vld [vmem:[%s173 + $0xa8] sm:$0xff]
      %v207 = vld [vmem:[%s173 + $0xb0] sm:$0xff]
      %v208 = vld [vmem:[%s173 + $0xb8] sm:$0xff]
      %v209 = vld [vmem:[%s173 + $0xc0] sm:$0xff]
      %v210 = vld [vmem:[%s173 + $0xc8] sm:$0xff]
      %v211 = vld [vmem:[%s173 + $0xd0] sm:$0xff]
      %v212 = vld [vmem:[%s173 + $0xd8] sm:$0xff]
      %v213 = vld [vmem:[%s173 + $0xe0] sm:$0xff]
      %v214 = vld [vmem:[%s173 + $0xe8] sm:$0xff]
      %v215 = vld [vmem:[%s173 + $0xf0] sm:$0xff]
      %v216 = vld [vmem:[%s173 + $0xf8] sm:$0xff]
      %v217 = vld [vmem:[%s1] sm:$0xff]
      %v218 = vld [vmem:[%s1 + $0x8] sm:$0xff]
      %vm219 = vcmask 130048
      %v221 = vsel %vm219, %v185, 0
      %v224 = vsel %vm219, %v186, 0
      %v227 = vsel %vm219, %v187, 0
      %v230 = vsel %vm219, %v188, 0
      %v233 = vsel %vm219, %v189, 0
      %v236 = vsel %vm219, %v190, 0
      %v239 = vsel %vm219, %v191, 0
      %v242 = vsel %vm219, %v192, 0
      %v245 = vsel %vm219, %v193, 0
      %v248 = vsel %vm219, %v194, 0
      %v251 = vsel %vm219, %v195, 0
      %v254 = vsel %vm219, %v196, 0
      %v257 = vsel %vm219, %v197, 0
      %v260 = vsel %vm219, %v198, 0
      %v263 = vsel %vm219, %v199, 0
      %v266 = vsel %vm219, %v200, 0
      %v269 = vsel %vm219, %v201, 0
      %v272 = vsel %vm219, %v202, 0
      %v275 = vsel %vm219, %v203, 0
      %v278 = vsel %vm219, %v204, 0
      %v281 = vsel %vm219, %v205, 0
      %v284 = vsel %vm219, %v206, 0
      %v287 = vsel %vm219, %v207, 0
      %v290 = vsel %vm219, %v208, 0
      %v293 = vsel %vm219, %v209, 0
      %v296 = vsel %vm219, %v210, 0
      %v299 = vsel %vm219, %v211, 0
      %v302 = vsel %vm219, %v212, 0
      %v305 = vsel %vm219, %v213, 0
      %v308 = vsel %vm219, %v214, 0
      %v311 = vsel %vm219, %v215, 0
      %v314 = vsel %vm219, %v216, 0
      %316 = vmatprep.subr.mxu0 0.0
      %317 = vmatpush1.msra.mxu0 %v217
      %318 = vmatprep.subr.mxu0 0.0
      %319 = vmatpush1.msra.mxu0 %v218
      %320 = vmatprep.subr.mxu0 0.0
      %321 = vmatpush1.msra.mxu0 0.0
      %322 = vmatprep.subr.mxu0 0.0
      %323 = vmatpush1.msra.mxu0 0.0
      %324 = vmatprep.subr.mxu0 0.0
      %325 = vmatpush1.msra.mxu0 0.0
      %326 = vmatprep.subr.mxu0 0.0
      %327 = vmatpush1.msra.mxu0 0.0
      %328 = vmatprep.subr.mxu0 0.0
      %329 = vmatpush1.msra.mxu0 0.0
      %330 = vmatprep.subr.mxu0 0.0
      %331 = vmatpush1.msra.mxu0 0.0
      %332 = vmatprep.subr.mxu0 0.0
      %333 = vmatpush1.msra.mxu0 0.0
      %334 = vmatprep.subr.mxu0 0.0
      %335 = vmatpush1.msra.mxu0 0.0
      %336 = vmatprep.subr.mxu0 0.0
      %337 = vmatpush1.msra.mxu0 0.0
      %338 = vmatprep.subr.mxu0 0.0
      %339 = vmatpush1.msra.mxu0 0.0
      %340 = vmatprep.subr.mxu0 0.0
      %341 = vmatpush1.msra.mxu0 0.0
      %342 = vmatprep.subr.mxu0 0.0
      %343 = vmatpush1.msra.mxu0 0.0
      %344 = vmatprep.subr.mxu0 0.0
      %345 = vmatpush1.msra.mxu0 0.0
      %346 = vmatprep.subr.mxu0 0.0
      %347 = vmatpush1.msra.mxu0 0.0
      %348 = vmatprep.subr.mxu0 0.0
      %349 = vmatpush1.msra.mxu0 0.0
      %350 = vmatprep.subr.mxu0 0.0
      %351 = vmatpush1.msra.mxu0 0.0
      %352 = vmatprep.subr.mxu0 0.0
      %353 = vmatpush1.msra.mxu0 0.0
      %354 = vmatprep.subr.mxu0 0.0
      %355 = vmatpush1.msra.mxu0 0.0
      %356 = vmatprep.subr.mxu0 0.0
      %357 = vmatpush1.msra.mxu0 0.0
      %358 = vmatprep.subr.mxu0 0.0
      %359 = vmatpush1.msra.mxu0 0.0
      %360 = vmatprep.subr.mxu0 0.0
      %361 = vmatpush1.msra.mxu0 0.0
      %362 = vmatprep.subr.mxu0 0.0
      %363 = vmatpush1.msra.mxu0 0.0
      %364 = vmatprep.subr.mxu0 0.0
      %365 = vmatpush1.msra.mxu0 0.0
      %366 = vmatprep.subr.mxu0 0.0
      %367 = vmatpush1.msra.mxu0 0.0
      %368 = vmatprep.subr.mxu0 0.0
      %369 = vmatpush1.msra.mxu0 0.0
      %370 = vmatprep.subr.mxu0 0.0
      %371 = vmatpush1.msra.mxu0 0.0
      %372 = vmatprep.subr.mxu0 0.0
      %373 = vmatpush1.msra.mxu0 0.0
      %374 = vmatprep.subr.mxu0 0.0
      %375 = vmatpush1.msra.mxu0 0.0
      %376 = vmatprep.subr.mxu0 0.0
      %377 = vmatpush1.msra.mxu0 0.0
      %378 = vmatprep.subr.mxu0 0.0
      %379 = vmatpush1.msra.mxu0 0.0
      %380 = vmatprep.mubr.f32.mxu0 0.0
      %381 = vmatmul.mubr.f32.gmra.mrb[0].mxu0 %v221
      %v382 = vpop.f32.mrb[0].mxu0
      %v383 = vadd.f32 0.0, %v382
      %v384 = vpop.f32.mrb[0].mxu0
      %385 = vmatprep.mubr.f32.mxu0 0.0
      %386 = vmatmul.mubr.f32.gmra.mrb[0].mxu0 %v224
      %v387 = vpop.f32.mrb[0].mxu0
      %v388 = vadd.f32 0.0, %v387
      %v389 = vpop.f32.mrb[0].mxu0
      %390 = vmatprep.mubr.f32.mxu0 0.0
      %391 = vmatmul.mubr.f32.gmra.mrb[0].mxu0 %v227
      %v392 = vpop.f32.mrb[0].mxu0
      %v393 = vadd.f32 0.0, %v392
      %v394 = vpop.f32.mrb[0].mxu0
      %395 = vmatprep.mubr.f32.mxu0 0.0
      %396 = vmatmul.mubr.f32.gmra.mrb[0].mxu0 %v230
      %v397 = vpop.f32.mrb[0].mxu0
      %v398 = vadd.f32 0.0, %v397
      %v399 = vpop.f32.mrb[0].mxu0
      %400 = vmatprep.mubr.f32.mxu0 0.0
      %401 = vmatmul.mubr.f32.gmra.mrb[0].mxu0 %v233
      %v402 = vpop.f32.mrb[0].mxu0
      %v403 = vadd.f32 0.0, %v402
      %v404 = vpop.f32.mrb[0].mxu0
      %405 = vmatprep.mubr.f32.mxu0 0.0
      %406 = vmatmul.mubr.f32.gmra.mrb[0].mxu0 %v236
      %v407 = vpop.f32.mrb[0].mxu0
      %v408 = vadd.f32 0.0, %v407
      %v409 = vpop.f32.mrb[0].mxu0
      %410 = vmatprep.mubr.f32.mxu0 0.0
      %411 = vmatmul.mubr.f32.gmra.mrb[0].mxu0 %v239
      %v412 = vpop.f32.mrb[0].mxu0
      %v413 = vadd.f32 0.0, %v412
      %v414 = vpop.f32.mrb[0].mxu0
      %415 = vmatprep.mubr.f32.mxu0 0.0
      %416 = vmatmul.mubr.f32.gmra.mrb[0].mxu0 %v242
      %v417 = vpop.f32.mrb[0].mxu0
      %v418 = vadd.f32 0.0, %v417
      %v419 = vpop.f32.mrb[0].mxu0
      %420 = vmatprep.mubr.f32.mxu0 0.0
      %421 = vmatmul.mubr.f32.gmra.mrb[0].mxu0 %v245
      %v422 = vpop.f32.mrb[0].mxu0
      %v423 = vadd.f32 0.0, %v422
      %v424 = vpop.f32.mrb[0].mxu0
      %425 = vmatprep.mubr.f32.mxu0 0.0
      %426 = vmatmul.mubr.f32.gmra.mrb[0].mxu0 %v248
      %v427 = vpop.f32.mrb[0].mxu0
      %v428 = vadd.f32 0.0, %v427
      %v429 = vpop.f32.mrb[0].mxu0
      %430 = vmatprep.mubr.f32.mxu0 0.0
      %431 = vmatmul.mubr.f32.gmra.mrb[0].mxu0 %v251
      %v432 = vpop.f32.mrb[0].mxu0
      %v433 = vadd.f32 0.0, %v432
      %v434 = vpop.f32.mrb[0].mxu0
      %435 = vmatprep.mubr.f32.mxu0 0.0
      %436 = vmatmul.mubr.f32.gmra.mrb[0].mxu0 %v254
      %v437 = vpop.f32.mrb[0].mxu0
      %v438 = vadd.f32 0.0, %v437
      %v439 = vpop.f32.mrb[0].mxu0
      %440 = vmatprep.mubr.f32.mxu0 0.0
      %441 = vmatmul.mubr.f32.gmra.mrb[0].mxu0 %v257
      %v442 = vpop.f32.mrb[0].mxu0
      %v443 = vadd.f32 0.0, %v442
      %v444 = vpop.f32.mrb[0].mxu0
      %445 = vmatprep.mubr.f32.mxu0 0.0
      %446 = vmatmul.mubr.f32.gmra.mrb[0].mxu0 %v260
      %v447 = vpop.f32.mrb[0].mxu0
      %v448 = vadd.f32 0.0, %v447
      %v449 = vpop.f32.mrb[0].mxu0
      %450 = vmatprep.mubr.f32.mxu0 0.0
      %451 = vmatmul.mubr.f32.gmra.mrb[0].mxu0 %v263
      %v452 = vpop.f32.mrb[0].mxu0
      %v453 = vadd.f32 0.0, %v452
      %v454 = vpop.f32.mrb[0].mxu0
      %455 = vmatprep.mubr.f32.mxu0 0.0
      %456 = vmatmul.mubr.f32.gmra.mrb[0].mxu0 %v266
      %v457 = vpop.f32.mrb[0].mxu0
      %v458 = vadd.f32 0.0, %v457
      %v459 = vpop.f32.mrb[0].mxu0
      %460 = vmatprep.mubr.f32.mxu0 0.0
      %461 = vmatmul.mubr.f32.gmra.mrb[0].mxu0 %v269
      %v462 = vpop.f32.mrb[0].mxu0
      %v463 = vadd.f32 0.0, %v462
      %v464 = vpop.f32.mrb[0].mxu0
      %465 = vmatprep.mubr.f32.mxu0 0.0
      %466 = vmatmul.mubr.f32.gmra.mrb[0].mxu0 %v272
      %v467 = vpop.f32.mrb[0].mxu0
      %v468 = vadd.f32 0.0, %v467
      %v469 = vpop.f32.mrb[0].mxu0
      %470 = vmatprep.mubr.f32.mxu0 0.0
      %471 = vmatmul.mubr.f32.gmra.mrb[0].mxu0 %v275
      %v472 = vpop.f32.mrb[0].mxu0
      %v473 = vadd.f32 0.0, %v472
      %v474 = vpop.f32.mrb[0].mxu0
      %475 = vmatprep.mubr.f32.mxu0 0.0
      %476 = vmatmul.mubr.f32.gmra.mrb[0].mxu0 %v278
      %v477 = vpop.f32.mrb[0].mxu0
      %v478 = vadd.f32 0.0, %v477
      %v479 = vpop.f32.mrb[0].mxu0
      %480 = vmatprep.mubr.f32.mxu0 0.0
      %481 = vmatmul.mubr.f32.gmra.mrb[0].mxu0 %v281
      %v482 = vpop.f32.mrb[0].mxu0
      %v483 = vadd.f32 0.0, %v482
      %v484 = vpop.f32.mrb[0].mxu0
      %485 = vmatprep.mubr.f32.mxu0 0.0
      %486 = vmatmul.mubr.f32.gmra.mrb[0].mxu0 %v284
      %v487 = vpop.f32.mrb[0].mxu0
      %v488 = vadd.f32 0.0, %v487
      %v489 = vpop.f32.mrb[0].mxu0
      %490 = vmatprep.mubr.f32.mxu0 0.0
      %491 = vmatmul.mubr.f32.gmra.mrb[0].mxu0 %v287
      %v492 = vpop.f32.mrb[0].mxu0
      %v493 = vadd.f32 0.0, %v492
      %v494 = vpop.f32.mrb[0].mxu0
      %495 = vmatprep.mubr.f32.mxu0 0.0
      %496 = vmatmul.mubr.f32.gmra.mrb[0].mxu0 %v290
      %v497 = vpop.f32.mrb[0].mxu0
      %v498 = vadd.f32 0.0, %v497
      %v499 = vpop.f32.mrb[0].mxu0
      %500 = vmatprep.mubr.f32.mxu0 0.0
      %501 = vmatmul.mubr.f32.gmra.mrb[0].mxu0 %v293
      %v502 = vpop.f32.mrb[0].mxu0
      %v503 = vadd.f32 0.0, %v502
      %v504 = vpop.f32.mrb[0].mxu0
      %505 = vmatprep.mubr.f32.mxu0 0.0
      %506 = vmatmul.mubr.f32.gmra.mrb[0].mxu0 %v296
      %v507 = vpop.f32.mrb[0].mxu0
      %v508 = vadd.f32 0.0, %v507
      %v509 = vpop.f32.mrb[0].mxu0
      %510 = vmatprep.mubr.f32.mxu0 0.0
      %511 = vmatmul.mubr.f32.gmra.mrb[0].mxu0 %v299
      %v512 = vpop.f32.mrb[0].mxu0
      %v513 = vadd.f32 0.0, %v512
      %v514 = vpop.f32.mrb[0].mxu0
      %515 = vmatprep.mubr.f32.mxu0 0.0
      %516 = vmatmul.mubr.f32.gmra.mrb[0].mxu0 %v302
      %v517 = vpop.f32.mrb[0].mxu0
      %v518 = vadd.f32 0.0, %v517
      %v519 = vpop.f32.mrb[0].mxu0
      %520 = vmatprep.mubr.f32.mxu0 0.0
      %521 = vmatmul.mubr.f32.gmra.mrb[0].mxu0 %v305
      %v522 = vpop.f32.mrb[0].mxu0
      %v523 = vadd.f32 0.0, %v522
      %v524 = vpop.f32.mrb[0].mxu0
      %525 = vmatprep.mubr.f32.mxu0 0.0
      %526 = vmatmul.mubr.f32.gmra.mrb[0].mxu0 %v308
      %v527 = vpop.f32.mrb[0].mxu0
      %v528 = vadd.f32 0.0, %v527
      %v529 = vpop.f32.mrb[0].mxu0
      %530 = vmatprep.mubr.f32.mxu0 0.0
      %531 = vmatmul.mubr.f32.gmra.mrb[0].mxu0 %v311
      %v532 = vpop.f32.mrb[0].mxu0
      %v533 = vadd.f32 0.0, %v532
      %v534 = vpop.f32.mrb[0].mxu0
      %535 = vmatprep.mubr.f32.mxu0 0.0
      %536 = vmatmul.mubr.f32.gmra.mrb[0].mxu0 %v314
      %v537 = vpop.f32.mrb[0].mxu0
      %v538 = vadd.f32 0.0, %v537
      %v539 = vpop.f32.mrb[0].mxu0
      %540 = vdwg.mxu0
      %541 = vst.msk [vmem:[%s179] sm:$0xff] %vm219, %v383
      %542 = vst.msk [vmem:[%s179 + $0x8] sm:$0xff] %vm219, %v388
      %543 = vst.msk [vmem:[%s179 + $0x10] sm:$0xff] %vm219, %v393
      %544 = vst.msk [vmem:[%s179 + $0x18] sm:$0xff] %vm219, %v398
      %545 = vst.msk [vmem:[%s179 + $0x20] sm:$0xff] %vm219, %v403
      %546 = vst.msk [vmem:[%s179 + $0x28] sm:$0xff] %vm219, %v408
      %547 = vst.msk [vmem:[%s179 + $0x30] sm:$0xff] %vm219, %v413
      %548 = vst.msk [vmem:[%s179 + $0x38] sm:$0xff] %vm219, %v418
      %549 = vst.msk [vmem:[%s179 + $0x40] sm:$0xff] %vm219, %v423
      %550 = vst.msk [vmem:[%s179 + $0x48] sm:$0xff] %vm219, %v428
      %551 = vst.msk [vmem:[%s179 + $0x50] sm:$0xff] %vm219, %v433
      %552 = vst.msk [vmem:[%s179 + $0x58] sm:$0xff] %vm219, %v438
      %553 = vst.msk [vmem:[%s179 + $0x60] sm:$0xff] %vm219, %v443
      %554 = vst.msk [vmem:[%s179 + $0x68] sm:$0xff] %vm219, %v448
      %555 = vst.msk [vmem:[%s179 + $0x70] sm:$0xff] %vm219, %v453
      %556 = vst.msk [vmem:[%s179 + $0x78] sm:$0xff] %vm219, %v458
      %557 = vst.msk [vmem:[%s179 + $0x80] sm:$0xff] %vm219, %v463
      %558 = vst.msk [vmem:[%s179 + $0x88] sm:$0xff] %vm219, %v468
      %559 = vst.msk [vmem:[%s179 + $0x90] sm:$0xff] %vm219, %v473
      %560 = vst.msk [vmem:[%s179 + $0x98] sm:$0xff] %vm219, %v478
      %561 = vst.msk [vmem:[%s179 + $0xa0] sm:$0xff] %vm219, %v483
      %562 = vst.msk [vmem:[%s179 + $0xa8] sm:$0xff] %vm219, %v488
      %563 = vst.msk [vmem:[%s179 + $0xb0] sm:$0xff] %vm219, %v493
      %564 = vst.msk [vmem:[%s179 + $0xb8] sm:$0xff] %vm219, %v498
      %565 = vst.msk [vmem:[%s179 + $0xc0] sm:$0xff] %vm219, %v503
      %566 = vst.msk [vmem:[%s179 + $0xc8] sm:$0xff] %vm219, %v508
      %567 = vst.msk [vmem:[%s179 + $0xd0] sm:$0xff] %vm219, %v513
      %568 = vst.msk [vmem:[%s179 + $0xd8] sm:$0xff] %vm219, %v518
      %569 = vst.msk [vmem:[%s179 + $0xe0] sm:$0xff] %vm219, %v523
      %570 = vst.msk [vmem:[%s179 + $0xe8] sm:$0xff] %vm219, %v528
      %571 = vst.msk [vmem:[%s179 + $0xf0] sm:$0xff] %vm219, %v533
      %572 = vst.msk [vmem:[%s179 + $0xf8] sm:$0xff] %vm219, %v538
      %v573 = vsel %vm219, %v383, 0.0
      %v574 = vsel %vm219, %v388, 0.0
      %v575 = vadd.f32 %v573, %v574
      %v576 = vsel %vm219, %v393, 0.0
      %v577 = vadd.f32 %v575, %v576
      %v578 = vsel %vm219, %v398, 0.0
      %v579 = vadd.f32 %v577, %v578
      %v580 = vsel %vm219, %v403, 0.0
      %v581 = vadd.f32 %v579, %v580
      %v582 = vsel %vm219, %v408, 0.0
      %v583 = vadd.f32 %v581, %v582
      %v584 = vsel %vm219, %v413, 0.0
      %v585 = vadd.f32 %v583, %v584
      %v586 = vsel %vm219, %v418, 0.0
      %v587 = vadd.f32 %v585, %v586
      %v588 = vsel %vm219, %v423, 0.0
      %v589 = vadd.f32 %v587, %v588
      %v590 = vsel %vm219, %v428, 0.0
      %v591 = vadd.f32 %v589, %v590
      %v592 = vsel %vm219, %v433, 0.0
      %v593 = vadd.f32 %v591, %v592
      %v594 = vsel %vm219, %v438, 0.0
      %v595 = vadd.f32 %v593, %v594
      %v596 = vsel %vm219, %v443, 0.0
      %v597 = vadd.f32 %v595, %v596
      %v598 = vsel %vm219, %v448, 0.0
      %v599 = vadd.f32 %v597, %v598
      %v600 = vsel %vm219, %v453, 0.0
      %v601 = vadd.f32 %v599, %v600
      %v602 = vsel %vm219, %v458, 0.0
      %v603 = vadd.f32 %v601, %v602
      %v604 = vsel %vm219, %v463, 0.0
      %v605 = vadd.f32 %v603, %v604
      %v606 = vsel %vm219, %v468, 0.0
      %v607 = vadd.f32 %v605, %v606
      %v608 = vsel %vm219, %v473, 0.0
      %v609 = vadd.f32 %v607, %v608
      %v610 = vsel %vm219, %v478, 0.0
      %v611 = vadd.f32 %v609, %v610
      %v612 = vsel %vm219, %v483, 0.0
      %v613 = vadd.f32 %v611, %v612
      %v614 = vsel %vm219, %v488, 0.0
      %v615 = vadd.f32 %v613, %v614
      %v616 = vsel %vm219, %v493, 0.0
      %v617 = vadd.f32 %v615, %v616
      %v618 = vsel %vm219, %v498, 0.0
      %v619 = vadd.f32 %v617, %v618
      %v620 = vsel %vm219, %v503, 0.0
      %v621 = vadd.f32 %v619, %v620
      %v622 = vsel %vm219, %v508, 0.0
      %v623 = vadd.f32 %v621, %v622
      %v624 = vsel %vm219, %v513, 0.0
      %v625 = vadd.f32 %v623, %v624
      %v626 = vsel %vm219, %v518, 0.0
      %v627 = vadd.f32 %v625, %v626
      %v628 = vsel %vm219, %v523, 0.0
      %v629 = vadd.f32 %v627, %v628
      %v630 = vsel %vm219, %v528, 0.0
      %v631 = vadd.f32 %v629, %v630
      %v632 = vsel %vm219, %v533, 0.0
      %v633 = vadd.f32 %v631, %v632
      %v634 = vsel %vm219, %v538, 0.0
      %v635 = vadd.f32 %v633, %v634
      %v636 = vrot.slane %v635, 4
      %v637 = vadd.f32 %v635, %v636
      %v638 = vrot.slane %v637, 2
      %v639 = vadd.f32 %v637, %v638
      %v640 = vrot.slane %v639, 1
      %v641 = vadd.f32 %v639, %v640
      %v642 = vmul.f32 %v383, %v383
      %v643 = vmul.f32 %v388, %v388
      %v644 = vmul.f32 %v393, %v393
      %v645 = vmul.f32 %v398, %v398
      %v646 = vmul.f32 %v403, %v403
      %v647 = vmul.f32 %v408, %v408
      %v648 = vmul.f32 %v413, %v413
      %v649 = vmul.f32 %v418, %v418
      %v650 = vmul.f32 %v423, %v423
      %v651 = vmul.f32 %v428, %v428
      %v652 = vmul.f32 %v433, %v433
      %v653 = vmul.f32 %v438, %v438
      %v654 = vmul.f32 %v443, %v443
      %v655 = vmul.f32 %v448, %v448
      %v656 = vmul.f32 %v453, %v453
      %v657 = vmul.f32 %v458, %v458
      %v658 = vmul.f32 %v463, %v463
      %v659 = vmul.f32 %v468, %v468
      %v660 = vmul.f32 %v473, %v473
      %v661 = vmul.f32 %v478, %v478
      %v662 = vmul.f32 %v483, %v483
      %v663 = vmul.f32 %v488, %v488
      %v664 = vmul.f32 %v493, %v493
      %v665 = vmul.f32 %v498, %v498
      %v666 = vmul.f32 %v503, %v503
      %v667 = vmul.f32 %v508, %v508
      %v668 = vmul.f32 %v513, %v513
      %v669 = vmul.f32 %v518, %v518
      %v670 = vmul.f32 %v523, %v523
      %v671 = vmul.f32 %v528, %v528
      %v672 = vmul.f32 %v533, %v533
      %v673 = vmul.f32 %v538, %v538
      %v674 = vsel %vm219, %v642, 0.0
      %v675 = vsel %vm219, %v643, 0.0
      %v676 = vadd.f32 %v674, %v675
      %v677 = vsel %vm219, %v644, 0.0
      %v678 = vadd.f32 %v676, %v677
      %v679 = vsel %vm219, %v645, 0.0
      %v680 = vadd.f32 %v678, %v679
      %v681 = vsel %vm219, %v646, 0.0
      %v682 = vadd.f32 %v680, %v681
      %v683 = vsel %vm219, %v647, 0.0
      %v684 = vadd.f32 %v682, %v683
      %v685 = vsel %vm219, %v648, 0.0
      %v686 = vadd.f32 %v684, %v685
      %v687 = vsel %vm219, %v649, 0.0
      %v688 = vadd.f32 %v686, %v687
      %v689 = vsel %vm219, %v650, 0.0
      %v690 = vadd.f32 %v688, %v689
      %v691 = vsel %vm219, %v651, 0.0
      %v692 = vadd.f32 %v690, %v691
      %v693 = vsel %vm219, %v652, 0.0
      %v694 = vadd.f32 %v692, %v693
      %v695 = vsel %vm219, %v653, 0.0
      %v696 = vadd.f32 %v694, %v695
      %v697 = vsel %vm219, %v654, 0.0
      %v698 = vadd.f32 %v696, %v697
      %v699 = vsel %vm219, %v655, 0.0
      %v700 = vadd.f32 %v698, %v699
      %v701 = vsel %vm219, %v656, 0.0
      %v702 = vadd.f32 %v700, %v701
      %v703 = vsel %vm219, %v657, 0.0
      %v704 = vadd.f32 %v702, %v703
      %v705 = vsel %vm219, %v658, 0.0
      %v706 = vadd.f32 %v704, %v705
      %v707 = vsel %vm219, %v659, 0.0
      %v708 = vadd.f32 %v706, %v707
      %v709 = vsel %vm219, %v660, 0.0
      %v710 = vadd.f32 %v708, %v709
      %v711 = vsel %vm219, %v661, 0.0
      %v712 = vadd.f32 %v710, %v711
      %v713 = vsel %vm219, %v662, 0.0
      %v714 = vadd.f32 %v712, %v713
      %v715 = vsel %vm219, %v663, 0.0
      %v716 = vadd.f32 %v714, %v715
      %v717 = vsel %vm219, %v664, 0.0
      %v718 = vadd.f32 %v716, %v717
      %v719 = vsel %vm219, %v665, 0.0
      %v720 = vadd.f32 %v718, %v719
      %v721 = vsel %vm219, %v666, 0.0
      %v722 = vadd.f32 %v720, %v721
      %v723 = vsel %vm219, %v667, 0.0
      %v724 = vadd.f32 %v722, %v723
      %v725 = vsel %vm219, %v668, 0.0
      %v726 = vadd.f32 %v724, %v725
      %v727 = vsel %vm219, %v669, 0.0
      %v728 = vadd.f32 %v726, %v727
      %v729 = vsel %vm219, %v670, 0.0
      %v730 = vadd.f32 %v728, %v729
      %v731 = vsel %vm219, %v671, 0.0
      %v732 = vadd.f32 %v730, %v731
      %v733 = vsel %vm219, %v672, 0.0
      %v734 = vadd.f32 %v732, %v733
      %v735 = vsel %vm219, %v673, 0.0
      %v736 = vadd.f32 %v734, %v735
      %v737 = vrot.slane %v736, 4
      %v738 = vadd.f32 %v736, %v737
      %v739 = vrot.slane %v738, 2
      %v740 = vadd.f32 %v738, %v739
      %v741 = vrot.slane %v740, 1
      %v742 = vadd.f32 %v740, %v741
      %vm743 = vcmask 1040384
      %v744 = vsel %vm743, %v641, %v742
      %vm745 = vcmask 123904
      %746 = vst.msk [vmem:[%s184] sm:$0x3] %vm745, %v744
      %s747 = smul.u32 32, %s15
      %p748 = scmp.lt.s32.totalorder %s747, 63
      %s749 = scalar_select %p748, %s747, 63
      %s750 = smul.addr %s749, 8
      %s751 = scalar_lea.vmem %s2, %s750
      %p752 = scmp.lt.s32.totalorder %s15, 1
      %s753 = scalar_select %p752, %s15, 1
      %s754 = smul.addr %s753, 2
      %s755 = scalar_lea.vmem %s3, %s754
      // Predicated region
      $region29: #{bottleneck_forward.6} parent=27 // pred_check
        %p756 = pneg %p80
      $region30: #{bottleneck_forward.6} parent=27 // pred_check_branch
        %758 = sbr.rel (%p756) target = $region32
      $region31: #{bottleneck_forward.6} parent=27 // pred_region
        %s759 = smul.u32 32, %s15
      $region32: #{bottleneck_forward.6} parent=27 // pred_fallthru
        _
      // Predicated region
      $region33: #{bottleneck_forward.6} parent=27 // pred_check
        %p760 = pneg %p106
      $region34: #{bottleneck_forward.6} parent=27 // pred_check_branch
        %762 = sbr.rel (%p760) target = $region36
      $region35: #{bottleneck_forward.6} parent=27 // pred_region
        _
      $region36: #{bottleneck_forward.6} parent=27 // pred_fallthru
        _
    $region28: #{bottleneck_forward.6} parent=5 // pred_fallthru
      _
    %p763 = scmp.le.s32.totalorder 2, %s10
    // Predicated region
    $region37: #{bottleneck_forward.6} parent=5 // pred_check
      %p764 = pneg %p763
    $region38: #{bottleneck_forward.6} parent=5 // pred_check_branch
      %766 = sbr.rel (%p764) target = $region40
    $region39: #{bottleneck_forward.6} parent=5 // pred_region
      %s767 = ssub.s32 %s10, 2
      // Predicated region
      $region41: #{bottleneck_forward.6} parent=39 // pred_check
        %p768 = pneg %p86
      $region42: #{bottleneck_forward.6} parent=39 // pred_check_branch
        %770 = sbr.rel (%p768) target = $region44
      $region43: #{bottleneck_forward.6} parent=39 // pred_region
        %s771 = smul.u32 32, %s16
        %p772 = scmp.lt.s32.totalorder %s771, 63
        %s773 = scalar_select %p772, %s771, 63
        %s774 = smul.addr %s773, 8
        %s775 = scalar_lea.vmem %s2, %s774
      $region44: #{bottleneck_forward.6} parent=39 // pred_fallthru
        _
      // Predicated region
      $region45: #{bottleneck_forward.6} parent=39 // pred_check
        %p776 = pneg %p112
      $region46: #{bottleneck_forward.6} parent=39 // pred_check_branch
        %778 = sbr.rel (%p776) target = $region48
      $region47: #{bottleneck_forward.6} parent=39 // pred_region
        %p779 = scmp.lt.s32.totalorder %s16, 1
        %s780 = scalar_select %p779, %s16, 1
        %s781 = smul.addr %s780, 2
        %s782 = scalar_lea.vmem %s3, %s781
      $region48: #{bottleneck_forward.6} parent=39 // pred_fallthru
        _
    $region40: #{bottleneck_forward.6} parent=5 // pred_fallthru
      _
  $region6: #{bottleneck_forward.6} parent=0 // loop_footer
    %s14 = sadd.s32 1, %s10
  $region7: #{bottleneck_forward.6} parent=0 // loop_footer_branch
    %9 = sbr.rel target = $region3
  $region8: #{bottleneck_forward.6} parent=0 // loop_exit
    _

// kernel: bottleneck_forward.8
$region0: #{bottleneck_forward.8}
  #allocation0 [shape = 'u32[]', space=smem, size = 0x4, offset = 0x4, fixed_abs, tag = 'smem constant byte address 0x4 - core index']
  #allocation1 [shape = 'u32[144,128]{1,0:T(1,128)}', space=vmem, size = 0x12000, scoped, tag = 'internal scratch']
  %s0 = inlined_call_operand.vmem [shape: f32[4,2,9,9,16], index: 0, kind: input, shape index: {}]
  %s1 = inlined_call_operand.vmem [shape: f32[9,16,16], index: 1, kind: input, shape index: {}]
  %s2 = inlined_call_operand.vmem [shape: f32[128,16], index: 2, kind: output, shape index: {0}]
  %s3 = inlined_call_operand.vmem [shape: f32[2,2,16], index: 3, kind: output, shape index: {1}]
  %4 = xla_tuple %s2, %s3
  %s5 = sld [smem:[#allocation0]]
  $region87: #{bottleneck_forward.8} parent=0
    _
  %s7 = ssub.s32 1, %s5
  %s8 = scalar_select 0, %s7, %s5
  $region1: #{bottleneck_forward.8} parent=0
    #allocation2 [shape = 'u8[589824]{0}', space=vmem, size = 0x90000, scoped, tag = 'input window, operand 0']
    loop: start=0, step=1, limit=4
    $region2: #{bottleneck_forward.8} parent=1 // loop_pre_header
      _
    $region3: #{bottleneck_forward.8} parent=1 // loop_header
      %s10 = sphi 0, %s14
      %p11 = scmp.ge.s32.totalorder %s10, 4
      %s20 = sphi 0, %s22
      %s23 = sphi 0, %s20
      %s24 = sphi 0, %s23
      %s40 = sphi 0, %s24
      %s44 = sphi 0, %s44
      %s46 = sphi 0, %s44
      %s47 = sphi 0, %s46
      %s61 = sphi 0, %s47
      %s67 = sphi 0, %s69
      %s70 = sphi 0, %s67
      %s71 = sphi 0, %s70
      %s87 = sphi 0, %s71
      %s93 = sphi 0, %s95
      %s96 = sphi 0, %s93
      %s97 = sphi 0, %s96
      %s113 = sphi 0, %s97
    $region4: #{bottleneck_forward.8} parent=1 // loop_header_branch
      %13 = sbr.rel (%p11) target = $region8
    $region5: #{bottleneck_forward.8} parent=1 // loop_body
      %s15 = ssub.s32 %s10, 1
      %s16 = ssub.s32 %s10, 2
      %s17 = sadd.s32 %s10, 1
      %s18 = ssub.s32 %s10, %s17
      %p19 = scmp.eq.s32.totalorder %s18, 0
      %s21 = sadd.s32 %s20, 1
      %s22 = scalar_select %p19, %s20, %s21
      %p25 = pneg %p19
      %p26 = scmp.eq.s32.totalorder %s10, 1
      %p27 = por %p25, %p26
      %p28 = scmp.ne.s32.totalorder %s20, %s23
      %p29 = scmp.eq.s32.totalorder %s10, 0
      %p30 = por %p28, %p29
      %p31 = scmp.ne.s32.totalorder %s20, %s23
      %p32 = scmp.eq.s32.totalorder %s15, 1
      %p33 = por %p31, %p32
      %p34 = scmp.ne.s32.totalorder %s23, %s24
      %p35 = scmp.eq.s32.totalorder %s15, 0
      %p36 = por %p34, %p35
      %p37 = scmp.ne.s32.totalorder %s23, %s24
      %p38 = scmp.eq.s32.totalorder %s16, 1
      %p39 = por %p37, %p38
      %p41 = scmp.ne.s32.totalorder %s24, %s40
      %p42 = scmp.eq.s32.totalorder %s16, 0
      %p43 = por %p41, %p42
      %s45 = sadd.s32 %s44, 1
      %p48 = scmp.eq.s32.totalorder %s10, 1
      %p49 = scmp.ne.s32.totalorder %s44, %s46
      %p50 = scmp.eq.s32.totalorder %s10, 0
      %p51 = por %p49, %p50
      %p52 = scmp.ne.s32.totalorder %s44, %s46
      %p53 = scmp.eq.s32.totalorder %s15, 1
      %p54 = por %p52, %p53
      %p55 = scmp.ne.s32.totalorder %s46, %s47
      %p56 = scmp.eq.s32.totalorder %s15, 0
      %p57 = por %p55, %p56
      %p58 = scmp.ne.s32.totalorder %s46, %s47
      %p59 = scmp.eq.s32.totalorder %s16, 1
      %p60 = por %p58, %p59
      %p62 = scmp.ne.s32.totalorder %s47, %s61
      %p63 = scmp.eq.s32.totalorder %s16, 0
      %p64 = por %p62, %p63
      %s65 = ssub.s32 %s10, %s17
      %p66 = scmp.eq.s32.totalorder %s65, 0
      %s68 = sadd.s32 %s67, 1
      %s69 = scalar_select %p66, %s67, %s68
      %p72 = pneg %p66
      %p73 = scmp.eq.s32.totalorder %s10, 1
      %p74 = por %p72, %p73
      %p75 = scmp.ne.s32.totalorder %s67, %s70
      %p76 = scmp.eq.s32.totalorder %s10, 0
      %p77 = por %p75, %p76
      %p78 = scmp.ne.s32.totalorder %s67, %s70
      %p79 = scmp.eq.s32.totalorder %s15, 1
      %p80 = por %p78, %p79
      %p81 = scmp.ne.s32.totalorder %s70, %s71
      %p82 = scmp.eq.s32.totalorder %s15, 0
      %p83 = por %p81, %p82
      %p84 = scmp.ne.s32.totalorder %s70, %s71
      %p85 = scmp.eq.s32.totalorder %s16, 1
      %p86 = por %p84, %p85
      %p88 = scmp.ne.s32.totalorder %s71, %s87
      %p89 = scmp.eq.s32.totalorder %s16, 0
      %p90 = por %p88, %p89
      %s91 = ssub.s32 %s10, %s17
      %p92 = scmp.eq.s32.totalorder %s91, 0
      %s94 = sadd.s32 %s93, 1
      %s95 = scalar_select %p92, %s93, %s94
      %p98 = pneg %p92
      %p99 = scmp.eq.s32.totalorder %s10, 1
      %p100 = por %p98, %p99
      %p101 = scmp.ne.s32.totalorder %s93, %s96
      %p102 = scmp.eq.s32.totalorder %s10, 0
      %p103 = por %p101, %p102
      %p104 = scmp.ne.s32.totalorder %s93, %s96
      %p105 = scmp.eq.s32.totalorder %s15, 1
      %p106 = por %p104, %p105
      %p107 = scmp.ne.s32.totalorder %s96, %s97
      %p108 = scmp.eq.s32.totalorder %s15, 0
      %p109 = por %p107, %p108
      %p110 = scmp.ne.s32.totalorder %s96, %s97
      %p111 = scmp.eq.s32.totalorder %s16, 1
      %p112 = por %p110, %p111
      %p114 = scmp.ne.s32.totalorder %s97, %s113
      %p115 = scmp.eq.s32.totalorder %s16, 0
      %p116 = por %p114, %p115
      %p117 = scmp.le.s32.totalorder 1, %s10
      %p118 = scmp.lt.s32.totalorder %s10, 3
      %p119 = pnand %p117, %p118
      %p120 = pneg %p119
      // Predicated region
      $region9: #{bottleneck_forward.8} parent=5 // pred_check
        _
      $region10: #{bottleneck_forward.8} parent=5 // pred_check_branch
        %122 = sbr.rel (%p119) target = $region12
      $region11: #{bottleneck_forward.8} parent=5 // pred_region
        %s123 = ssub.s32 %s10, 1
        // Predicated region
        $region13: #{bottleneck_forward.8} parent=11 // pred_check
          %p124 = pneg %p57
        $region14: #{bottleneck_forward.8} parent=11 // pred_check_branch
          %126 = sbr.rel (%p124) target = $region16
        $region15: #{bottleneck_forward.8} parent=11 // pred_region
          _
        $region16: #{bottleneck_forward.8} parent=11 // pred_fallthru
          _
      $region12: #{bottleneck_forward.8} parent=5 // pred_fallthru
        _
      %p127 = scmp.lt.s32.totalorder %s10, 2
      // Predicated region
      $region17: #{bottleneck_forward.8} parent=5 // pred_check
        %p128 = pneg %p127
      $region18: #{bottleneck_forward.8} parent=5 // pred_check_branch
        %130 = sbr.rel (%p128) target = $region20
      $region19: #{bottleneck_forward.8} parent=5 // pred_region
        // Predicated region
        $region21: #{bottleneck_forward.8} parent=19 // pred_check
          %p131 = pneg %p30
        $region22: #{bottleneck_forward.8} parent=19 // pred_check_branch
          %133 = sbr.rel (%p131) target = $region24
        $region23: #{bottleneck_forward.8} parent=19 // pred_region
          %s134 = sand.u32 %s20, 1
          %s135 = sand.u32 %s20, 1
          %s136 = smul.addr %s135, 576
          %s137 = scalar_lea.vmem [#allocation2], %s136
          %s138 = smul.addr %s10, 18
          %s139 = smul.addr %s138, 8
          %s140 = scalar_lea.vmem %s0, %s139
          // Predicated region
          $region25: #{bottleneck_forward.8} parent=23 // pred_check
            _
          $region26: #{bottleneck_forward.8} parent=23 // pred_check_branch
            %142 = sbr.rel (0) target = $region28
          $region27: #{bottleneck_forward.8} parent=23 // pred_region
            // Predicated region
            $region29: #{bottleneck_forward.8} parent=27 // pred_check
              _
            $region30: #{bottleneck_forward.8} parent=27 // pred_check_branch
              %144 = sbr.rel (0) target = $region32
            $region31: #{bottleneck_forward.8} parent=27 // pred_region
              // Predicated region
              $region44: #{bottleneck_forward.8} parent=31 // pred_check
                _
              $region45: #{bottleneck_forward.8} parent=31 // pred_check_branch
                %301 = sbr.rel (0) target = $region47
              $region46: #{bottleneck_forward.8} parent=31 // pred_region
                loop: start=0, step=1, limit=1
                $region48: #{bottleneck_forward.8} parent=46 // loop_pre_header
                  _
                $region49: #{bottleneck_forward.8} parent=46 // loop_header
                  %s303 = sphi 0, %s307
                  %p304 = scmp.ge.s32.totalorder %s303, 1
                  %s308 = sphi %s140, %s140
                  %s309 = sphi %s137, %s137
                $region50: #{bottleneck_forward.8} parent=46 // loop_header_branch
                  %306 = sbr.rel (%p304) target = $region54
                $region51: #{bottleneck_forward.8} parent=46 // loop_body
                  %v310 = vld [vmem:[%s308] sm:$0xff]
                  %311 = vst [vmem:[%s309] sm:$0xff] %v310
                  %v312 = vld [vmem:[%s308 + $0x8] sm:$0xff]
                  %313 = vst [vmem:[%s309 + $0x8] sm:$0xff] %v312
                  %v314 = vld [vmem:[%s308 + $0x10] sm:$0xff]
                  %315 = vst [vmem:[%s309 + $0x10] sm:$0xff] %v314
                  %v316 = vld [vmem:[%s308 + $0x18] sm:$0xff]
                  %317 = vst [vmem:[%s309 + $0x18] sm:$0xff] %v316
                  %v318 = vld [vmem:[%s308 + $0x20] sm:$0xff]
                  %319 = vst [vmem:[%s309 + $0x20] sm:$0xff] %v318
                  %v320 = vld [vmem:[%s308 + $0x28] sm:$0xff]
                  %321 = vst [vmem:[%s309 + $0x28] sm:$0xff] %v320
                  %v322 = vld [vmem:[%s308 + $0x30] sm:$0xff]
                  %323 = vst [vmem:[%s309 + $0x30] sm:$0xff] %v322
                  %v324 = vld [vmem:[%s308 + $0x38] sm:$0xff]
                  %325 = vst [vmem:[%s309 + $0x38] sm:$0xff] %v324
                  %v326 = vld [vmem:[%s308 + $0x40] sm:$0xff]
                  %327 = vst [vmem:[%s309 + $0x40] sm:$0xff] %v326
                  %v328 = vld [vmem:[%s308 + $0x48] sm:$0xff]
                  %329 = vst [vmem:[%s309 + $0x48] sm:$0xff] %v328
                  %v330 = vld [vmem:[%s308 + $0x50] sm:$0xff]
                  %331 = vst [vmem:[%s309 + $0x50] sm:$0xff] %v330
                  %v332 = vld [vmem:[%s308 + $0x58] sm:$0xff]
                  %333 = vst [vmem:[%s309 + $0x58] sm:$0xff] %v332
                  %v334 = vld [vmem:[%s308 + $0x60] sm:$0xff]
                  %335 = vst [vmem:[%s309 + $0x60] sm:$0xff] %v334
                  %v336 = vld [vmem:[%s308 + $0x68] sm:$0xff]
                  %337 = vst [vmem:[%s309 + $0x68] sm:$0xff] %v336
                  %v338 = vld [vmem:[%s308 + $0x70] sm:$0xff]
                  %339 = vst [vmem:[%s309 + $0x70] sm:$0xff] %v338
                  %v340 = vld [vmem:[%s308 + $0x78] sm:$0xff]
                  %341 = vst [vmem:[%s309 + $0x78] sm:$0xff] %v340
                  %v342 = vld [vmem:[%s308 + $0x80] sm:$0xff]
                  %343 = vst [vmem:[%s309 + $0x80] sm:$0xff] %v342
                  %v344 = vld [vmem:[%s308 + $0x88] sm:$0xff]
                  %345 = vst [vmem:[%s309 + $0x88] sm:$0xff] %v344
                  %v346 = vld [vmem:[%s308 + $0x120] sm:$0xff]
                  %347 = vst [vmem:[%s309 + $0x90] sm:$0xff] %v346
                  %v348 = vld [vmem:[%s308 + $0x128] sm:$0xff]
                  %349 = vst [vmem:[%s309 + $0x98] sm:$0xff] %v348
                  %v350 = vld [vmem:[%s308 + $0x130] sm:$0xff]
                  %351 = vst [vmem:[%s309 + $0xa0] sm:$0xff] %v350
                  %v352 = vld [vmem:[%s308 + $0x138] sm:$0xff]
                  %353 = vst [vmem:[%s309 + $0xa8] sm:$0xff] %v352
                  %v354 = vld [vmem:[%s308 + $0x140] sm:$0xff]
                  %355 = vst [vmem:[%s309 + $0xb0] sm:$0xff] %v354
                  %v356 = vld [vmem:[%s308 + $0x148] sm:$0xff]
                  %357 = vst [vmem:[%s309 + $0xb8] sm:$0xff] %v356
                  %v358 = vld [vmem:[%s308 + $0x150] sm:$0xff]
                  %359 = vst [vmem:[%s309 + $0xc0] sm:$0xff] %v358
                  %v360 = vld [vmem:[%s308 + $0x158] sm:$0xff]
                  %361 = vst [vmem:[%s309 + $0xc8] sm:$0xff] %v360
                  %v362 = vld [vmem:[%s308 + $0x160] sm:$0xff]
                  %363 = vst [vmem:[%s309 + $0xd0] sm:$0xff] %v362
                  %v364 = vld [vmem:[%s308 + $0x168] sm:$0xff]
                  %365 = vst [vmem:[%s309 + $0xd8] sm:$0xff] %v364
                  %v366 = vld [vmem:[%s308 + $0x170] sm:$0xff]
                  %367 = vst [vmem:[%s309 + $0xe0] sm:$0xff] %v366
                  %v368 = vld [vmem:[%s308 + $0x178] sm:$0xff]
                  %369 = vst [vmem:[%s309 + $0xe8] sm:$0xff] %v368
                  %v370 = vld [vmem:[%s308 + $0x180] sm:$0xff]
                  %371 = vst [vmem:[%s309 + $0xf0] sm:$0xff] %v370
                  %v372 = vld [vmem:[%s308 + $0x188] sm:$0xff]
                  %373 = vst [vmem:[%s309 + $0xf8] sm:$0xff] %v372
                  %v374 = vld [vmem:[%s308 + $0x190] sm:$0xff]
                  %375 = vst [vmem:[%s309 + $0x100] sm:$0xff] %v374
                  %v376 = vld [vmem:[%s308 + $0x198] sm:$0xff]
                  %377 = vst [vmem:[%s309 + $0x108] sm:$0xff] %v376
                  %v378 = vld [vmem:[%s308 + $0x1a0] sm:$0xff]
                  %379 = vst [vmem:[%s309 + $0x110] sm:$0xff] %v378
                  %v380 = vld [vmem:[%s308 + $0x1a8] sm:$0xff]
                  %381 = vst [vmem:[%s309 + $0x118] sm:$0xff] %v380
                  %v382 = vld [vmem:[%s308 + $0x240] sm:$0xff]
                  %383 = vst [vmem:[%s309 + $0x120] sm:$0xff] %v382
                  %v384 = vld [vmem:[%s308 + $0x248] sm:$0xff]
                  %385 = vst [vmem:[%s309 + $0x128] sm:$0xff] %v384
                  %v386 = vld [vmem:[%s308 + $0x250] sm:$0xff]
                  %387 = vst [vmem:[%s309 + $0x130] sm:$0xff] %v386
                  %v388 = vld [vmem:[%s308 + $0x258] sm:$0xff]
                  %389 = vst [vmem:[%s309 + $0x138] sm:$0xff] %v388
                  %v390 = vld [vmem:[%s308 + $0x260] sm:$0xff]
                  %391 = vst [vmem:[%s309 + $0x140] sm:$0xff] %v390
                  %v392 = vld [vmem:[%s308 + $0x268] sm:$0xff]
                  %393 = vst [vmem:[%s309 + $0x148] sm:$0xff] %v392
                  %v394 = vld [vmem:[%s308 + $0x270] sm:$0xff]
                  %395 = vst [vmem:[%s309 + $0x150] sm:$0xff] %v394
                  %v396 = vld [vmem:[%s308 + $0x278] sm:$0xff]
                  %397 = vst [vmem:[%s309 + $0x158] sm:$0xff] %v396
                  %v398 = vld [vmem:[%s308 + $0x280] sm:$0xff]
                  %399 = vst [vmem:[%s309 + $0x160] sm:$0xff] %v398
                  %v400 = vld [vmem:[%s308 + $0x288] sm:$0xff]
                  %401 = vst [vmem:[%s309 + $0x168] sm:$0xff] %v400
                  %v402 = vld [vmem:[%s308 + $0x290] sm:$0xff]
                  %403 = vst [vmem:[%s309 + $0x170] sm:$0xff] %v402
                  %v404 = vld [vmem:[%s308 + $0x298] sm:$0xff]
                  %405 = vst [vmem:[%s309 + $0x178] sm:$0xff] %v404
                  %v406 = vld [vmem:[%s308 + $0x2a0] sm:$0xff]
                  %407 = vst [vmem:[%s309 + $0x180] sm:$0xff] %v406
                  %v408 = vld [vmem:[%s308 + $0x2a8] sm:$0xff]
                  %409 = vst [vmem:[%s309 + $0x188] sm:$0xff] %v408
                  %v410 = vld [vmem:[%s308 + $0x2b0] sm:$0xff]
                  %411 = vst [vmem:[%s309 + $0x190] sm:$0xff] %v410
                  %v412 = vld [vmem:[%s308 + $0x2b8] sm:$0xff]
                  %413 = vst [vmem:[%s309 + $0x198] sm:$0xff] %v412
                  %v414 = vld [vmem:[%s308 + $0x2c0] sm:$0xff]
                  %415 = vst [vmem:[%s309 + $0x1a0] sm:$0xff] %v414
                  %v416 = vld [vmem:[%s308 + $0x2c8] sm:$0xff]
                  %417 = vst [vmem:[%s309 + $0x1a8] sm:$0xff] %v416
                  %v418 = vld [vmem:[%s308 + $0x360] sm:$0xff]
                  %419 = vst [vmem:[%s309 + $0x1b0] sm:$0xff] %v418
                  %v420 = vld [vmem:[%s308 + $0x368] sm:$0xff]
                  %421 = vst [vmem:[%s309 + $0x1b8] sm:$0xff] %v420
                  %v422 = vld [vmem:[%s308 + $0x370] sm:$0xff]
                  %423 = vst [vmem:[%s309 + $0x1c0] sm:$0xff] %v422
                  %v424 = vld [vmem:[%s308 + $0x378] sm:$0xff]
                  %425 = vst [vmem:[%s309 + $0x1c8] sm:$0xff] %v424
                  %v426 = vld [vmem:[%s308 + $0x380] sm:$0xff]
                  %427 = vst [vmem:[%s309 + $0x1d0] sm:$0xff] %v426
                  %v428 = vld [vmem:[%s308 + $0x388] sm:$0xff]
                  %429 = vst [vmem:[%s309 + $0x1d8] sm:$0xff] %v428
                  %v430 = vld [vmem:[%s308 + $0x390] sm:$0xff]
                  %431 = vst [vmem:[%s309 + $0x1e0] sm:$0xff] %v430
                  %v432 = vld [vmem:[%s308 + $0x398] sm:$0xff]
                  %433 = vst [vmem:[%s309 + $0x1e8] sm:$0xff] %v432
                  %v434 = vld [vmem:[%s308 + $0x3a0] sm:$0xff]
                  %435 = vst [vmem:[%s309 + $0x1f0] sm:$0xff] %v434
                  %v436 = vld [vmem:[%s308 + $0x3a8] sm:$0xff]
                  %437 = vst [vmem:[%s309 + $0x1f8] sm:$0xff] %v436
                  %v438 = vld [vmem:[%s308 + $0x3b0] sm:$0xff]
                  %439 = vst [vmem:[%s309 + $0x200] sm:$0xff] %v438
                  %v440 = vld [vmem:[%s308 + $0x3b8] sm:$0xff]
                  %441 = vst [vmem:[%s309 + $0x208] sm:$0xff] %v440
                  %v442 = vld [vmem:[%s308 + $0x3c0] sm:$0xff]
                  %443 = vst [vmem:[%s309 + $0x210] sm:$0xff] %v442
                  %v444 = vld [vmem:[%s308 + $0x3c8] sm:$0xff]
                  %445 = vst [vmem:[%s309 + $0x218] sm:$0xff] %v444
                  %v446 = vld [vmem:[%s308 + $0x3d0] sm:$0xff]
                  %447 = vst [vmem:[%s309 + $0x220] sm:$0xff] %v446
                  %v448 = vld [vmem:[%s308 + $0x3d8] sm:$0xff]
                  %449 = vst [vmem:[%s309 + $0x228] sm:$0xff] %v448
                  %v450 = vld [vmem:[%s308 + $0x3e0] sm:$0xff]
                  %451 = vst [vmem:[%s309 + $0x230] sm:$0xff] %v450
                  %v452 = vld [vmem:[%s308 + $0x3e8] sm:$0xff]
                  %453 = vst [vmem:[%s309 + $0x238] sm:$0xff] %v452
                $region52: #{bottleneck_forward.8} parent=46 // loop_footer
                  %s307 = sadd.s32 1, %s303
                $region53: #{bottleneck_forward.8} parent=46 // loop_footer_branch
                  %302 = sbr.rel target = $region49
                $region54: #{bottleneck_forward.8} parent=46 // loop_exit
                  _
              $region47: #{bottleneck_forward.8} parent=31 // pred_fallthru
                _
              // Predicated region
              $region55: #{bottleneck_forward.8} parent=31 // pred_check
                _
              $region56: #{bottleneck_forward.8} parent=31 // pred_check_branch
                %455 = sbr.rel target = $region58
              $region57: #{bottleneck_forward.8} parent=31 // pred_region
                _
              $region58: #{bottleneck_forward.8} parent=31 // pred_fallthru
                _
            $region32: #{bottleneck_forward.8} parent=27 // pred_fallthru
              _
            // Predicated region
            $region33: #{bottleneck_forward.8} parent=27 // pred_check
              _
            $region34: #{bottleneck_forward.8} parent=27 // pred_check_branch
              %146 = sbr.rel target = $region36
            $region35: #{bottleneck_forward.8} parent=27 // pred_region
              loop: start=0, step=1, limit=1
              $region37: #{bottleneck_forward.8} parent=35 // loop_pre_header
                _
              $region38: #{bottleneck_forward.8} parent=35 // loop_header
                %s149 = sphi 0, %s153
                %p150 = scmp.ge.s32.totalorder %s149, 1
                %s154 = sphi %s140, %s140
                %s155 = sphi %s137, %s137
              $region39: #{bottleneck_forward.8} parent=35 // loop_header_branch
                %152 = sbr.rel (%p150) target = $region43
              $region40: #{bottleneck_forward.8} parent=35 // loop_body
                %v156 = vld [vmem:[%s154] sm:$0xff]
                %157 = vst [vmem:[%s155] sm:$0xff] %v156
                %v158 = vld [vmem:[%s154 + $0x8] sm:$0xff]
                %159 = vst [vmem:[%s155 + $0x8] sm:$0xff] %v158
                %v160 = vld [vmem:[%s154 + $0x10] sm:$0xff]
                %161 = vst [vmem:[%s155 + $0x10] sm:$0xff] %v160
                %v162 = vld [vmem:[%s154 + $0x18] sm:$0xff]
                %163 = vst [vmem:[%s155 + $0x18] sm:$0xff] %v162
                %v164 = vld [vmem:[%s154 + $0x20] sm:$0xff]
                %165 = vst [vmem:[%s155 + $0x20] sm:$0xff] %v164
                %v166 = vld [vmem:[%s154 + $0x28] sm:$0xff]
                %167 = vst [vmem:[%s155 + $0x28] sm:$0xff] %v166
                %v168 = vld [vmem:[%s154 + $0x30] sm:$0xff]
                %169 = vst [vmem:[%s155 + $0x30] sm:$0xff] %v168
                %v170 = vld [vmem:[%s154 + $0x38] sm:$0xff]
                %171 = vst [vmem:[%s155 + $0x38] sm:$0xff] %v170
                %v172 = vld [vmem:[%s154 + $0x40] sm:$0xff]
                %173 = vst [vmem:[%s155 + $0x40] sm:$0xff] %v172
                %v174 = vld [vmem:[%s154 + $0x48] sm:$0xff]
                %175 = vst [vmem:[%s155 + $0x48] sm:$0xff] %v174
                %v176 = vld [vmem:[%s154 + $0x50] sm:$0xff]
                %177 = vst [vmem:[%s155 + $0x50] sm:$0xff] %v176
                %v178 = vld [vmem:[%s154 + $0x58] sm:$0xff]
                %179 = vst [vmem:[%s155 + $0x58] sm:$0xff] %v178
                %v180 = vld [vmem:[%s154 + $0x60] sm:$0xff]
                %181 = vst [vmem:[%s155 + $0x60] sm:$0xff] %v180
                %v182 = vld [vmem:[%s154 + $0x68] sm:$0xff]
                %183 = vst [vmem:[%s155 + $0x68] sm:$0xff] %v182
                %v184 = vld [vmem:[%s154 + $0x70] sm:$0xff]
                %185 = vst [vmem:[%s155 + $0x70] sm:$0xff] %v184
                %v186 = vld [vmem:[%s154 + $0x78] sm:$0xff]
                %187 = vst [vmem:[%s155 + $0x78] sm:$0xff] %v186
                %v188 = vld [vmem:[%s154 + $0x80] sm:$0xff]
                %189 = vst [vmem:[%s155 + $0x80] sm:$0xff] %v188
                %v190 = vld [vmem:[%s154 + $0x88] sm:$0xff]
                %191 = vst [vmem:[%s155 + $0x88] sm:$0xff] %v190
                %v192 = vld [vmem:[%s154 + $0x120] sm:$0xff]
                %193 = vst [vmem:[%s155 + $0x90] sm:$0xff] %v192
                %v194 = vld [vmem:[%s154 + $0x128] sm:$0xff]
                %195 = vst [vmem:[%s155 + $0x98] sm:$0xff] %v194
                %v196 = vld [vmem:[%s154 + $0x130] sm:$0xff]
                %197 = vst [vmem:[%s155 + $0xa0] sm:$0xff] %v196
                %v198 = vld [vmem:[%s154 + $0x138] sm:$0xff]
                %199 = vst [vmem:[%s155 + $0xa8] sm:$0xff] %v198
                %v200 = vld [vmem:[%s154 + $0x140] sm:$0xff]
                %201 = vst [vmem:[%s155 + $0xb0] sm:$0xff] %v200
                %v202 = vld [vmem:[%s154 + $0x148] sm:$0xff]
                %203 = vst [vmem:[%s155 + $0xb8] sm:$0xff] %v202
                %v204 = vld [vmem:[%s154 + $0x150] sm:$0xff]
                %205 = vst [vmem:[%s155 + $0xc0] sm:$0xff] %v204
                %v206 = vld [vmem:[%s154 + $0x158] sm:$0xff]
                %207 = vst [vmem:[%s155 + $0xc8] sm:$0xff] %v206
                %v208 = vld [vmem:[%s154 + $0x160] sm:$0xff]
                %209 = vst [vmem:[%s155 + $0xd0] sm:$0xff] %v208
                %v210 = vld [vmem:[%s154 + $0x168] sm:$0xff]
                %211 = vst [vmem:[%s155 + $0xd8] sm:$0xff] %v210
                %v212 = vld [vmem:[%s154 + $0x170] sm:$0xff]
                %213 = vst [vmem:[%s155 + $0xe0] sm:$0xff] %v212
                %v214 = vld [vmem:[%s154 + $0x178] sm:$0xff]
                %215 = vst [vmem:[%s155 + $0xe8] sm:$0xff] %v214
                %v216 = vld [vmem:[%s154 + $0x180] sm:$0xff]
                %217 = vst [vmem:[%s155 + $0xf0] sm:$0xff] %v216
                %v218 = vld [vmem:[%s154 + $0x188] sm:$0xff]
                %219 = vst [vmem:[%s155 + $0xf8] sm:$0xff] %v218
                %v220 = vld [vmem:[%s154 + $0x190] sm:$0xff]
                %221 = vst [vmem:[%s155 + $0x100] sm:$0xff] %v220
                %v222 = vld [vmem:[%s154 + $0x198] sm:$0xff]
                %223 = vst [vmem:[%s155 + $0x108] sm:$0xff] %v222
                %v224 = vld [vmem:[%s154 + $0x1a0] sm:$0xff]
                %225 = vst [vmem:[%s155 + $0x110] sm:$0xff] %v224
                %v226 = vld [vmem:[%s154 + $0x1a8] sm:$0xff]
                %227 = vst [vmem:[%s155 + $0x118] sm:$0xff] %v226
                %v228 = vld [vmem:[%s154 + $0x240] sm:$0xff]
                %229 = vst [vmem:[%s155 + $0x120] sm:$0xff] %v228
                %v230 = vld [vmem:[%s154 + $0x248] sm:$0xff]
                %231 = vst [vmem:[%s155 + $0x128] sm:$0xff] %v230
                %v232 = vld [vmem:[%s154 + $0x250] sm:$0xff]
                %233 = vst [vmem:[%s155 + $0x130] sm:$0xff] %v232
                %v234 = vld [vmem:[%s154 + $0x258] sm:$0xff]
                %235 = vst [vmem:[%s155 + $0x138] sm:$0xff] %v234
                %v236 = vld [vmem:[%s154 + $0x260] sm:$0xff]
                %237 = vst [vmem:[%s155 + $0x140] sm:$0xff] %v236
                %v238 = vld [vmem:[%s154 + $0x268] sm:$0xff]
                %239 = vst [vmem:[%s155 + $0x148] sm:$0xff] %v238
                %v240 = vld [vmem:[%s154 + $0x270] sm:$0xff]
                %241 = vst [vmem:[%s155 + $0x150] sm:$0xff] %v240
                %v242 = vld [vmem:[%s154 + $0x278] sm:$0xff]
                %243 = vst [vmem:[%s155 + $0x158] sm:$0xff] %v242
                %v244 = vld [vmem:[%s154 + $0x280] sm:$0xff]
                %245 = vst [vmem:[%s155 + $0x160] sm:$0xff] %v244
                %v246 = vld [vmem:[%s154 + $0x288] sm:$0xff]
                %247 = vst [vmem:[%s155 + $0x168] sm:$0xff] %v246
                %v248 = vld [vmem:[%s154 + $0x290] sm:$0xff]
                %249 = vst [vmem:[%s155 + $0x170] sm:$0xff] %v248
                %v250 = vld [vmem:[%s154 + $0x298] sm:$0xff]
                %251 = vst [vmem:[%s155 + $0x178] sm:$0xff] %v250
                %v252 = vld [vmem:[%s154 + $0x2a0] sm:$0xff]
                %253 = vst [vmem:[%s155 + $0x180] sm:$0xff] %v252
                %v254 = vld [vmem:[%s154 + $0x2a8] sm:$0xff]
                %255 = vst [vmem:[%s155 + $0x188] sm:$0xff] %v254
                %v256 = vld [vmem:[%s154 + $0x2b0] sm:$0xff]
                %257 = vst [vmem:[%s155 + $0x190] sm:$0xff] %v256
                %v258 = vld [vmem:[%s154 + $0x2b8] sm:$0xff]
                %259 = vst [vmem:[%s155 + $0x198] sm:$0xff] %v258
                %v260 = vld [vmem:[%s154 + $0x2c0] sm:$0xff]
                %261 = vst [vmem:[%s155 + $0x1a0] sm:$0xff] %v260
                %v262 = vld [vmem:[%s154 + $0x2c8] sm:$0xff]
                %263 = vst [vmem:[%s155 + $0x1a8] sm:$0xff] %v262
                %v264 = vld [vmem:[%s154 + $0x360] sm:$0xff]
                %265 = vst [vmem:[%s155 + $0x1b0] sm:$0xff] %v264
                %v266 = vld [vmem:[%s154 + $0x368] sm:$0xff]
                %267 = vst [vmem:[%s155 + $0x1b8] sm:$0xff] %v266
                %v268 = vld [vmem:[%s154 + $0x370] sm:$0xff]
                %269 = vst [vmem:[%s155 + $0x1c0] sm:$0xff] %v268
                %v270 = vld [vmem:[%s154 + $0x378] sm:$0xff]
                %271 = vst [vmem:[%s155 + $0x1c8] sm:$0xff] %v270
                %v272 = vld [vmem:[%s154 + $0x380] sm:$0xff]
                %273 = vst [vmem:[%s155 + $0x1d0] sm:$0xff] %v272
                %v274 = vld [vmem:[%s154 + $0x388] sm:$0xff]
                %275 = vst [vmem:[%s155 + $0x1d8] sm:$0xff] %v274
                %v276 = vld [vmem:[%s154 + $0x390] sm:$0xff]
                %277 = vst [vmem:[%s155 + $0x1e0] sm:$0xff] %v276
                %v278 = vld [vmem:[%s154 + $0x398] sm:$0xff]
                %279 = vst [vmem:[%s155 + $0x1e8] sm:$0xff] %v278
                %v280 = vld [vmem:[%s154 + $0x3a0] sm:$0xff]
                %281 = vst [vmem:[%s155 + $0x1f0] sm:$0xff] %v280
                %v282 = vld [vmem:[%s154 + $0x3a8] sm:$0xff]
                %283 = vst [vmem:[%s155 + $0x1f8] sm:$0xff] %v282
                %v284 = vld [vmem:[%s154 + $0x3b0] sm:$0xff]
                %285 = vst [vmem:[%s155 + $0x200] sm:$0xff] %v284
                %v286 = vld [vmem:[%s154 + $0x3b8] sm:$0xff]
                %287 = vst [vmem:[%s155 + $0x208] sm:$0xff] %v286
                %v288 = vld [vmem:[%s154 + $0x3c0] sm:$0xff]
                %289 = vst [vmem:[%s155 + $0x210] sm:$0xff] %v288
                %v290 = vld [vmem:[%s154 + $0x3c8] sm:$0xff]
                %291 = vst [vmem:[%s155 + $0x218] sm:$0xff] %v290
                %v292 = vld [vmem:[%s154 + $0x3d0] sm:$0xff]
                %293 = vst [vmem:[%s155 + $0x220] sm:$0xff] %v292
                %v294 = vld [vmem:[%s154 + $0x3d8] sm:$0xff]
                %295 = vst [vmem:[%s155 + $0x228] sm:$0xff] %v294
                %v296 = vld [vmem:[%s154 + $0x3e0] sm:$0xff]
                %297 = vst [vmem:[%s155 + $0x230] sm:$0xff] %v296
                %v298 = vld [vmem:[%s154 + $0x3e8] sm:$0xff]
                %299 = vst [vmem:[%s155 + $0x238] sm:$0xff] %v298
              $region41: #{bottleneck_forward.8} parent=35 // loop_footer
                %s153 = sadd.s32 1, %s149
              $region42: #{bottleneck_forward.8} parent=35 // loop_footer_branch
                %148 = sbr.rel target = $region38
              $region43: #{bottleneck_forward.8} parent=35 // loop_exit
                _
            $region36: #{bottleneck_forward.8} parent=27 // pred_fallthru
              _
          $region28: #{bottleneck_forward.8} parent=23 // pred_fallthru
            _
          %456 = vnop
        $region24: #{bottleneck_forward.8} parent=19 // pred_fallthru
          _
      $region20: #{bottleneck_forward.8} parent=5 // pred_fallthru
        _
      %p457 = scmp.le.s32.totalorder 1, %s10
      %p458 = scmp.lt.s32.totalorder %s10, 3
      %p459 = pnand %p457, %p458
      %p460 = pneg %p459
      // Predicated region
      $region59: #{bottleneck_forward.8} parent=5 // pred_check
        _
      $region60: #{bottleneck_forward.8} parent=5 // pred_check_branch
        %462 = sbr.rel (%p459) target = $region62
      $region61: #{bottleneck_forward.8} parent=5 // pred_region
        %s463 = ssub.s32 %s10, 1
        %s464 = sand.u32 %s23, 1
        %s465 = sand.u32 %s23, 1
        %s466 = smul.addr %s465, 576
        %s467 = scalar_lea.vmem [#allocation2], %s466
        // Predicated region
        $region63: #{bottleneck_forward.8} parent=61 // pred_check
          %p468 = pneg %p36
        $region64: #{bottleneck_forward.8} parent=61 // pred_check_branch
          %470 = sbr.rel (%p468) target = $region66
        $region65: #{bottleneck_forward.8} parent=61 // pred_region
          _
        $region66: #{bottleneck_forward.8} parent=61 // pred_fallthru
          _
        %s471 = sand.u32 %s23, 1
        %s472 = sand.u32 %s23, 1
        %s473 = smul.addr %s472, 576
        %s474 = scalar_lea.vmem [#allocation2], %s473
        %p475 = pneg %p36
        %p476 = pneg %p33
        %p477 = pneg %p57
        %p478 = pneg %p54
        %p479 = pneg %p83
        %p480 = pneg %p80
        %s481 = smul.u32 8, %s15
        %p482 = scmp.lt.s32.totalorder %s481, 15
        %s483 = scalar_select %p482, %s481, 15
        %s484 = smul.addr %s483, 8
        %s485 = scalar_lea.vmem %s2, %s484
        %p486 = pneg %p109
        %p487 = pneg %p106
        %p488 = scmp.lt.s32.totalorder %s15, 1
        %s489 = scalar_select %p488, %s15, 1
        %s490 = smul.addr %s489, 2
        %s491 = scalar_lea.vmem %s3, %s490
        %s492 = smul.u32 8, %s15
        %p493 = scmp.lt.s32.totalorder %s492, 15
        %s494 = scalar_select %p493, %s492, 15
        %s495 = smul.addr %s494, 8
        %s496 = scalar_lea.vmem %s2, %s495
        %s497 = smul.u32 8, %s15
        %p498 = scmp.lt.s32.totalorder %s15, 1
        %s499 = scalar_select %p498, %s15, 1
        %s500 = smul.addr %s499, 2
        %s501 = scalar_lea.vmem %s3, %s500
        %v502 = vld [vmem:[%s467] sm:$0xff]
        %v503 = vld [vmem:[%s467 + $0x10] sm:$0xff]
        %v504 = vld [vmem:[%s467 + $0x20] sm:$0xff]
        %v505 = vld [vmem:[%s467 + $0x30] sm:$0xff]
        %v506 = vld [vmem:[%s467 + $0x40] sm:$0xff]
        %v507 = vld [vmem:[%s467 + $0x50] sm:$0xff]
        %v508 = vld [vmem:[%s467 + $0x60] sm:$0xff]
        %v509 = vld [vmem:[%s467 + $0x70] sm:$0xff]
        %v510 = vld [vmem:[%s1] sm:$0xff]
        %v511 = vld [vmem:[%s1 + $0x8] sm:$0xff]
        %s512 = scalar_lea.vmem %s467, 144 [#allocation2]
        %v513 = vld [vmem:[%s512] sm:$0xff]
        %v514 = vld [vmem:[%s512 + $0x10] sm:$0xff]
        %v515 = vld [vmem:[%s512 + $0x20] sm:$0xff]
        %v516 = vld [vmem:[%s512 + $0x30] sm:$0xff]
        %v517 = vld [vmem:[%s512 + $0x40] sm:$0xff]
        %v518 = vld [vmem:[%s512 + $0x50] sm:$0xff]
        %v519 = vld [vmem:[%s512 + $0x60] sm:$0xff]
        %v520 = vld [vmem:[%s512 + $0x70] sm:$0xff]
        %s521 = scalar_lea.vmem %s1, 16
        %v522 = vld [vmem:[%s521] sm:$0xff]
        %v523 = vld [vmem:[%s521 + $0x8] sm:$0xff]
        %vm524 = vcmask 130048
        %v526 = vsel %vm524, %v513, 0
        %v529 = vsel %vm524, %v514, 0
        %v532 = vsel %vm524, %v515, 0
        %v535 = vsel %vm524, %v516, 0
        %v538 = vsel %vm524, %v517, 0
        %v541 = vsel %vm524, %v518, 0
        %v544 = vsel %vm524, %v519, 0
        %v547 = vsel %vm524, %v520, 0
        %549 = vmatprep.subr.mxu0 0.0
        %550 = vmatpush1.msra.mxu0 %v522
        %551 = vmatprep.subr.mxu0 0.0
        %552 = vmatpush1.msra.mxu0 %v523
        %553 = vmatprep.subr.mxu0 0.0
        %554 = vmatpush1.msra.mxu0 0.0
        %555 = vmatprep.subr.mxu0 0.0
        %556 = vmatpush1.msra.mxu0 0.0
        %557 = vmatprep.subr.mxu0 0.0
        %558 = vmatpush1.msra.mxu0 0.0
        %559 = vmatprep.subr.mxu0 0.0
        %560 = vmatpush1.msra.mxu0 0.0
        %561 = vmatprep.subr.mxu0 0.0
        %562 = vmatpush1.msra.mxu0 0.0
        %563 = vmatprep.subr.mxu0 0.0
        %564 = vmatpush1.msra.mxu0 0.0
        %565 = vmatprep.subr.mxu0 0.0
        %566 = vmatpush1.msra.mxu0 0.0
        %567 = vmatprep.subr.mxu0 0.0
        %568 = vmatpush1.msra.mxu0 0.0
        %569 = vmatprep.subr.mxu0 0.0
        %570 = vmatpush1.msra.mxu0 0.0
        %571 = vmatprep.subr.mxu0 0.0
        %572 = vmatpush1.msra.mxu0 0.0
        %573 = vmatprep.subr.mxu0 0.0
        %574 = vmatpush1.msra.mxu0 0.0
        %575 = vmatprep.subr.mxu0 0.0
        %576 = vmatpush1.msra.mxu0 0.0
        %577 = vmatprep.subr.mxu0 0.0
        %578 = vmatpush1.msra.mxu0 0.0
        %579 = vmatprep.subr.mxu0 0.0
        %580 = vmatpush1.msra.mxu0 0.0
        %581 = vmatprep.subr.mxu0 0.0
        %582 = vmatpush1.msra.mxu0 0.0
        %583 = vmatprep.subr.mxu0 0.0
        %584 = vmatpush1.msra.mxu0 0.0
        %585 = vmatprep.subr.mxu0 0.0
        %586 = vmatpush1.msra.mxu0 0.0
        %587 = vmatprep.subr.mxu0 0.0
        %588 = vmatpush1.msra.mxu0 0.0
        %589 = vmatprep.subr.mxu0 0.0
        %590 = vmatpush1.msra.mxu0 0.0
        %591 = vmatprep.subr.mxu0 0.0
        %592 = vmatpush1.msra.mxu0 0.0
        %593 = vmatprep.subr.mxu0 0.0
        %594 = vmatpush1.msra.mxu0 0.0
        %595 = vmatprep.subr.mxu0 0.0
        %596 = vmatpush1.msra.mxu0 0.0
        %597 = vmatprep.subr.mxu0 0.0
        %598 = vmatpush1.msra.mxu0 0.0
        %599 = vmatprep.subr.mxu0 0.0
        %600 = vmatpush1.msra.mxu0 0.0
        %601 = vmatprep.subr.mxu0 0.0
        %602 = vmatpush1.msra.mxu0 0.0
        %603 = vmatprep.subr.mxu0 0.0
        %604 = vmatpush1.msra.mxu0 0.0
        %605 = vmatprep.subr.mxu0 0.0
        %606 = vmatpush1.msra.mxu0 0.0
        %607 = vmatprep.subr.mxu0 0.0
        %608 = vmatpush1.msra.mxu0 0.0
        %609 = vmatprep.subr.mxu0 0.0
        %610 = vmatpush1.msra.mxu0 0.0
        %611 = vmatprep.subr.mxu0 0.0
        %612 = vmatpush1.msra.mxu0 0.0
        %613 = vmatprep.mubr.f32.mxu0 0.0
        %614 = vmatmul.mubr.f32.gmra.mrb[0].mxu0 %v526
        %v615 = vpop.f32.mrb[0].mxu0
        %v616 = vadd.f32 0.0, %v615
        %v617 = vpop.f32.mrb[0].mxu0
        %618 = vmatprep.mubr.f32.mxu0 0.0
        %619 = vmatmul.mubr.f32.gmra.mrb[0].mxu0 %v529
        %v620 = vpop.f32.mrb[0].mxu0
        %v621 = vadd.f32 0.0, %v620
        %v622 = vpop.f32.mrb[0].mxu0
        %623 = vmatprep.mubr.f32.mxu0 0.0
        %624 = vmatmul.mubr.f32.gmra.mrb[0].mxu0 %v532
        %v625 = vpop.f32.mrb[0].mxu0
        %v626 = vadd.f32 0.0, %v625
        %v627 = vpop.f32.mrb[0].mxu0
        %628 = vmatprep.mubr.f32.mxu0 0.0
        %629 = vmatmul.mubr.f32.gmra.mrb[0].mxu0 %v535
        %v630 = vpop.f32.mrb[0].mxu0
        %v631 = vadd.f32 0.0, %v630
        %v632 = vpop.f32.mrb[0].mxu0
        %633 = vmatprep.mubr.f32.mxu0 0.0
        %634 = vmatmul.mubr.f32.gmra.mrb[0].mxu0 %v538
        %v635 = vpop.f32.mrb[0].mxu0
        %v636 = vadd.f32 0.0, %v635
        %v637 = vpop.f32.mrb[0].mxu0
        %638 = vmatprep.mubr.f32.mxu0 0.0
        %639 = vmatmul.mubr.f32.gmra.mrb[0].mxu0 %v541
        %v640 = vpop.f32.mrb[0].mxu0
        %v641 = vadd.f32 0.0, %v640
        %v642 = vpop.f32.mrb[0].mxu0
        %643 = vmatprep.mubr.f32.mxu0 0.0
        %644 = vmatmul.mubr.f32.gmra.mrb[0].mxu0 %v544
        %v645 = vpop.f32.mrb[0].mxu0
        %v646 = vadd.f32 0.0, %v645
        %v647 = vpop.f32.mrb[0].mxu0
        %648 = vmatprep.mubr.f32.mxu0 0.0
        %649 = vmatmul.mubr.f32.gmra.mrb[0].mxu0 %v547
        %v650 = vpop.f32.mrb[0].mxu0
        %v651 = vadd.f32 0.0, %v650
        %v652 = vpop.f32.mrb[0].mxu0
        %653 = vdwg.mxu0
        %v655 = vsel %vm524, %v502, 0
        %v658 = vsel %vm524, %v503, 0
        %v661 = vsel %vm524, %v504, 0
        %v664 = vsel %vm524, %v505, 0
        %v667 = vsel %vm524, %v506, 0
        %v670 = vsel %vm524, %v507, 0
        %v673 = vsel %vm524, %v508, 0
        %v676 = vsel %vm524, %v509, 0
        %678 = vmatprep.subr.mxu0 0.0
        %679 = vmatpush1.msra.mxu0 %v510
        %680 = vmatprep.subr.mxu0 0.0
        %681 = vmatpush1.msra.mxu0 %v511
        %682 = vmatprep.subr.mxu0 0.0
        %683 = vmatpush1.msra.mxu0 0.0
        %684 = vmatprep.subr.mxu0 0.0
        %685 = vmatpush1.msra.mxu0 0.0
        %686 = vmatprep.subr.mxu0 0.0
        %687 = vmatpush1.msra.mxu0 0.0
        %688 = vmatprep.subr.mxu0 0.0
        %689 = vmatpush1.msra.mxu0 0.0
        %690 = vmatprep.subr.mxu0 0.0
        %691 = vmatpush1.msra.mxu0 0.0
        %692 = vmatprep.subr.mxu0 0.0
        %693 = vmatpush1.msra.mxu0 0.0
        %694 = vmatprep.subr.mxu0 0.0
        %695 = vmatpush1.msra.mxu0 0.0
        %696 = vmatprep.subr.mxu0 0.0
        %697 = vmatpush1.msra.mxu0 0.0
        %698 = vmatprep.subr.mxu0 0.0
        %699 = vmatpush1.msra.mxu0 0.0
        %700 = vmatprep.subr.mxu0 0.0
        %701 = vmatpush1.msra.mxu0 0.0
        %702 = vmatprep.subr.mxu0 0.0
        %703 = vmatpush1.msra.mxu0 0.0
        %704 = vmatprep.subr.mxu0 0.0
        %705 = vmatpush1.msra.mxu0 0.0
        %706 = vmatprep.subr.mxu0 0.0
        %707 = vmatpush1.msra.mxu0 0.0
        %708 = vmatprep.subr.mxu0 0.0
        %709 = vmatpush1.msra.mxu0 0.0
        %710 = vmatprep.subr.mxu0 0.0
        %711 = vmatpush1.msra.mxu0 0.0
        %712 = vmatprep.subr.mxu0 0.0
        %713 = vmatpush1.msra.mxu0 0.0
        %714 = vmatprep.subr.mxu0 0.0
        %715 = vmatpush1.msra.mxu0 0.0
        %716 = vmatprep.subr.mxu0 0.0
        %717 = vmatpush1.msra.mxu0 0.0
        %718 = vmatprep.subr.mxu0 0.0
        %719 = vmatpush1.msra.mxu0 0.0
        %720 = vmatprep.subr.mxu0 0.0
        %721 = vmatpush1.msra.mxu0 0.0
        %722 = vmatprep.subr.mxu0 0.0
        %723 = vmatpush1.msra.mxu0 0.0
        %724 = vmatprep.subr.mxu0 0.0
        %725 = vmatpush1.msra.mxu0 0.0
        %726 = vmatprep.subr.mxu0 0.0
        %727 = vmatpush1.msra.mxu0 0.0
        %728 = vmatprep.subr.mxu0 0.0
        %729 = vmatpush1.msra.mxu0 0.0
        %730 = vmatprep.subr.mxu0 0.0
        %731 = vmatpush1.msra.mxu0 0.0
        %732 = vmatprep.subr.mxu0 0.0
        %733 = vmatpush1.msra.mxu0 0.0
        %734 = vmatprep.subr.mxu0 0.0
        %735 = vmatpush1.msra.mxu0 0.0
        %736 = vmatprep.subr.mxu0 0.0
        %737 = vmatpush1.msra.mxu0 0.0
        %738 = vmatprep.subr.mxu0 0.0
        %739 = vmatpush1.msra.mxu0 0.0
        %740 = vmatprep.subr.mxu0 0.0
        %741 = vmatpush1.msra.mxu0 0.0
        %742 = vmatprep.mubr.f32.mxu0 0.0
        %743 = vmatmul.mubr.f32.gmra.mrb[0].mxu0 %v655
        %v744 = vpop.f32.mrb[0].mxu0
        %v745 = vadd.f32 %v616, %v744
        %v746 = vpop.f32.mrb[0].mxu0
        %747 = vmatprep.mubr.f32.mxu0 0.0
        %748 = vmatmul.mubr.f32.gmra.mrb[0].mxu0 %v658
        %v749 = vpop.f32.mrb[0].mxu0
        %v750 = vadd.f32 %v621, %v749
        %v751 = vpop.f32.mrb[0].mxu0
        %752 = vmatprep.mubr.f32.mxu0 0.0
        %753 = vmatmul.mubr.f32.gmra.mrb[0].mxu0 %v661
        %v754 = vpop.f32.mrb[0].mxu0
        %v755 = vadd.f32 %v626, %v754
        %v756 = vpop.f32.mrb[0].mxu0
        %757 = vmatprep.mubr.f32.mxu0 0.0
        %758 = vmatmul.mubr.f32.gmra.mrb[0].mxu0 %v664
        %v759 = vpop.f32.mrb[0].mxu0
        %v760 = vadd.f32 %v631, %v759
        %v761 = vpop.f32.mrb[0].mxu0
        %762 = vmatprep.mubr.f32.mxu0 0.0
        %763 = vmatmul.mubr.f32.gmra.mrb[0].mxu0 %v667
        %v764 = vpop.f32.mrb[0].mxu0
        %v765 = vadd.f32 %v636, %v764
        %v766 = vpop.f32.mrb[0].mxu0
        %767 = vmatprep.mubr.f32.mxu0 0.0
        %768 = vmatmul.mubr.f32.gmra.mrb[0].mxu0 %v670
        %v769 = vpop.f32.mrb[0].mxu0
        %v770 = vadd.f32 %v641, %v769
        %v771 = vpop.f32.mrb[0].mxu0
        %772 = vmatprep.mubr.f32.mxu0 0.0
        %773 = vmatmul.mubr.f32.gmra.mrb[0].mxu0 %v673
        %v774 = vpop.f32.mrb[0].mxu0
        %v775 = vadd.f32 %v646, %v774
        %v776 = vpop.f32.mrb[0].mxu0
        %777 = vmatprep.mubr.f32.mxu0 0.0
        %778 = vmatmul.mubr.f32.gmra.mrb[0].mxu0 %v676
        %v779 = vpop.f32.mrb[0].mxu0
        %v780 = vadd.f32 %v651, %v779
        %v781 = vpop.f32.mrb[0].mxu0
        %782 = vdwg.mxu0
        %v783 = vld [vmem:[%s467 + $0x1] sm:$0xff]
        %v784 = vld [vmem:[%s467 + $0x11] sm:$0xff]
        %v785 = vld [vmem:[%s467 + $0x21] sm:$0xff]
        %v786 = vld [vmem:[%s467 + $0x31] sm:$0xff]
        %v787 = vld [vmem:[%s467 + $0x41] sm:$0xff]
        %v788 = vld [vmem:[%s467 + $0x51] sm:$0xff]
        %v789 = vld [vmem:[%s467 + $0x61] sm:$0xff]
        %v790 = vld [vmem:[%s467 + $0x71] sm:$0xff]
        %s791 = scalar_lea.vmem %s1, 32
        %v792 = vld [vmem:[%s791] sm:$0xff]
        %v793 = vld [vmem:[%s791 + $0x8] sm:$0xff]
        %v795 = vsel %vm524, %v783, 0
        %v798 = vsel %vm524, %v784, 0
        %v801 = vsel %vm524, %v785, 0
        %v804 = vsel %vm524, %v786, 0
        %v807 = vsel %vm524, %v787, 0
        %v810 = vsel %vm524, %v788, 0
        %v813 = vsel %vm524, %v789, 0
        %v816 = vsel %vm524, %v790, 0
        %818 = vmatprep.subr.mxu0 0.0
        %819 = vmatpush1.msra.mxu0 %v792
        %820 = vmatprep.subr.mxu0 0.0
        %821 = vmatpush1.msra.mxu0 %v793
        %822 = vmatprep.subr.mxu0 0.0
        %823 = vmatpush1.msra.mxu0 0.0
        %824 = vmatprep.subr.mxu0 0.0
        %825 = vmatpush1.msra.mxu0 0.0
        %826 = vmatprep.subr.mxu0 0.0
        %827 = vmatpush1.msra.mxu0 0.0
        %828 = vmatprep.subr.mxu0 0.0
        %829 = vmatpush1.msra.mxu0 0.0
        %830 = vmatprep.subr.mxu0 0.0
        %831 = vmatpush1.msra.mxu0 0.0
        %832 = vmatprep.subr.mxu0 0.0
        %833 = vmatpush1.msra.mxu0 0.0
        %834 = vmatprep.subr.mxu0 0.0
        %835 = vmatpush1.msra.mxu0 0.0
        %836 = vmatprep.subr.mxu0 0.0
        %837 = vmatpush1.msra.mxu0 0.0
        %838 = vmatprep.subr.mxu0 0.0
        %839 = vmatpush1.msra.mxu0 0.0
        %840 = vmatprep.subr.mxu0 0.0
        %841 = vmatpush1.msra.mxu0 0.0
        %842 = vmatprep.subr.mxu0 0.0
        %843 = vmatpush1.msra.mxu0 0.0
        %844 = vmatprep.subr.mxu0 0.0
        %845 = vmatpush1.msra.mxu0 0.0
        %846 = vmatprep.subr.mxu0 0.0
        %847 = vmatpush1.msra.mxu0 0.0
        %848 = vmatprep.subr.mxu0 0.0
        %849 = vmatpush1.msra.mxu0 0.0
        %850 = vmatprep.subr.mxu0 0.0
        %851 = vmatpush1.msra.mxu0 0.0
        %852 = vmatprep.subr.mxu0 0.0
        %853 = vmatpush1.msra.mxu0 0.0
        %854 = vmatprep.subr.mxu0 0.0
        %855 = vmatpush1.msra.mxu0 0.0
        %856 = vmatprep.subr.mxu0 0.0
        %857 = vmatpush1.msra.mxu0 0.0
        %858 = vmatprep.subr.mxu0 0.0
        %859 = vmatpush1.msra.mxu0 0.0
        %860 = vmatprep.subr.mxu0 0.0
        %861 = vmatpush1.msra.mxu0 0.0
        %862 = vmatprep.subr.mxu0 0.0
        %863 = vmatpush1.msra.mxu0 0.0
        %864 = vmatprep.subr.mxu0 0.0
        %865 = vmatpush1.msra.mxu0 0.0
        %866 = vmatprep.subr.mxu0 0.0
        %867 = vmatpush1.msra.mxu0 0.0
        %868 = vmatprep.subr.mxu0 0.0
        %869 = vmatpush1.msra.mxu0 0.0
        %870 = vmatprep.subr.mxu0 0.0
        %871 = vmatpush1.msra.mxu0 0.0
        %872 = vmatprep.subr.mxu0 0.0
        %873 = vmatpush1.msra.mxu0 0.0
        %874 = vmatprep.subr.mxu0 0.0
        %875 = vmatpush1.msra.mxu0 0.0
        %876 = vmatprep.subr.mxu0 0.0
        %877 = vmatpush1.msra.mxu0 0.0
        %878 = vmatprep.subr.mxu0 0.0
        %879 = vmatpush1.msra.mxu0 0.0
        %880 = vmatprep.subr.mxu0 0.0
        %881 = vmatpush1.msra.mxu0 0.0
        %882 = vmatprep.mubr.f32.mxu0 0.0
        %883 = vmatmul.mubr.f32.gmra.mrb[0].mxu0 %v795
        %v884 = vpop.f32.mrb[0].mxu0
        %v885 = vadd.f32 0.0, %v884
        %v886 = vpop.f32.mrb[0].mxu0
        %887 = vmatprep.mubr.f32.mxu0 0.0
        %888 = vmatmul.mubr.f32.gmra.mrb[0].mxu0 %v798
        %v889 = vpop.f32.mrb[0].mxu0
        %v890 = vadd.f32 0.0, %v889
        %v891 = vpop.f32.mrb[0].mxu0
        %892 = vmatprep.mubr.f32.mxu0 0.0
        %893 = vmatmul.mubr.f32.gmra.mrb[0].mxu0 %v801
        %v894 = vpop.f32.mrb[0].mxu0
        %v895 = vadd.f32 0.0, %v894
        %v896 = vpop.f32.mrb[0].mxu0
        %897 = vmatprep.mubr.f32.mxu0 0.0
        %898 = vmatmul.mubr.f32.gmra.mrb[0].mxu0 %v804
        %v899 = vpop.f32.mrb[0].mxu0
        %v900 = vadd.f32 0.0, %v899
        %v901 = vpop.f32.mrb[0].mxu0
        %902 = vmatprep.mubr.f32.mxu0 0.0
        %903 = vmatmul.mubr.f32.gmra.mrb[0].mxu0 %v807
        %v904 = vpop.f32.mrb[0].mxu0
        %v905 = vadd.f32 0.0, %v904
        %v906 = vpop.f32.mrb[0].mxu0
        %907 = vmatprep.mubr.f32.mxu0 0.0
        %908 = vmatmul.mubr.f32.gmra.mrb[0].mxu0 %v810
        %v909 = vpop.f32.mrb[0].mxu0
        %v910 = vadd.f32 0.0, %v909
        %v911 = vpop.f32.mrb[0].mxu0
        %912 = vmatprep.mubr.f32.mxu0 0.0
        %913 = vmatmul.mubr.f32.gmra.mrb[0].mxu0 %v813
        %v914 = vpop.f32.mrb[0].mxu0
        %v915 = vadd.f32 0.0, %v914
        %v916 = vpop.f32.mrb[0].mxu0
        %917 = vmatprep.mubr.f32.mxu0 0.0
        %918 = vmatmul.mubr.f32.gmra.mrb[0].mxu0 %v816
        %v919 = vpop.f32.mrb[0].mxu0
        %v920 = vadd.f32 0.0, %v919
        %v921 = vpop.f32.mrb[0].mxu0
        %922 = vdwg.mxu0
        %v923 = vadd.f32 %v745, %v885
        %v924 = vadd.f32 %v750, %v890
        %v925 = vadd.f32 %v755, %v895
        %v926 = vadd.f32 %v760, %v900
        %v927 = vadd.f32 %v765, %v905
        %v928 = vadd.f32 %v770, %v910
        %v929 = vadd.f32 %v775, %v915
        %v930 = vadd.f32 %v780, %v920
        %s931 = scalar_lea.vmem %s467, 288 [#allocation2]
        %v932 = vld [vmem:[%s931] sm:$0xff]
        %v933 = vld [vmem:[%s931 + $0x10] sm:$0xff]
        %v934 = vld [vmem:[%s931 + $0x20] sm:$0xff]
        %v935 = vld [vmem:[%s931 + $0x30] sm:$0xff]
        %v936 = vld [vmem:[%s931 + $0x40] sm:$0xff]
        %v937 = vld [vmem:[%s931 + $0x50] sm:$0xff]
        %v938 = vld [vmem:[%s931 + $0x60] sm:$0xff]
        %v939 = vld [vmem:[%s931 + $0x70] sm:$0xff]
        %s940 = scalar_lea.vmem %s1, 48
        %v941 = vld [vmem:[%s940] sm:$0xff]
        %v942 = vld [vmem:[%s940 + $0x8] sm:$0xff]
        %v944 = vsel %vm524, %v932, 0
        %v947 = vsel %vm524, %v933, 0
        %v950 = vsel %vm524, %v934, 0
        %v953 = vsel %vm524, %v935, 0
        %v956 = vsel %vm524, %v936, 0
        %v959 = vsel %vm524, %v937, 0
        %v962 = vsel %vm524, %v938, 0
        %v965 = vsel %vm524, %v939, 0
        %967 = vmatprep.subr.mxu0 0.0
        %968 = vmatpush1.msra.mxu0 %v941
        %969 = vmatprep.subr.mxu0 0.0
        %970 = vmatpush1.msra.mxu0 %v942
        %971 = vmatprep.subr.mxu0 0.0
        %972 = vmatpush1.msra.mxu0 0.0
        %973 = vmatprep.subr.mxu0 0.0
        %974 = vmatpush1.msra.mxu0 0.0
        %975 = vmatprep.subr.mxu0 0.0
        %976 = vmatpush1.msra.mxu0 0.0
        %977 = vmatprep.subr.mxu0 0.0
        %978 = vmatpush1.msra.mxu0 0.0
        %979 = vmatprep.subr.mxu0 0.0
        %980 = vmatpush1.msra.mxu0 0.0
        %981 = vmatprep.subr.mxu0 0.0
        %982 = vmatpush1.msra.mxu0 0.0
        %983 = vmatprep.subr.mxu0 0.0
        %984 = vmatpush1.msra.mxu0 0.0
        %985 = vmatprep.subr.mxu0 0.0
        %986 = vmatpush1.msra.mxu0 0.0
        %987 = vmatprep.subr.mxu0 0.0
        %988 = vmatpush1.msra.mxu0 0.0
        %989 = vmatprep.subr.mxu0 0.0
        %990 = vmatpush1.msra.mxu0 0.0
        %991 = vmatprep.subr.mxu0 0.0
        %992 = vmatpush1.msra.mxu0 0.0
        %993 = vmatprep.subr.mxu0 0.0
        %994 = vmatpush1.msra.mxu0 0.0
        %995 = vmatprep.subr.mxu0 0.0
        %996 = vmatpush1.msra.mxu0 0.0
        %997 = vmatprep.subr.mxu0 0.0
        %998 = vmatpush1.msra.mxu0 0.0
        %999 = vmatprep.subr.mxu0 0.0
        %1000 = vmatpush1.msra.mxu0 0.0
        %1001 = vmatprep.subr.mxu0 0.0
        %1002 = vmatpush1.msra.mxu0 0.0
        %1003 = vmatprep.subr.mxu0 0.0
        %1004 = vmatpush1.msra.mxu0 0.0
        %1005 = vmatprep.subr.mxu0 0.0
        %1006 = vmatpush1.msra.mxu0 0.0
        %1007 = vmatprep.subr.mxu0 0.0
        %1008 = vmatpush1.msra.mxu0 0.0
        %1009 = vmatprep.subr.mxu0 0.0
        %1010 = vmatpush1.msra.mxu0 0.0
        %1011 = vmatprep.subr.mxu0 0.0
        %1012 = vmatpush1.msra.mxu0 0.0
        %1013 = vmatprep.subr.mxu0 0.0
        %1014 = vmatpush1.msra.mxu0 0.0
        %1015 = vmatprep.subr.mxu0 0.0
        %1016 = vmatpush1.msra.mxu0 0.0
        %1017 = vmatprep.subr.mxu0 0.0
        %1018 = vmatpush1.msra.mxu0 0.0
        %1019 = vmatprep.subr.mxu0 0.0
        %1020 = vmatpush1.msra.mxu0 0.0
        %1021 = vmatprep.subr.mxu0 0.0
        %1022 = vmatpush1.msra.mxu0 0.0
        %1023 = vmatprep.subr.mxu0 0.0
        %1024 = vmatpush1.msra.mxu0 0.0
        %1025 = vmatprep.subr.mxu0 0.0
        %1026 = vmatpush1.msra.mxu0 0.0
        %1027 = vmatprep.subr.mxu0 0.0
        %1028 = vmatpush1.msra.mxu0 0.0
        %1029 = vmatprep.subr.mxu0 0.0
        %1030 = vmatpush1.msra.mxu0 0.0
        %1031 = vmatprep.mubr.f32.mxu0 0.0
        %1032 = vmatmul.mubr.f32.gmra.mrb[0].mxu0 %v944
        %v1033 = vpop.f32.mrb[0].mxu0
        %v1034 = vadd.f32 0.0, %v1033
        %v1035 = vpop.f32.mrb[0].mxu0
        %1036 = vmatprep.mubr.f32.mxu0 0.0
        %1037 = vmatmul.mubr.f32.gmra.mrb[0].mxu0 %v947
        %v1038 = vpop.f32.mrb[0].mxu0
        %v1039 = vadd.f32 0.0, %v1038
        %v1040 = vpop.f32.mrb[0].mxu0
        %1041 = vmatprep.mubr.f32.mxu0 0.0
        %1042 = vmatmul.mubr.f32.gmra.mrb[0].mxu0 %v950
        %v1043 = vpop.f32.mrb[0].mxu0
        %v1044 = vadd.f32 0.0, %v1043
        %v1045 = vpop.f32.mrb[0].mxu0
        %1046 = vmatprep.mubr.f32.mxu0 0.0
        %1047 = vmatmul.mubr.f32.gmra.mrb[0].mxu0 %v953
        %v1048 = vpop.f32.mrb[0].mxu0
        %v1049 = vadd.f32 0.0, %v1048
        %v1050 = vpop.f32.mrb[0].mxu0
        %1051 = vmatprep.mubr.f32.mxu0 0.0
        %1052 = vmatmul.mubr.f32.gmra.mrb[0].mxu0 %v956
        %v1053 = vpop.f32.mrb[0].mxu0
        %v1054 = vadd.f32 0.0, %v1053
        %v1055 = vpop.f32.mrb[0].mxu0
        %1056 = vmatprep.mubr.f32.mxu0 0.0
        %1057 = vmatmul.mubr.f32.gmra.mrb[0].mxu0 %v959
        %v1058 = vpop.f32.mrb[0].mxu0
        %v1059 = vadd.f32 0.0, %v1058
        %v1060 = vpop.f32.mrb[0].mxu0
        %1061 = vmatprep.mubr.f32.mxu0 0.0
        %1062 = vmatmul.mubr.f32.gmra.mrb[0].mxu0 %v962
        %v1063 = vpop.f32.mrb[0].mxu0
        %v1064 = vadd.f32 0.0, %v1063
        %v1065 = vpop.f32.mrb[0].mxu0
        %1066 = vmatprep.mubr.f32.mxu0 0.0
        %1067 = vmatmul.mubr.f32.gmra.mrb[0].mxu0 %v965
        %v1068 = vpop.f32.mrb[0].mxu0
        %v1069 = vadd.f32 0.0, %v1068
        %v1070 = vpop.f32.mrb[0].mxu0
        %1071 = vdwg.mxu0
        %v1072 = vadd.f32 %v923, %v1034
        %v1073 = vadd.f32 %v924, %v1039
        %v1074 = vadd.f32 %v925, %v1044
        %v1075 = vadd.f32 %v926, %v1049
        %v1076 = vadd.f32 %v927, %v1054
        %v1077 = vadd.f32 %v928, %v1059
        %v1078 = vadd.f32 %v929, %v1064
        %v1079 = vadd.f32 %v930, %v1069
        %s1080 = scalar_lea.vmem %s467, 432 [#allocation2]
        %v1081 = vld [vmem:[%s1080] sm:$0xff]
        %v1082 = vld [vmem:[%s1080 + $0x10] sm:$0xff]
        %v1083 = vld [vmem:[%s1080 + $0x20] sm:$0xff]
        %v1084 = vld [vmem:[%s1080 + $0x30] sm:$0xff]
        %v1085 = vld [vmem:[%s1080 + $0x40] sm:$0xff]
        %v1086 = vld [vmem:[%s1080 + $0x50] sm:$0xff]
        %v1087 = vld [vmem:[%s1080 + $0x60] sm:$0xff]
        %v1088 = vld [vmem:[%s1080 + $0x70] sm:$0xff]
        %s1089 = scalar_lea.vmem %s1, 64
        %v1090 = vld [vmem:[%s1089] sm:$0xff]
        %v1091 = vld [vmem:[%s1089 + $0x8] sm:$0xff]
        %v1093 = vsel %vm524, %v1081, 0
        %v1096 = vsel %vm524, %v1082, 0
        %v1099 = vsel %vm524, %v1083, 0
        %v1102 = vsel %vm524, %v1084, 0
        %v1105 = vsel %vm524, %v1085, 0
        %v1108 = vsel %vm524, %v1086, 0
        %v1111 = vsel %vm524, %v1087, 0
        %v1114 = vsel %vm524, %v1088, 0
        %1116 = vmatprep.subr.mxu0 0.0
        %1117 = vmatpush1.msra.mxu0 %v1090
        %1118 = vmatprep.subr.mxu0 0.0
        %1119 = vmatpush1.msra.mxu0 %v1091
        %1120 = vmatprep.subr.mxu0 0.0
        %1121 = vmatpush1.msra.mxu0 0.0
        %1122 = vmatprep.subr.mxu0 0.0
        %1123 = vmatpush1.msra.mxu0 0.0
        %1124 = vmatprep.subr.mxu0 0.0
        %1125 = vmatpush1.msra.mxu0 0.0
        %1126 = vmatprep.subr.mxu0 0.0
        %1127 = vmatpush1.msra.mxu0 0.0
        %1128 = vmatprep.subr.mxu0 0.0
        %1129 = vmatpush1.msra.mxu0 0.0
        %1130 = vmatprep.subr.mxu0 0.0
        %1131 = vmatpush1.msra.mxu0 0.0
        %1132 = vmatprep.subr.mxu0 0.0
        %1133 = vmatpush1.msra.mxu0 0.0
        %1134 = vmatprep.subr.mxu0 0.0
        %1135 = vmatpush1.msra.mxu0 0.0
        %1136 = vmatprep.subr.mxu0 0.0
        %1137 = vmatpush1.msra.mxu0 0.0
        %1138 = vmatprep.subr.mxu0 0.0
        %1139 = vmatpush1.msra.mxu0 0.0
        %1140 = vmatprep.subr.mxu0 0.0
        %1141 = vmatpush1.msra.mxu0 0.0
        %1142 = vmatprep.subr.mxu0 0.0
        %1143 = vmatpush1.msra.mxu0 0.0
        %1144 = vmatprep.subr.mxu0 0.0
        %1145 = vmatpush1.msra.mxu0 0.0
        %1146 = vmatprep.subr.mxu0 0.0
        %1147 = vmatpush1.msra.mxu0 0.0
        %1148 = vmatprep.subr.mxu0 0.0
        %1149 = vmatpush1.msra.mxu0 0.0
        %1150 = vmatprep.subr.mxu0 0.0
        %1151 = vmatpush1.msra.mxu0 0.0
        %1152 = vmatprep.subr.mxu0 0.0
        %1153 = vmatpush1.msra.mxu0 0.0
        %1154 = vmatprep.subr.mxu0 0.0
        %1155 = vmatpush1.msra.mxu0 0.0
        %1156 = vmatprep.subr.mxu0 0.0
        %1157 = vmatpush1.msra.mxu0 0.0
        %1158 = vmatprep.subr.mxu0 0.0
        %1159 = vmatpush1.msra.mxu0 0.0
        %1160 = vmatprep.subr.mxu0 0.0
        %1161 = vmatpush1.msra.mxu0 0.0
        %1162 = vmatprep.subr.mxu0 0.0
        %1163 = vmatpush1.msra.mxu0 0.0
        %1164 = vmatprep.subr.mxu0 0.0
        %1165 = vmatpush1.msra.mxu0 0.0
        %1166 = vmatprep.subr.mxu0 0.0
        %1167 = vmatpush1.msra.mxu0 0.0
        %1168 = vmatprep.subr.mxu0 0.0
        %1169 = vmatpush1.msra.mxu0 0.0
        %1170 = vmatprep.subr.mxu0 0.0
        %1171 = vmatpush1.msra.mxu0 0.0
        %1172 = vmatprep.subr.mxu0 0.0
        %1173 = vmatpush1.msra.mxu0 0.0
        %1174 = vmatprep.subr.mxu0 0.0
        %1175 = vmatpush1.msra.mxu0 0.0
        %1176 = vmatprep.subr.mxu0 0.0
        %1177 = vmatpush1.msra.mxu0 0.0
        %1178 = vmatprep.subr.mxu0 0.0
        %1179 = vmatpush1.msra.mxu0 0.0
        %1180 = vmatprep.mubr.f32.mxu0 0.0
        %1181 = vmatmul.mubr.f32.gmra.mrb[0].mxu0 %v1093
        %v1182 = vpop.f32.mrb[0].mxu0
        %v1183 = vadd.f32 0.0, %v1182
        %v1184 = vpop.f32.mrb[0].mxu0
        %1185 = vmatprep.mubr.f32.mxu0 0.0
        %1186 = vmatmul.mubr.f32.gmra.mrb[0].mxu0 %v1096
        %v1187 = vpop.f32.mrb[0].mxu0
        %v1188 = vadd.f32 0.0, %v1187
        %v1189 = vpop.f32.mrb[0].mxu0
        %1190 = vmatprep.mubr.f32.mxu0 0.0
        %1191 = vmatmul.mubr.f32.gmra.mrb[0].mxu0 %v1099
        %v1192 = vpop.f32.mrb[0].mxu0
        %v1193 = vadd.f32 0.0, %v1192
        %v1194 = vpop.f32.mrb[0].mxu0
        %1195 = vmatprep.mubr.f32.mxu0 0.0
        %1196 = vmatmul.mubr.f32.gmra.mrb[0].mxu0 %v1102
        %v1197 = vpop.f32.mrb[0].mxu0
        %v1198 = vadd.f32 0.0, %v1197
        %v1199 = vpop.f32.mrb[0].mxu0
        %1200 = vmatprep.mubr.f32.mxu0 0.0
        %1201 = vmatmul.mubr.f32.gmra.mrb[0].mxu0 %v1105
        %v1202 = vpop.f32.mrb[0].mxu0
        %v1203 = vadd.f32 0.0, %v1202
        %v1204 = vpop.f32.mrb[0].mxu0
        %1205 = vmatprep.mubr.f32.mxu0 0.0
        %1206 = vmatmul.mubr.f32.gmra.mrb[0].mxu0 %v1108
        %v1207 = vpop.f32.mrb[0].mxu0
        %v1208 = vadd.f32 0.0, %v1207
        %v1209 = vpop.f32.mrb[0].mxu0
        %1210 = vmatprep.mubr.f32.mxu0 0.0
        %1211 = vmatmul.mubr.f32.gmra.mrb[0].mxu0 %v1111
        %v1212 = vpop.f32.mrb[0].mxu0
        %v1213 = vadd.f32 0.0, %v1212
        %v1214 = vpop.f32.mrb[0].mxu0
        %1215 = vmatprep.mubr.f32.mxu0 0.0
        %1216 = vmatmul.mubr.f32.gmra.mrb[0].mxu0 %v1114
        %v1217 = vpop.f32.mrb[0].mxu0
        %v1218 = vadd.f32 0.0, %v1217
        %v1219 = vpop.f32.mrb[0].mxu0
        %1220 = vdwg.mxu0
        %v1221 = vadd.f32 %v1072, %v1183
        %v1222 = vadd.f32 %v1073, %v1188
        %v1223 = vadd.f32 %v1074, %v1193
        %v1224 = vadd.f32 %v1075, %v1198
        %v1225 = vadd.f32 %v1076, %v1203
        %v1226 = vadd.f32 %v1077, %v1208
        %v1227 = vadd.f32 %v1078, %v1213
        %v1228 = vadd.f32 %v1079, %v1218
        %v1229 = vld [vmem:[%s931 + $0x1] sm:$0xff]
        %v1230 = vld [vmem:[%s931 + $0x11] sm:$0xff]
        %v1231 = vld [vmem:[%s931 + $0x21] sm:$0xff]
        %v1232 = vld [vmem:[%s931 + $0x31] sm:$0xff]
        %v1233 = vld [vmem:[%s931 + $0x41] sm:$0xff]
        %v1234 = vld [vmem:[%s931 + $0x51] sm:$0xff]
        %v1235 = vld [vmem:[%s931 + $0x61] sm:$0xff]
        %v1236 = vld [vmem:[%s931 + $0x71] sm:$0xff]
        %s1237 = scalar_lea.vmem %s1, 80
        %v1238 = vld [vmem:[%s1237] sm:$0xff]
        %v1239 = vld [vmem:[%s1237 + $0x8] sm:$0xff]
        %v1241 = vsel %vm524, %v1229, 0
        %v1244 = vsel %vm524, %v1230, 0
        %v1247 = vsel %vm524, %v1231, 0
        %v1250 = vsel %vm524, %v1232, 0
        %v1253 = vsel %vm524, %v1233, 0
        %v1256 = vsel %vm524, %v1234, 0
        %v1259 = vsel %vm524, %v1235, 0
        %v1262 = vsel %vm524, %v1236, 0
        %1264 = vmatprep.subr.mxu0 0.0
        %1265 = vmatpush1.msra.mxu0 %v1238
        %1266 = vmatprep.subr.mxu0 0.0
        %1267 = vmatpush1.msra.mxu0 %v1239
        %1268 = vmatprep.subr.mxu0 0.0
        %1269 = vmatpush1.msra.mxu0 0.0
        %1270 = vmatprep.subr.mxu0 0.0
        %1271 = vmatpush1.msra.mxu0 0.0
        %1272 = vmatprep.subr.mxu0 0.0
        %1273 = vmatpush1.msra.mxu0 0.0
        %1274 = vmatprep.subr.mxu0 0.0
        %1275 = vmatpush1.msra.mxu0 0.0
        %1276 = vmatprep.subr.mxu0 0.0
        %1277 = vmatpush1.msra.mxu0 0.0
        %1278 = vmatprep.subr.mxu0 0.0
        %1279 = vmatpush1.msra.mxu0 0.0
        %1280 = vmatprep.subr.mxu0 0.0
        %1281 = vmatpush1.msra.mxu0 0.0
        %1282 = vmatprep.subr.mxu0 0.0
        %1283 = vmatpush1.msra.mxu0 0.0
        %1284 = vmatprep.subr.mxu0 0.0
        %1285 = vmatpush1.msra.mxu0 0.0
        %1286 = vmatprep.subr.mxu0 0.0
        %1287 = vmatpush1.msra.mxu0 0.0
        %1288 = vmatprep.subr.mxu0 0.0
        %1289 = vmatpush1.msra.mxu0 0.0
        %1290 = vmatprep.subr.mxu0 0.0
        %1291 = vmatpush1.msra.mxu0 0.0
        %1292 = vmatprep.subr.mxu0 0.0
        %1293 = vmatpush1.msra.mxu0 0.0
        %1294 = vmatprep.subr.mxu0 0.0
        %1295 = vmatpush1.msra.mxu0 0.0
        %1296 = vmatprep.subr.mxu0 0.0
        %1297 = vmatpush1.msra.mxu0 0.0
        %1298 = vmatprep.subr.mxu0 0.0
        %1299 = vmatpush1.msra.mxu0 0.0
        %1300 = vmatprep.subr.mxu0 0.0
        %1301 = vmatpush1.msra.mxu0 0.0
        %1302 = vmatprep.subr.mxu0 0.0
        %1303 = vmatpush1.msra.mxu0 0.0
        %1304 = vmatprep.subr.mxu0 0.0
        %1305 = vmatpush1.msra.mxu0 0.0
        %1306 = vmatprep.subr.mxu0 0.0
        %1307 = vmatpush1.msra.mxu0 0.0
        %1308 = vmatprep.subr.mxu0 0.0
        %1309 = vmatpush1.msra.mxu0 0.0
        %1310 = vmatprep.subr.mxu0 0.0
        %1311 = vmatpush1.msra.mxu0 0.0
        %1312 = vmatprep.subr.mxu0 0.0
        %1313 = vmatpush1.msra.mxu0 0.0
        %1314 = vmatprep.subr.mxu0 0.0
        %1315 = vmatpush1.msra.mxu0 0.0
        %1316 = vmatprep.subr.mxu0 0.0
        %1317 = vmatpush1.msra.mxu0 0.0
        %1318 = vmatprep.subr.mxu0 0.0
        %1319 = vmatpush1.msra.mxu0 0.0
        %1320 = vmatprep.subr.mxu0 0.0
        %1321 = vmatpush1.msra.mxu0 0.0
        %1322 = vmatprep.subr.mxu0 0.0
        %1323 = vmatpush1.msra.mxu0 0.0
        %1324 = vmatprep.subr.mxu0 0.0
        %1325 = vmatpush1.msra.mxu0 0.0
        %1326 = vmatprep.subr.mxu0 0.0
        %1327 = vmatpush1.msra.mxu0 0.0
        %1328 = vmatprep.mubr.f32.mxu0 0.0
        %1329 = vmatmul.mubr.f32.gmra.mrb[0].mxu0 %v1241
        %v1330 = vpop.f32.mrb[0].mxu0
        %v1331 = vadd.f32 0.0, %v1330
        %v1332 = vpop.f32.mrb[0].mxu0
        %1333 = vmatprep.mubr.f32.mxu0 0.0
        %1334 = vmatmul.mubr.f32.gmra.mrb[0].mxu0 %v1244
        %v1335 = vpop.f32.mrb[0].mxu0
        %v1336 = vadd.f32 0.0, %v1335
        %v1337 = vpop.f32.mrb[0].mxu0
        %1338 = vmatprep.mubr.f32.mxu0 0.0
        %1339 = vmatmul.mubr.f32.gmra.mrb[0].mxu0 %v1247
        %v1340 = vpop.f32.mrb[0].mxu0
        %v1341 = vadd.f32 0.0, %v1340
        %v1342 = vpop.f32.mrb[0].mxu0
        %1343 = vmatprep.mubr.f32.mxu0 0.0
        %1344 = vmatmul.mubr.f32.gmra.mrb[0].mxu0 %v1250
        %v1345 = vpop.f32.mrb[0].mxu0
        %v1346 = vadd.f32 0.0, %v1345
        %v1347 = vpop.f32.mrb[0].mxu0
        %1348 = vmatprep.mubr.f32.mxu0 0.0
        %1349 = vmatmul.mubr.f32.gmra.mrb[0].mxu0 %v1253
        %v1350 = vpop.f32.mrb[0].mxu0
        %v1351 = vadd.f32 0.0, %v1350
        %v1352 = vpop.f32.mrb[0].mxu0
        %1353 = vmatprep.mubr.f32.mxu0 0.0
        %1354 = vmatmul.mubr.f32.gmra.mrb[0].mxu0 %v1256
        %v1355 = vpop.f32.mrb[0].mxu0
        %v1356 = vadd.f32 0.0, %v1355
        %v1357 = vpop.f32.mrb[0].mxu0
        %1358 = vmatprep.mubr.f32.mxu0 0.0
        %1359 = vmatmul.mubr.f32.gmra.mrb[0].mxu0 %v1259
        %v1360 = vpop.f32.mrb[0].mxu0
        %v1361 = vadd.f32 0.0, %v1360
        %v1362 = vpop.f32.mrb[0].mxu0
        %1363 = vmatprep.mubr.f32.mxu0 0.0
        %1364 = vmatmul.mubr.f32.gmra.mrb[0].mxu0 %v1262
        %v1365 = vpop.f32.mrb[0].mxu0
        %v1366 = vadd.f32 0.0, %v1365
        %v1367 = vpop.f32.mrb[0].mxu0
        %1368 = vdwg.mxu0
        %v1369 = vadd.f32 %v1221, %v1331
        %v1370 = vadd.f32 %v1222, %v1336
        %v1371 = vadd.f32 %v1223, %v1341
        %v1372 = vadd.f32 %v1224, %v1346
        %v1373 = vadd.f32 %v1225, %v1351
        %v1374 = vadd.f32 %v1226, %v1356
        %v1375 = vadd.f32 %v1227, %v1361
        %v1376 = vadd.f32 %v1228, %v1366
        %s1377 = scalar_lea.vmem %s467, 16 [#allocation2]
        %v1378 = vld [vmem:[%s1377] sm:$0xff]
        %v1379 = vld [vmem:[%s1377 + $0x10] sm:$0xff]
        %v1380 = vld [vmem:[%s1377 + $0x20] sm:$0xff]
        %v1381 = vld [vmem:[%s1377 + $0x30] sm:$0xff]
        %v1382 = vld [vmem:[%s1377 + $0x40] sm:$0xff]
        %v1383 = vld [vmem:[%s1377 + $0x50] sm:$0xff]
        %v1384 = vld [vmem:[%s1377 + $0x60] sm:$0xff]
        %v1385 = vld [vmem:[%s1377 + $0x70] sm:$0xff]
        %s1386 = scalar_lea.vmem %s1, 96
        %v1387 = vld [vmem:[%s1386] sm:$0xff]
        %v1388 = vld [vmem:[%s1386 + $0x8] sm:$0xff]
        %v1390 = vsel %vm524, %v1378, 0
        %v1393 = vsel %vm524, %v1379, 0
        %v1396 = vsel %vm524, %v1380, 0
        %v1399 = vsel %vm524, %v1381, 0
        %v1402 = vsel %vm524, %v1382, 0
        %v1405 = vsel %vm524, %v1383, 0
        %v1408 = vsel %vm524, %v1384, 0
        %v1411 = vsel %vm524, %v1385, 0
        %1413 = vmatprep.subr.mxu0 0.0
        %1414 = vmatpush1.msra.mxu0 %v1387
        %1415 = vmatprep.subr.mxu0 0.0
        %1416 = vmatpush1.msra.mxu0 %v1388
        %1417 = vmatprep.subr.mxu0 0.0
        %1418 = vmatpush1.msra.mxu0 0.0
        %1419 = vmatprep.subr.mxu0 0.0
        %1420 = vmatpush1.msra.mxu0 0.0
        %1421 = vmatprep.subr.mxu0 0.0
        %1422 = vmatpush1.msra.mxu0 0.0
        %1423 = vmatprep.subr.mxu0 0.0
        %1424 = vmatpush1.msra.mxu0 0.0
        %1425 = vmatprep.subr.mxu0 0.0
        %1426 = vmatpush1.msra.mxu0 0.0
        %1427 = vmatprep.subr.mxu0 0.0
        %1428 = vmatpush1.msra.mxu0 0.0
        %1429 = vmatprep.subr.mxu0 0.0
        %1430 = vmatpush1.msra.mxu0 0.0
        %1431 = vmatprep.subr.mxu0 0.0
        %1432 = vmatpush1.msra.mxu0 0.0
        %1433 = vmatprep.subr.mxu0 0.0
        %1434 = vmatpush1.msra.mxu0 0.0
        %1435 = vmatprep.subr.mxu0 0.0
        %1436 = vmatpush1.msra.mxu0 0.0
        %1437 = vmatprep.subr.mxu0 0.0
        %1438 = vmatpush1.msra.mxu0 0.0
        %1439 = vmatprep.subr.mxu0 0.0
        %1440 = vmatpush1.msra.mxu0 0.0
        %1441 = vmatprep.subr.mxu0 0.0
        %1442 = vmatpush1.msra.mxu0 0.0
        %1443 = vmatprep.subr.mxu0 0.0
        %1444 = vmatpush1.msra.mxu0 0.0
        %1445 = vmatprep.subr.mxu0 0.0
        %1446 = vmatpush1.msra.mxu0 0.0
        %1447 = vmatprep.subr.mxu0 0.0
        %1448 = vmatpush1.msra.mxu0 0.0
        %1449 = vmatprep.subr.mxu0 0.0
        %1450 = vmatpush1.msra.mxu0 0.0
        %1451 = vmatprep.subr.mxu0 0.0
        %1452 = vmatpush1.msra.mxu0 0.0
        %1453 = vmatprep.subr.mxu0 0.0
        %1454 = vmatpush1.msra.mxu0 0.0
        %1455 = vmatprep.subr.mxu0 0.0
        %1456 = vmatpush1.msra.mxu0 0.0
        %1457 = vmatprep.subr.mxu0 0.0
        %1458 = vmatpush1.msra.mxu0 0.0
        %1459 = vmatprep.subr.mxu0 0.0
        %1460 = vmatpush1.msra.mxu0 0.0
        %1461 = vmatprep.subr.mxu0 0.0
        %1462 = vmatpush1.msra.mxu0 0.0
        %1463 = vmatprep.subr.mxu0 0.0
        %1464 = vmatpush1.msra.mxu0 0.0
        %1465 = vmatprep.subr.mxu0 0.0
        %1466 = vmatpush1.msra.mxu0 0.0
        %1467 = vmatprep.subr.mxu0 0.0
        %1468 = vmatpush1.msra.mxu0 0.0
        %1469 = vmatprep.subr.mxu0 0.0
        %1470 = vmatpush1.msra.mxu0 0.0
        %1471 = vmatprep.subr.mxu0 0.0
        %1472 = vmatpush1.msra.mxu0 0.0
        %1473 = vmatprep.subr.mxu0 0.0
        %1474 = vmatpush1.msra.mxu0 0.0
        %1475 = vmatprep.subr.mxu0 0.0
        %1476 = vmatpush1.msra.mxu0 0.0
        %1477 = vmatprep.mubr.f32.mxu0 0.0
        %1478 = vmatmul.mubr.f32.gmra.mrb[0].mxu0 %v1390
        %v1479 = vpop.f32.mrb[0].mxu0
        %v1480 = vadd.f32 0.0, %v1479
        %v1481 = vpop.f32.mrb[0].mxu0
        %1482 = vmatprep.mubr.f32.mxu0 0.0
        %1483 = vmatmul.mubr.f32.gmra.mrb[0].mxu0 %v1393
        %v1484 = vpop.f32.mrb[0].mxu0
        %v1485 = vadd.f32 0.0, %v1484
        %v1486 = vpop.f32.mrb[0].mxu0
        %1487 = vmatprep.mubr.f32.mxu0 0.0
        %1488 = vmatmul.mubr.f32.gmra.mrb[0].mxu0 %v1396
        %v1489 = vpop.f32.mrb[0].mxu0
        %v1490 = vadd.f32 0.0, %v1489
        %v1491 = vpop.f32.mrb[0].mxu0
        %1492 = vmatprep.mubr.f32.mxu0 0.0
        %1493 = vmatmul.mubr.f32.gmra.mrb[0].mxu0 %v1399
        %v1494 = vpop.f32.mrb[0].mxu0
        %v1495 = vadd.f32 0.0, %v1494
        %v1496 = vpop.f32.mrb[0].mxu0
        %1497 = vmatprep.mubr.f32.mxu0 0.0
        %1498 = vmatmul.mubr.f32.gmra.mrb[0].mxu0 %v1402
        %v1499 = vpop.f32.mrb[0].mxu0
        %v1500 = vadd.f32 0.0, %v1499
        %v1501 = vpop.f32.mrb[0].mxu0
        %1502 = vmatprep.mubr.f32.mxu0 0.0
        %1503 = vmatmul.mubr.f32.gmra.mrb[0].mxu0 %v1405
        %v1504 = vpop.f32.mrb[0].mxu0
        %v1505 = vadd.f32 0.0, %v1504
        %v1506 = vpop.f32.mrb[0].mxu0
        %1507 = vmatprep.mubr.f32.mxu0 0.0
        %1508 = vmatmul.mubr.f32.gmra.mrb[0].mxu0 %v1408
        %v1509 = vpop.f32.mrb[0].mxu0
        %v1510 = vadd.f32 0.0, %v1509
        %v1511 = vpop.f32.mrb[0].mxu0
        %1512 = vmatprep.mubr.f32.mxu0 0.0
        %1513 = vmatmul.mubr.f32.gmra.mrb[0].mxu0 %v1411
        %v1514 = vpop.f32.mrb[0].mxu0
        %v1515 = vadd.f32 0.0, %v1514
        %v1516 = vpop.f32.mrb[0].mxu0
        %1517 = vdwg.mxu0
        %v1518 = vadd.f32 %v1369, %v1480
        %v1519 = vadd.f32 %v1370, %v1485
        %v1520 = vadd.f32 %v1371, %v1490
        %v1521 = vadd.f32 %v1372, %v1495
        %v1522 = vadd.f32 %v1373, %v1500
        %v1523 = vadd.f32 %v1374, %v1505
        %v1524 = vadd.f32 %v1375, %v1510
        %v1525 = vadd.f32 %v1376, %v1515
        %s1526 = scalar_lea.vmem %s467, 160 [#allocation2]
        %v1527 = vld [vmem:[%s1526] sm:$0xff]
        %v1528 = vld [vmem:[%s1526 + $0x10] sm:$0xff]
        %v1529 = vld [vmem:[%s1526 + $0x20] sm:$0xff]
        %v1530 = vld [vmem:[%s1526 + $0x30] sm:$0xff]
        %v1531 = vld [vmem:[%s1526 + $0x40] sm:$0xff]
        %v1532 = vld [vmem:[%s1526 + $0x50] sm:$0xff]
        %v1533 = vld [vmem:[%s1526 + $0x60] sm:$0xff]
        %v1534 = vld [vmem:[%s1526 + $0x70] sm:$0xff]
        %s1535 = scalar_lea.vmem %s1, 112
        %v1536 = vld [vmem:[%s1535] sm:$0xff]
        %v1537 = vld [vmem:[%s1535 + $0x8] sm:$0xff]
        %v1539 = vsel %vm524, %v1527, 0
        %v1542 = vsel %vm524, %v1528, 0
        %v1545 = vsel %vm524, %v1529, 0
        %v1548 = vsel %vm524, %v1530, 0
        %v1551 = vsel %vm524, %v1531, 0
        %v1554 = vsel %vm524, %v1532, 0
        %v1557 = vsel %vm524, %v1533, 0
        %v1560 = vsel %vm524, %v1534, 0
        %1562 = vmatprep.subr.mxu0 0.0
        %1563 = vmatpush1.msra.mxu0 %v1536
        %1564 = vmatprep.subr.mxu0 0.0
        %1565 = vmatpush1.msra.mxu0 %v1537
        %1566 = vmatprep.subr.mxu0 0.0
        %1567 = vmatpush1.msra.mxu0 0.0
        %1568 = vmatprep.subr.mxu0 0.0
        %1569 = vmatpush1.msra.mxu0 0.0
        %1570 = vmatprep.subr.mxu0 0.0
        %1571 = vmatpush1.msra.mxu0 0.0
        %1572 = vmatprep.subr.mxu0 0.0
        %1573 = vmatpush1.msra.mxu0 0.0
        %1574 = vmatprep.subr.mxu0 0.0
        %1575 = vmatpush1.msra.mxu0 0.0
        %1576 = vmatprep.subr.mxu0 0.0
        %1577 = vmatpush1.msra.mxu0 0.0
        %1578 = vmatprep.subr.mxu0 0.0
        %1579 = vmatpush1.msra.mxu0 0.0
        %1580 = vmatprep.subr.mxu0 0.0
        %1581 = vmatpush1.msra.mxu0 0.0
        %1582 = vmatprep.subr.mxu0 0.0
        %1583 = vmatpush1.msra.mxu0 0.0
        %1584 = vmatprep.subr.mxu0 0.0
        %1585 = vmatpush1.msra.mxu0 0.0
        %1586 = vmatprep.subr.mxu0 0.0
        %1587 = vmatpush1.msra.mxu0 0.0
        %1588 = vmatprep.subr.mxu0 0.0
        %1589 = vmatpush1.msra.mxu0 0.0
        %1590 = vmatprep.subr.mxu0 0.0
        %1591 = vmatpush1.msra.mxu0 0.0
        %1592 = vmatprep.subr.mxu0 0.0
        %1593 = vmatpush1.msra.mxu0 0.0
        %1594 = vmatprep.subr.mxu0 0.0
        %1595 = vmatpush1.msra.mxu0 0.0
        %1596 = vmatprep.subr.mxu0 0.0
        %1597 = vmatpush1.msra.mxu0 0.0
        %1598 = vmatprep.subr.mxu0 0.0
        %1599 = vmatpush1.msra.mxu0 0.0
        %1600 = vmatprep.subr.mxu0 0.0
        %1601 = vmatpush1.msra.mxu0 0.0
        %1602 = vmatprep.subr.mxu0 0.0
        %1603 = vmatpush1.msra.mxu0 0.0
        %1604 = vmatprep.subr.mxu0 0.0
        %1605 = vmatpush1.msra.mxu0 0.0
        %1606 = vmatprep.subr.mxu0 0.0
        %1607 = vmatpush1.msra.mxu0 0.0
        %1608 = vmatprep.subr.mxu0 0.0
        %1609 = vmatpush1.msra.mxu0 0.0
        %1610 = vmatprep.subr.mxu0 0.0
        %1611 = vmatpush1.msra.mxu0 0.0
        %1612 = vmatprep.subr.mxu0 0.0
        %1613 = vmatpush1.msra.mxu0 0.0
        %1614 = vmatprep.subr.mxu0 0.0
        %1615 = vmatpush1.msra.mxu0 0.0
        %1616 = vmatprep.subr.mxu0 0.0
        %1617 = vmatpush1.msra.mxu0 0.0
        %1618 = vmatprep.subr.mxu0 0.0
        %1619 = vmatpush1.msra.mxu0 0.0
        %1620 = vmatprep.subr.mxu0 0.0
        %1621 = vmatpush1.msra.mxu0 0.0
        %1622 = vmatprep.subr.mxu0 0.0
        %1623 = vmatpush1.msra.mxu0 0.0
        %1624 = vmatprep.subr.mxu0 0.0
        %1625 = vmatpush1.msra.mxu0 0.0
        %1626 = vmatprep.mubr.f32.mxu0 0.0
        %1627 = vmatmul.mubr.f32.gmra.mrb[0].mxu0 %v1539
        %v1628 = vpop.f32.mrb[0].mxu0
        %v1629 = vadd.f32 0.0, %v1628
        %v1630 = vpop.f32.mrb[0].mxu0
        %1631 = vmatprep.mubr.f32.mxu0 0.0
        %1632 = vmatmul.mubr.f32.gmra.mrb[0].mxu0 %v1542
        %v1633 = vpop.f32.mrb[0].mxu0
        %v1634 = vadd.f32 0.0, %v1633
        %v1635 = vpop.f32.mrb[0].mxu0
        %1636 = vmatprep.mubr.f32.mxu0 0.0
        %1637 = vmatmul.mubr.f32.gmra.mrb[0].mxu0 %v1545
        %v1638 = vpop.f32.mrb[0].mxu0
        %v1639 = vadd.f32 0.0, %v1638
        %v1640 = vpop.f32.mrb[0].mxu0
        %1641 = vmatprep.mubr.f32.mxu0 0.0
        %1642 = vmatmul.mubr.f32.gmra.mrb[0].mxu0 %v1548
        %v1643 = vpop.f32.mrb[0].mxu0
        %v1644 = vadd.f32 0.0, %v1643
        %v1645 = vpop.f32.mrb[0].mxu0
        %1646 = vmatprep.mubr.f32.mxu0 0.0
        %1647 = vmatmul.mubr.f32.gmra.mrb[0].mxu0 %v1551
        %v1648 = vpop.f32.mrb[0].mxu0
        %v1649 = vadd.f32 0.0, %v1648
        %v1650 = vpop.f32.mrb[0].mxu0
        %1651 = vmatprep.mubr.f32.mxu0 0.0
        %1652 = vmatmul.mubr.f32.gmra.mrb[0].mxu0 %v1554
        %v1653 = vpop.f32.mrb[0].mxu0
        %v1654 = vadd.f32 0.0, %v1653
        %v1655 = vpop.f32.mrb[0].mxu0
        %1656 = vmatprep.mubr.f32.mxu0 0.0
        %1657 = vmatmul.mubr.f32.gmra.mrb[0].mxu0 %v1557
        %v1658 = vpop.f32.mrb[0].mxu0
        %v1659 = vadd.f32 0.0, %v1658
        %v1660 = vpop.f32.mrb[0].mxu0
        %1661 = vmatprep.mubr.f32.mxu0 0.0
        %1662 = vmatmul.mubr.f32.gmra.mrb[0].mxu0 %v1560
        %v1663 = vpop.f32.mrb[0].mxu0
        %v1664 = vadd.f32 0.0, %v1663
        %v1665 = vpop.f32.mrb[0].mxu0
        %1666 = vdwg.mxu0
        %v1667 = vadd.f32 %v1518, %v1629
        %v1668 = vadd.f32 %v1519, %v1634
        %v1669 = vadd.f32 %v1520, %v1639
        %v1670 = vadd.f32 %v1521, %v1644
        %v1671 = vadd.f32 %v1522, %v1649
        %v1672 = vadd.f32 %v1523, %v1654
        %v1673 = vadd.f32 %v1524, %v1659
        %v1674 = vadd.f32 %v1525, %v1664
        %v1675 = vld [vmem:[%s1377 + $0x1] sm:$0xff]
        %v1676 = vld [vmem:[%s1377 + $0x11] sm:$0xff]
        %v1677 = vld [vmem:[%s1377 + $0x21] sm:$0xff]
        %v1678 = vld [vmem:[%s1377 + $0x31] sm:$0xff]
        %v1679 = vld [vmem:[%s1377 + $0x41] sm:$0xff]
        %v1680 = vld [vmem:[%s1377 + $0x51] sm:$0xff]
        %v1681 = vld [vmem:[%s1377 + $0x61] sm:$0xff]
        %v1682 = vld [vmem:[%s1377 + $0x71] sm:$0xff]
        %s1683 = scalar_lea.vmem %s1, 128
        %v1684 = vld [vmem:[%s1683] sm:$0xff]
        %v1685 = vld [vmem:[%s1683 + $0x8] sm:$0xff]
        %v1687 = vsel %vm524, %v1675, 0
        %v1690 = vsel %vm524, %v1676, 0
        %v1693 = vsel %vm524, %v1677, 0
        %v1696 = vsel %vm524, %v1678, 0
        %v1699 = vsel %vm524, %v1679, 0
        %v1702 = vsel %vm524, %v1680, 0
        %v1705 = vsel %vm524, %v1681, 0
        %v1708 = vsel %vm524, %v1682, 0
        %1710 = vmatprep.subr.mxu0 0.0
        %1711 = vmatpush1.msra.mxu0 %v1684
        %1712 = vmatprep.subr.mxu0 0.0
        %1713 = vmatpush1.msra.mxu0 %v1685
        %1714 = vmatprep.subr.mxu0 0.0
        %1715 = vmatpush1.msra.mxu0 0.0
        %1716 = vmatprep.subr.mxu0 0.0
        %1717 = vmatpush1.msra.mxu0 0.0
        %1718 = vmatprep.subr.mxu0 0.0
        %1719 = vmatpush1.msra.mxu0 0.0
        %1720 = vmatprep.subr.mxu0 0.0
        %1721 = vmatpush1.msra.mxu0 0.0
        %1722 = vmatprep.subr.mxu0 0.0
        %1723 = vmatpush1.msra.mxu0 0.0
        %1724 = vmatprep.subr.mxu0 0.0
        %1725 = vmatpush1.msra.mxu0 0.0
        %1726 = vmatprep.subr.mxu0 0.0
        %1727 = vmatpush1.msra.mxu0 0.0
        %1728 = vmatprep.subr.mxu0 0.0
        %1729 = vmatpush1.msra.mxu0 0.0
        %1730 = vmatprep.subr.mxu0 0.0
        %1731 = vmatpush1.msra.mxu0 0.0
        %1732 = vmatprep.subr.mxu0 0.0
        %1733 = vmatpush1.msra.mxu0 0.0
        %1734 = vmatprep.subr.mxu0 0.0
        %1735 = vmatpush1.msra.mxu0 0.0
        %1736 = vmatprep.subr.mxu0 0.0
        %1737 = vmatpush1.msra.mxu0 0.0
        %1738 = vmatprep.subr.mxu0 0.0
        %1739 = vmatpush1.msra.mxu0 0.0
        %1740 = vmatprep.subr.mxu0 0.0
        %1741 = vmatpush1.msra.mxu0 0.0
        %1742 = vmatprep.subr.mxu0 0.0
        %1743 = vmatpush1.msra.mxu0 0.0
        %1744 = vmatprep.subr.mxu0 0.0
        %1745 = vmatpush1.msra.mxu0 0.0
        %1746 = vmatprep.subr.mxu0 0.0
        %1747 = vmatpush1.msra.mxu0 0.0
        %1748 = vmatprep.subr.mxu0 0.0
        %1749 = vmatpush1.msra.mxu0 0.0
        %1750 = vmatprep.subr.mxu0 0.0
        %1751 = vmatpush1.msra.mxu0 0.0
        %1752 = vmatprep.subr.mxu0 0.0
        %1753 = vmatpush1.msra.mxu0 0.0
        %1754 = vmatprep.subr.mxu0 0.0
        %1755 = vmatpush1.msra.mxu0 0.0
        %1756 = vmatprep.subr.mxu0 0.0
        %1757 = vmatpush1.msra.mxu0 0.0
        %1758 = vmatprep.subr.mxu0 0.0
        %1759 = vmatpush1.msra.mxu0 0.0
        %1760 = vmatprep.subr.mxu0 0.0
        %1761 = vmatpush1.msra.mxu0 0.0
        %1762 = vmatprep.subr.mxu0 0.0
        %1763 = vmatpush1.msra.mxu0 0.0
        %1764 = vmatprep.subr.mxu0 0.0
        %1765 = vmatpush1.msra.mxu0 0.0
        %1766 = vmatprep.subr.mxu0 0.0
        %1767 = vmatpush1.msra.mxu0 0.0
        %1768 = vmatprep.subr.mxu0 0.0
        %1769 = vmatpush1.msra.mxu0 0.0
        %1770 = vmatprep.subr.mxu0 0.0
        %1771 = vmatpush1.msra.mxu0 0.0
        %1772 = vmatprep.subr.mxu0 0.0
        %1773 = vmatpush1.msra.mxu0 0.0
        %1774 = vmatprep.mubr.f32.mxu0 0.0
        %1775 = vmatmul.mubr.f32.gmra.mrb[0].mxu0 %v1687
        %v1776 = vpop.f32.mrb[0].mxu0
        %v1777 = vadd.f32 0.0, %v1776
        %v1778 = vpop.f32.mrb[0].mxu0
        %1779 = vmatprep.mubr.f32.mxu0 0.0
        %1780 = vmatmul.mubr.f32.gmra.mrb[0].mxu0 %v1690
        %v1781 = vpop.f32.mrb[0].mxu0
        %v1782 = vadd.f32 0.0, %v1781
        %v1783 = vpop.f32.mrb[0].mxu0
        %1784 = vmatprep.mubr.f32.mxu0 0.0
        %1785 = vmatmul.mubr.f32.gmra.mrb[0].mxu0 %v1693
        %v1786 = vpop.f32.mrb[0].mxu0
        %v1787 = vadd.f32 0.0, %v1786
        %v1788 = vpop.f32.mrb[0].mxu0
        %1789 = vmatprep.mubr.f32.mxu0 0.0
        %1790 = vmatmul.mubr.f32.gmra.mrb[0].mxu0 %v1696
        %v1791 = vpop.f32.mrb[0].mxu0
        %v1792 = vadd.f32 0.0, %v1791
        %v1793 = vpop.f32.mrb[0].mxu0
        %1794 = vmatprep.mubr.f32.mxu0 0.0
        %1795 = vmatmul.mubr.f32.gmra.mrb[0].mxu0 %v1699
        %v1796 = vpop.f32.mrb[0].mxu0
        %v1797 = vadd.f32 0.0, %v1796
        %v1798 = vpop.f32.mrb[0].mxu0
        %1799 = vmatprep.mubr.f32.mxu0 0.0
        %1800 = vmatmul.mubr.f32.gmra.mrb[0].mxu0 %v1702
        %v1801 = vpop.f32.mrb[0].mxu0
        %v1802 = vadd.f32 0.0, %v1801
        %v1803 = vpop.f32.mrb[0].mxu0
        %1804 = vmatprep.mubr.f32.mxu0 0.0
        %1805 = vmatmul.mubr.f32.gmra.mrb[0].mxu0 %v1705
        %v1806 = vpop.f32.mrb[0].mxu0
        %v1807 = vadd.f32 0.0, %v1806
        %v1808 = vpop.f32.mrb[0].mxu0
        %1809 = vmatprep.mubr.f32.mxu0 0.0
        %1810 = vmatmul.mubr.f32.gmra.mrb[0].mxu0 %v1708
        %v1811 = vpop.f32.mrb[0].mxu0
        %v1812 = vadd.f32 0.0, %v1811
        %v1813 = vpop.f32.mrb[0].mxu0
        %1814 = vdwg.mxu0
        %v1815 = vadd.f32 %v1667, %v1777
        %v1816 = vadd.f32 %v1668, %v1782
        %v1817 = vadd.f32 %v1669, %v1787
        %v1818 = vadd.f32 %v1670, %v1792
        %v1819 = vadd.f32 %v1671, %v1797
        %v1820 = vadd.f32 %v1672, %v1802
        %v1821 = vadd.f32 %v1673, %v1807
        %v1822 = vadd.f32 %v1674, %v1812
        %1823 = vst.msk [vmem:[%s496] sm:$0xff] %vm524, %v1815
        %1824 = vst.msk [vmem:[%s496 + $0x8] sm:$0xff] %vm524, %v1816
        %1825 = vst.msk [vmem:[%s496 + $0x10] sm:$0xff] %vm524, %v1817
        %1826 = vst.msk [vmem:[%s496 + $0x18] sm:$0xff] %vm524, %v1818
        %1827 = vst.msk [vmem:[%s496 + $0x20] sm:$0xff] %vm524, %v1819
        %1828 = vst.msk [vmem:[%s496 + $0x28] sm:$0xff] %vm524, %v1820
        %1829 = vst.msk [vmem:[%s496 + $0x30] sm:$0xff] %vm524, %v1821
        %1830 = vst.msk [vmem:[%s496 + $0x38] sm:$0xff] %vm524, %v1822
        %v1831 = vsel %vm524, %v1815, 0.0
        %v1832 = vsel %vm524, %v1816, 0.0
        %v1833 = vadd.f32 %v1831, %v1832
        %v1834 = vsel %vm524, %v1817, 0.0
        %v1835 = vadd.f32 %v1833, %v1834
        %v1836 = vsel %vm524, %v1818, 0.0
        %v1837 = vadd.f32 %v1835, %v1836
        %v1838 = vsel %vm524, %v1819, 0.0
        %v1839 = vadd.f32 %v1837, %v1838
        %v1840 = vsel %vm524, %v1820, 0.0
        %v1841 = vadd.f32 %v1839, %v1840
        %v1842 = vsel %vm524, %v1821, 0.0
        %v1843 = vadd.f32 %v1841, %v1842
        %v1844 = vsel %vm524, %v1822, 0.0
        %v1845 = vadd.f32 %v1843, %v1844
        %v1846 = vrot.slane %v1845, 4
        %v1847 = vadd.f32 %v1845, %v1846
        %v1848 = vrot.slane %v1847, 2
        %v1849 = vadd.f32 %v1847, %v1848
        %v1850 = vrot.slane %v1849, 1
        %v1851 = vadd.f32 %v1849, %v1850
        %v1852 = vmul.f32 %v1815, %v1815
        %v1853 = vmul.f32 %v1816, %v1816
        %v1854 = vmul.f32 %v1817, %v1817
        %v1855 = vmul.f32 %v1818, %v1818
        %v1856 = vmul.f32 %v1819, %v1819
        %v1857 = vmul.f32 %v1820, %v1820
        %v1858 = vmul.f32 %v1821, %v1821
        %v1859 = vmul.f32 %v1822, %v1822
        %v1860 = vsel %vm524, %v1852, 0.0
        %v1861 = vsel %vm524, %v1853, 0.0
        %v1862 = vadd.f32 %v1860, %v1861
        %v1863 = vsel %vm524, %v1854, 0.0
        %v1864 = vadd.f32 %v1862, %v1863
        %v1865 = vsel %vm524, %v1855, 0.0
        %v1866 = vadd.f32 %v1864, %v1865
        %v1867 = vsel %vm524, %v1856, 0.0
        %v1868 = vadd.f32 %v1866, %v1867
        %v1869 = vsel %vm524, %v1857, 0.0
        %v1870 = vadd.f32 %v1868, %v1869
        %v1871 = vsel %vm524, %v1858, 0.0
        %v1872 = vadd.f32 %v1870, %v1871
        %v1873 = vsel %vm524, %v1859, 0.0
        %v1874 = vadd.f32 %v1872, %v1873
        %v1875 = vrot.slane %v1874, 4
        %v1876 = vadd.f32 %v1874, %v1875
        %v1877 = vrot.slane %v1876, 2
        %v1878 = vadd.f32 %v1876, %v1877
        %v1879 = vrot.slane %v1878, 1
        %v1880 = vadd.f32 %v1878, %v1879
        %vm1881 = vcmask 1040384
        %v1882 = vsel %vm1881, %v1851, %v1880
        %vm1883 = vcmask 123904
        %1884 = vst.msk [vmem:[%s501] sm:$0x3] %vm1883, %v1882
        %s1885 = smul.u32 8, %s15
        %p1886 = scmp.lt.s32.totalorder %s1885, 15
        %s1887 = scalar_select %p1886, %s1885, 15
        %s1888 = smul.addr %s1887, 8
        %s1889 = scalar_lea.vmem %s2, %s1888
        %p1890 = scmp.lt.s32.totalorder %s15, 1
        %s1891 = scalar_select %p1890, %s15, 1
        %s1892 = smul.addr %s1891, 2
        %s1893 = scalar_lea.vmem %s3, %s1892
        // Predicated region
        $region67: #{bottleneck_forward.8} parent=61 // pred_check
          %p1894 = pneg %p80
        $region68: #{bottleneck_forward.8} parent=61 // pred_check_branch
          %1896 = sbr.rel (%p1894) target = $region70
        $region69: #{bottleneck_forward.8} parent=61 // pred_region
          %s1897 = smul.u32 8, %s15
        $region70: #{bottleneck_forward.8} parent=61 // pred_fallthru
          _
        // Predicated region
        $region71: #{bottleneck_forward.8} parent=61 // pred_check
          %p1898 = pneg %p106
        $region72: #{bottleneck_forward.8} parent=61 // pred_check_branch
          %1900 = sbr.rel (%p1898) target = $region74
        $region73: #{bottleneck_forward.8} parent=61 // pred_region
          _
        $region74: #{bottleneck_forward.8} parent=61 // pred_fallthru
          _
      $region62: #{bottleneck_forward.8} parent=5 // pred_fallthru
        _
      %p1901 = scmp.le.s32.totalorder 2, %s10
      // Predicated region
      $region75: #{bottleneck_forward.8} parent=5 // pred_check
        %p1902 = pneg %p1901
      $region76: #{bottleneck_forward.8} parent=5 // pred_check_branch
        %1904 = sbr.rel (%p1902) target = $region78
      $region77: #{bottleneck_forward.8} parent=5 // pred_region
        %s1905 = ssub.s32 %s10, 2
        // Predicated region
        $region79: #{bottleneck_forward.8} parent=77 // pred_check
          %p1906 = pneg %p86
        $region80: #{bottleneck_forward.8} parent=77 // pred_check_branch
          %1908 = sbr.rel (%p1906) target = $region82
        $region81: #{bottleneck_forward.8} parent=77 // pred_region
          %s1909 = smul.u32 8, %s16
          %p1910 = scmp.lt.s32.totalorder %s1909, 15
          %s1911 = scalar_select %p1910, %s1909, 15
          %s1912 = smul.addr %s1911, 8
          %s1913 = scalar_lea.vmem %s2, %s1912
        $region82: #{bottleneck_forward.8} parent=77 // pred_fallthru
          _
        // Predicated region
        $region83: #{bottleneck_forward.8} parent=77 // pred_check
          %p1914 = pneg %p112
        $region84: #{bottleneck_forward.8} parent=77 // pred_check_branch
          %1916 = sbr.rel (%p1914) target = $region86
        $region85: #{bottleneck_forward.8} parent=77 // pred_region
          %p1917 = scmp.lt.s32.totalorder %s16, 1
          %s1918 = scalar_select %p1917, %s16, 1
          %s1919 = smul.addr %s1918, 2
          %s1920 = scalar_lea.vmem %s3, %s1919
        $region86: #{bottleneck_forward.8} parent=77 // pred_fallthru
          _
      $region78: #{bottleneck_forward.8} parent=5 // pred_fallthru
        _
    $region6: #{bottleneck_forward.8} parent=1 // loop_footer
      %s14 = sadd.s32 1, %s10
    $region7: #{bottleneck_forward.8} parent=1 // loop_footer_branch
      %9 = sbr.rel target = $region3
    $region8: #{bottleneck_forward.8} parent=1 // loop_exit
      _

// kernel: bottleneck_forward.9
$region0: #{bottleneck_forward.9}
  #allocation0 [shape = 'u32[]', space=smem, size = 0x4, offset = 0x4, fixed_abs, tag = 'smem constant byte address 0x4 - core index']
  #allocation1 [shape = 'u32[144,128]{1,0:T(1,128)}', space=vmem, size = 0x12000, scoped, tag = 'internal scratch']
  %s0 = inlined_call_operand.vmem [shape: f32[128,16], index: 0, kind: input, shape index: {}]
  %s1 = inlined_call_operand.vmem [shape: f32[16,64], index: 1, kind: input, shape index: {}]
  %s2 = inlined_call_operand.vmem [shape: f32[1,16], index: 2, kind: input, shape index: {}]
  %s3 = inlined_call_operand.vmem [shape: f32[1,16], index: 3, kind: input, shape index: {}]
  %s4 = inlined_call_operand.vmem [shape: f32[128,64], index: 4, kind: output, shape index: {0}]
  %s5 = inlined_call_operand.vmem [shape: f32[1,2,64], index: 5, kind: output, shape index: {1}]
  %6 = xla_tuple %s4, %s5
  %s7 = sld [smem:[#allocation0]]
  $region34: #{bottleneck_forward.9} parent=0
    _
  %s9 = ssub.s32 1, %s7
  %s10 = scalar_select 0, %s9, %s7
  // Predicated region
  $region2: #{bottleneck_forward.9} parent=0 // pred_check
    _
  $region3: #{bottleneck_forward.9} parent=0 // pred_check_branch
    %12 = sbr.rel (0) target = $region5
  $region4: #{bottleneck_forward.9} parent=0 // pred_region
    _
  $region5: #{bottleneck_forward.9} parent=0 // pred_fallthru
    _
  // Predicated region
  $region6: #{bottleneck_forward.9} parent=0 // pred_check
    _
  $region7: #{bottleneck_forward.9} parent=0 // pred_check_branch
    %14 = sbr.rel (0) target = $region9
  $region8: #{bottleneck_forward.9} parent=0 // pred_region
    _
  $region9: #{bottleneck_forward.9} parent=0 // pred_fallthru
    _
  // Predicated region
  $region10: #{bottleneck_forward.9} parent=0 // pred_check
    _
  $region11: #{bottleneck_forward.9} parent=0 // pred_check_branch
    %16 = sbr.rel (0) target = $region13
  $region12: #{bottleneck_forward.9} parent=0 // pred_region
    _
  $region13: #{bottleneck_forward.9} parent=0 // pred_fallthru
    _
  // Predicated region
  $region14: #{bottleneck_forward.9} parent=0 // pred_check
    _
  $region15: #{bottleneck_forward.9} parent=0 // pred_check_branch
    %18 = sbr.rel (0) target = $region17
  $region16: #{bottleneck_forward.9} parent=0 // pred_region
    _
  $region17: #{bottleneck_forward.9} parent=0 // pred_fallthru
    _
  %v19 = vld [vmem:[%s0] sm:$0xff]
  %v20 = vld [vmem:[%s0 + $0x8] sm:$0xff]
  %v21 = vld [vmem:[%s0 + $0x10] sm:$0xff]
  %v22 = vld [vmem:[%s0 + $0x18] sm:$0xff]
  %v23 = vld [vmem:[%s0 + $0x20] sm:$0xff]
  %v24 = vld [vmem:[%s0 + $0x28] sm:$0xff]
  %v25 = vld [vmem:[%s0 + $0x30] sm:$0xff]
  %v26 = vld [vmem:[%s0 + $0x38] sm:$0xff]
  %v27 = vld [vmem:[%s0 + $0x40] sm:$0xff]
  %v28 = vld [vmem:[%s0 + $0x48] sm:$0xff]
  %v29 = vld [vmem:[%s0 + $0x50] sm:$0xff]
  %v30 = vld [vmem:[%s0 + $0x58] sm:$0xff]
  %v31 = vld [vmem:[%s0 + $0x60] sm:$0xff]
  %v32 = vld [vmem:[%s0 + $0x68] sm:$0xff]
  %v33 = vld [vmem:[%s0 + $0x70] sm:$0xff]
  %v34 = vld [vmem:[%s0 + $0x78] sm:$0xff]
  %v35 = vld [vmem:[%s2] sm:$0x1]
  %v37 = vlaneseq
  %v38 = vshrl.u32 %v37, 7
  %v39 = vsub.s32 0, %v38
  %v40 = vrot.slane %v35, %v39
  %v42 = vmul.f32 %v19, %v40
  %v43 = vmul.f32 %v20, %v40
  %v44 = vmul.f32 %v21, %v40
  %v45 = vmul.f32 %v22, %v40
  %v46 = vmul.f32 %v23, %v40
  %v47 = vmul.f32 %v24, %v40
  %v48 = vmul.f32 %v25, %v40
  %v49 = vmul.f32 %v26, %v40
  %v50 = vmul.f32 %v27, %v40
  %v51 = vmul.f32 %v28, %v40
  %v52 = vmul.f32 %v29, %v40
  %v53 = vmul.f32 %v30, %v40
  %v54 = vmul.f32 %v31, %v40
  %v55 = vmul.f32 %v32, %v40
  %v56 = vmul.f32 %v33, %v40
  %v57 = vmul.f32 %v34, %v40
  %v58 = vld [vmem:[%s3] sm:$0x1]
  %v60 = vlaneseq
  %v61 = vshrl.u32 %v60, 7
  %v62 = vsub.s32 0, %v61
  %v63 = vrot.slane %v58, %v62
  %v65 = vadd.f32 %v42, %v63
  %v66 = vadd.f32 %v43, %v63
  %v67 = vadd.f32 %v44, %v63
  %v68 = vadd.f32 %v45, %v63
  %v69 = vadd.f32 %v46, %v63
  %v70 = vadd.f32 %v47, %v63
  %v71 = vadd.f32 %v48, %v63
  %v72 = vadd.f32 %v49, %v63
  %v73 = vadd.f32 %v50, %v63
  %v74 = vadd.f32 %v51, %v63
  %v75 = vadd.f32 %v52, %v63
  %v76 = vadd.f32 %v53, %v63
  %v77 = vadd.f32 %v54, %v63
  %v78 = vadd.f32 %v55, %v63
  %v79 = vadd.f32 %v56, %v63
  %v80 = vadd.f32 %v57, %v63
  %v81 = vmax.f32 %v65, 0.0
  %v82 = vmax.f32 %v66, 0.0
  %v83 = vmax.f32 %v67, 0.0
  %v84 = vmax.f32 %v68, 0.0
  %v85 = vmax.f32 %v69, 0.0
  %v86 = vmax.f32 %v70, 0.0
  %v87 = vmax.f32 %v71, 0.0
  %v88 = vmax.f32 %v72, 0.0
  %v89 = vmax.f32 %v73, 0.0
  %v90 = vmax.f32 %v74, 0.0
  %v91 = vmax.f32 %v75, 0.0
  %v92 = vmax.f32 %v76, 0.0
  %v93 = vmax.f32 %v77, 0.0
  %v94 = vmax.f32 %v78, 0.0
  %v95 = vmax.f32 %v79, 0.0
  %v96 = vmax.f32 %v80, 0.0
  %v97 = vld [vmem:[%s1] sm:$0xff]
  %v98 = vld [vmem:[%s1 + $0x8] sm:$0xff]
  %vm99 = vcmask 130048
  %v101 = vsel %vm99, %v81, 0
  %v104 = vsel %vm99, %v82, 0
  %v107 = vsel %vm99, %v83, 0
  %v110 = vsel %vm99, %v84, 0
  %v113 = vsel %vm99, %v85, 0
  %v116 = vsel %vm99, %v86, 0
  %v119 = vsel %vm99, %v87, 0
  %v122 = vsel %vm99, %v88, 0
  %v125 = vsel %vm99, %v89, 0
  %v128 = vsel %vm99, %v90, 0
  %v131 = vsel %vm99, %v91, 0
  %v134 = vsel %vm99, %v92, 0
  %v137 = vsel %vm99, %v93, 0
  %v140 = vsel %vm99, %v94, 0
  %v143 = vsel %vm99, %v95, 0
  %v146 = vsel %vm99, %v96, 0
  %148 = vmatprep.subr.mxu0 0.0
  %149 = vmatpush1.msra.mxu0 %v97
  %150 = vmatprep.subr.mxu0 0.0
  %151 = vmatpush1.msra.mxu0 %v98
  %152 = vmatprep.subr.mxu0 0.0
  %153 = vmatpush1.msra.mxu0 0.0
  %154 = vmatprep.subr.mxu0 0.0
  %155 = vmatpush1.msra.mxu0 0.0
  %156 = vmatprep.subr.mxu0 0.0
  %157 = vmatpush1.msra.mxu0 0.0
  %158 = vmatprep.subr.mxu0 0.0
  %159 = vmatpush1.msra.mxu0 0.0
  %160 = vmatprep.subr.mxu0 0.0
  %161 = vmatpush1.msra.mxu0 0.0
  %162 = vmatprep.subr.mxu0 0.0
  %163 = vmatpush1.msra.mxu0 0.0
  %164 = vmatprep.subr.mxu0 0.0
  %165 = vmatpush1.msra.mxu0 0.0
  %166 = vmatprep.subr.mxu0 0.0
  %167 = vmatpush1.msra.mxu0 0.0
  %168 = vmatprep.subr.mxu0 0.0
  %169 = vmatpush1.msra.mxu0 0.0
  %170 = vmatprep.subr.mxu0 0.0
  %171 = vmatpush1.msra.mxu0 0.0
  %172 = vmatprep.subr.mxu0 0.0
  %173 = vmatpush1.msra.mxu0 0.0
  %174 = vmatprep.subr.mxu0 0.0
  %175 = vmatpush1.msra.mxu0 0.0
  %176 = vmatprep.subr.mxu0 0.0
  %177 = vmatpush1.msra.mxu0 0.0
  %178 = vmatprep.subr.mxu0 0.0
  %179 = vmatpush1.msra.mxu0 0.0
  %180 = vmatprep.subr.mxu0 0.0
  %181 = vmatpush1.msra.mxu0 0.0
  %182 = vmatprep.subr.mxu0 0.0
  %183 = vmatpush1.msra.mxu0 0.0
  %184 = vmatprep.subr.mxu0 0.0
  %185 = vmatpush1.msra.mxu0 0.0
  %186 = vmatprep.subr.mxu0 0.0
  %187 = vmatpush1.msra.mxu0 0.0
  %188 = vmatprep.subr.mxu0 0.0
  %189 = vmatpush1.msra.mxu0 0.0
  %190 = vmatprep.subr.mxu0 0.0
  %191 = vmatpush1.msra.mxu0 0.0
  %192 = vmatprep.subr.mxu0 0.0
  %193 = vmatpush1.msra.mxu0 0.0
  %194 = vmatprep.subr.mxu0 0.0
  %195 = vmatpush1.msra.mxu0 0.0
  %196 = vmatprep.subr.mxu0 0.0
  %197 = vmatpush1.msra.mxu0 0.0
  %198 = vmatprep.subr.mxu0 0.0
  %199 = vmatpush1.msra.mxu0 0.0
  %200 = vmatprep.subr.mxu0 0.0
  %201 = vmatpush1.msra.mxu0 0.0
  %202 = vmatprep.subr.mxu0 0.0
  %203 = vmatpush1.msra.mxu0 0.0
  %204 = vmatprep.subr.mxu0 0.0
  %205 = vmatpush1.msra.mxu0 0.0
  %206 = vmatprep.subr.mxu0 0.0
  %207 = vmatpush1.msra.mxu0 0.0
  %208 = vmatprep.subr.mxu0 0.0
  %209 = vmatpush1.msra.mxu0 0.0
  %210 = vmatprep.subr.mxu0 0.0
  %211 = vmatpush1.msra.mxu0 0.0
  %212 = vmatprep.mubr.f32.mxu0 0.0
  %213 = vmatmul.mubr.f32.gmra.mrb[0].mxu0 %v101
  %v214 = vpop.f32.mrb[0].mxu0
  %v215 = vadd.f32 0.0, %v214
  %v216 = vpop.f32.mrb[0].mxu0
  %217 = vmatprep.mubr.f32.mxu0 0.0
  %218 = vmatmul.mubr.f32.gmra.mrb[0].mxu0 %v104
  %v219 = vpop.f32.mrb[0].mxu0
  %v220 = vadd.f32 0.0, %v219
  %v221 = vpop.f32.mrb[0].mxu0
  %222 = vmatprep.mubr.f32.mxu0 0.0
  %223 = vmatmul.mubr.f32.gmra.mrb[0].mxu0 %v107
  %v224 = vpop.f32.mrb[0].mxu0
  %v225 = vadd.f32 0.0, %v224
  %v226 = vpop.f32.mrb[0].mxu0
  %227 = vmatprep.mubr.f32.mxu0 0.0
  %228 = vmatmul.mubr.f32.gmra.mrb[0].mxu0 %v110
  %v229 = vpop.f32.mrb[0].mxu0
  %v230 = vadd.f32 0.0, %v229
  %v231 = vpop.f32.mrb[0].mxu0
  %232 = vmatprep.mubr.f32.mxu0 0.0
  %233 = vmatmul.mubr.f32.gmra.mrb[0].mxu0 %v113
  %v234 = vpop.f32.mrb[0].mxu0
  %v235 = vadd.f32 0.0, %v234
  %v236 = vpop.f32.mrb[0].mxu0
  %237 = vmatprep.mubr.f32.mxu0 0.0
  %238 = vmatmul.mubr.f32.gmra.mrb[0].mxu0 %v116
  %v239 = vpop.f32.mrb[0].mxu0
  %v240 = vadd.f32 0.0, %v239
  %v241 = vpop.f32.mrb[0].mxu0
  %242 = vmatprep.mubr.f32.mxu0 0.0
  %243 = vmatmul.mubr.f32.gmra.mrb[0].mxu0 %v119
  %v244 = vpop.f32.mrb[0].mxu0
  %v245 = vadd.f32 0.0, %v244
  %v246 = vpop.f32.mrb[0].mxu0
  %247 = vmatprep.mubr.f32.mxu0 0.0
  %248 = vmatmul.mubr.f32.gmra.mrb[0].mxu0 %v122
  %v249 = vpop.f32.mrb[0].mxu0
  %v250 = vadd.f32 0.0, %v249
  %v251 = vpop.f32.mrb[0].mxu0
  %252 = vmatprep.mubr.f32.mxu0 0.0
  %253 = vmatmul.mubr.f32.gmra.mrb[0].mxu0 %v125
  %v254 = vpop.f32.mrb[0].mxu0
  %v255 = vadd.f32 0.0, %v254
  %v256 = vpop.f32.mrb[0].mxu0
  %257 = vmatprep.mubr.f32.mxu0 0.0
  %258 = vmatmul.mubr.f32.gmra.mrb[0].mxu0 %v128
  %v259 = vpop.f32.mrb[0].mxu0
  %v260 = vadd.f32 0.0, %v259
  %v261 = vpop.f32.mrb[0].mxu0
  %262 = vmatprep.mubr.f32.mxu0 0.0
  %263 = vmatmul.mubr.f32.gmra.mrb[0].mxu0 %v131
  %v264 = vpop.f32.mrb[0].mxu0
  %v265 = vadd.f32 0.0, %v264
  %v266 = vpop.f32.mrb[0].mxu0
  %267 = vmatprep.mubr.f32.mxu0 0.0
  %268 = vmatmul.mubr.f32.gmra.mrb[0].mxu0 %v134
  %v269 = vpop.f32.mrb[0].mxu0
  %v270 = vadd.f32 0.0, %v269
  %v271 = vpop.f32.mrb[0].mxu0
  %272 = vmatprep.mubr.f32.mxu0 0.0
  %273 = vmatmul.mubr.f32.gmra.mrb[0].mxu0 %v137
  %v274 = vpop.f32.mrb[0].mxu0
  %v275 = vadd.f32 0.0, %v274
  %v276 = vpop.f32.mrb[0].mxu0
  %277 = vmatprep.mubr.f32.mxu0 0.0
  %278 = vmatmul.mubr.f32.gmra.mrb[0].mxu0 %v140
  %v279 = vpop.f32.mrb[0].mxu0
  %v280 = vadd.f32 0.0, %v279
  %v281 = vpop.f32.mrb[0].mxu0
  %282 = vmatprep.mubr.f32.mxu0 0.0
  %283 = vmatmul.mubr.f32.gmra.mrb[0].mxu0 %v143
  %v284 = vpop.f32.mrb[0].mxu0
  %v285 = vadd.f32 0.0, %v284
  %v286 = vpop.f32.mrb[0].mxu0
  %287 = vmatprep.mubr.f32.mxu0 0.0
  %288 = vmatmul.mubr.f32.gmra.mrb[0].mxu0 %v146
  %v289 = vpop.f32.mrb[0].mxu0
  %v290 = vadd.f32 0.0, %v289
  %v291 = vpop.f32.mrb[0].mxu0
  %292 = vdwg.mxu0
  %vm293 = vcmask 523264
  %294 = vst.msk [vmem:[%s4] sm:$0xff] %vm293, %v215
  %295 = vst.msk [vmem:[%s4 + $0x8] sm:$0xff] %vm293, %v220
  %296 = vst.msk [vmem:[%s4 + $0x10] sm:$0xff] %vm293, %v225
  %297 = vst.msk [vmem:[%s4 + $0x18] sm:$0xff] %vm293, %v230
  %298 = vst.msk [vmem:[%s4 + $0x20] sm:$0xff] %vm293, %v235
  %299 = vst.msk [vmem:[%s4 + $0x28] sm:$0xff] %vm293, %v240
  %300 = vst.msk [vmem:[%s4 + $0x30] sm:$0xff] %vm293, %v245
  %301 = vst.msk [vmem:[%s4 + $0x38] sm:$0xff] %vm293, %v250
  %302 = vst.msk [vmem:[%s4 + $0x40] sm:$0xff] %vm293, %v255
  %303 = vst.msk [vmem:[%s4 + $0x48] sm:$0xff] %vm293, %v260
  %304 = vst.msk [vmem:[%s4 + $0x50] sm:$0xff] %vm293, %v265
  %305 = vst.msk [vmem:[%s4 + $0x58] sm:$0xff] %vm293, %v270
  %306 = vst.msk [vmem:[%s4 + $0x60] sm:$0xff] %vm293, %v275
  %307 = vst.msk [vmem:[%s4 + $0x68] sm:$0xff] %vm293, %v280
  %308 = vst.msk [vmem:[%s4 + $0x70] sm:$0xff] %vm293, %v285
  %309 = vst.msk [vmem:[%s4 + $0x78] sm:$0xff] %vm293, %v290
  %v310 = vsel %vm293, %v215, 0.0
  %v311 = vsel %vm293, %v220, 0.0
  %v312 = vadd.f32 %v310, %v311
  %v313 = vsel %vm293, %v225, 0.0
  %v314 = vadd.f32 %v312, %v313
  %v315 = vsel %vm293, %v230, 0.0
  %v316 = vadd.f32 %v314, %v315
  %v317 = vsel %vm293, %v235, 0.0
  %v318 = vadd.f32 %v316, %v317
  %v319 = vsel %vm293, %v240, 0.0
  %v320 = vadd.f32 %v318, %v319
  %v321 = vsel %vm293, %v245, 0.0
  %v322 = vadd.f32 %v320, %v321
  %v323 = vsel %vm293, %v250, 0.0
  %v324 = vadd.f32 %v322, %v323
  %v325 = vsel %vm293, %v255, 0.0
  %v326 = vadd.f32 %v324, %v325
  %v327 = vsel %vm293, %v260, 0.0
  %v328 = vadd.f32 %v326, %v327
  %v329 = vsel %vm293, %v265, 0.0
  %v330 = vadd.f32 %v328, %v329
  %v331 = vsel %vm293, %v270, 0.0
  %v332 = vadd.f32 %v330, %v331
  %v333 = vsel %vm293, %v275, 0.0
  %v334 = vadd.f32 %v332, %v333
  %v335 = vsel %vm293, %v280, 0.0
  %v336 = vadd.f32 %v334, %v335
  %v337 = vsel %vm293, %v285, 0.0
  %v338 = vadd.f32 %v336, %v337
  %v339 = vsel %vm293, %v290, 0.0
  %v340 = vadd.f32 %v338, %v339
  %v341 = vrot.slane %v340, 4
  %v342 = vadd.f32 %v340, %v341
  %v343 = vrot.slane %v342, 2
  %v344 = vadd.f32 %v342, %v343
  %v345 = vrot.slane %v344, 1
  %v346 = vadd.f32 %v344, %v345
  %v347 = vmul.f32 %v215, %v215
  %v348 = vmul.f32 %v220, %v220
  %v349 = vmul.f32 %v225, %v225
  %v350 = vmul.f32 %v230, %v230
  %v351 = vmul.f32 %v235, %v235
  %v352 = vmul.f32 %v240, %v240
  %v353 = vmul.f32 %v245, %v245
  %v354 = vmul.f32 %v250, %v250
  %v355 = vmul.f32 %v255, %v255
  %v356 = vmul.f32 %v260, %v260
  %v357 = vmul.f32 %v265, %v265
  %v358 = vmul.f32 %v270, %v270
  %v359 = vmul.f32 %v275, %v275
  %v360 = vmul.f32 %v280, %v280
  %v361 = vmul.f32 %v285, %v285
  %v362 = vmul.f32 %v290, %v290
  %v363 = vsel %vm293, %v347, 0.0
  %v364 = vsel %vm293, %v348, 0.0
  %v365 = vadd.f32 %v363, %v364
  %v366 = vsel %vm293, %v349, 0.0
  %v367 = vadd.f32 %v365, %v366
  %v368 = vsel %vm293, %v350, 0.0
  %v369 = vadd.f32 %v367, %v368
  %v370 = vsel %vm293, %v351, 0.0
  %v371 = vadd.f32 %v369, %v370
  %v372 = vsel %vm293, %v352, 0.0
  %v373 = vadd.f32 %v371, %v372
  %v374 = vsel %vm293, %v353, 0.0
  %v375 = vadd.f32 %v373, %v374
  %v376 = vsel %vm293, %v354, 0.0
  %v377 = vadd.f32 %v375, %v376
  %v378 = vsel %vm293, %v355, 0.0
  %v379 = vadd.f32 %v377, %v378
  %v380 = vsel %vm293, %v356, 0.0
  %v381 = vadd.f32 %v379, %v380
  %v382 = vsel %vm293, %v357, 0.0
  %v383 = vadd.f32 %v381, %v382
  %v384 = vsel %vm293, %v358, 0.0
  %v385 = vadd.f32 %v383, %v384
  %v386 = vsel %vm293, %v359, 0.0
  %v387 = vadd.f32 %v385, %v386
  %v388 = vsel %vm293, %v360, 0.0
  %v389 = vadd.f32 %v387, %v388
  %v390 = vsel %vm293, %v361, 0.0
  %v391 = vadd.f32 %v389, %v390
  %v392 = vsel %vm293, %v362, 0.0
  %v393 = vadd.f32 %v391, %v392
  %v394 = vrot.slane %v393, 4
  %v395 = vadd.f32 %v393, %v394
  %v396 = vrot.slane %v395, 2
  %v397 = vadd.f32 %v395, %v396
  %v398 = vrot.slane %v397, 1
  %v399 = vadd.f32 %v397, %v398
  %vm400 = vcmask 1040384
  %v401 = vsel %vm400, %v346, %v399
  %vm402 = vcmask 517120
  %403 = vst.msk [vmem:[%s5] sm:$0x3] %vm402, %v401
  // Predicated region
  $region18: #{bottleneck_forward.9} parent=0 // pred_check
    _
  $region19: #{bottleneck_forward.9} parent=0 // pred_check_branch
    %405 = sbr.rel (0) target = $region21
  $region20: #{bottleneck_forward.9} parent=0 // pred_region
    _
  $region21: #{bottleneck_forward.9} parent=0 // pred_fallthru
    _
  // Predicated region
  $region22: #{bottleneck_forward.9} parent=0 // pred_check
    _
  $region23: #{bottleneck_forward.9} parent=0 // pred_check_branch
    %407 = sbr.rel (0) target = $region25
  $region24: #{bottleneck_forward.9} parent=0 // pred_region
    _
  $region25: #{bottleneck_forward.9} parent=0 // pred_fallthru
    _
  // Predicated region
  $region26: #{bottleneck_forward.9} parent=0 // pred_check
    _
  $region27: #{bottleneck_forward.9} parent=0 // pred_check_branch
    %409 = sbr.rel (0) target = $region29
  $region28: #{bottleneck_forward.9} parent=0 // pred_region
    _
  $region29: #{bottleneck_forward.9} parent=0 // pred_fallthru
    _
  // Predicated region
  $region30: #{bottleneck_forward.9} parent=0 // pred_check
    _
  $region31: #{bottleneck_forward.9} parent=0 // pred_check_branch
    %411 = sbr.rel (0) target = $region33
  $region32: #{bottleneck_forward.9} parent=0 // pred_region
    _
  $region33: #{bottleneck_forward.9} parent=0 // pred_fallthru
    _

// kernel: bottleneck_forward.10
$region0: #{bottleneck_forward.10}
  #allocation0 [shape = 'u32[]', space=smem, size = 0x4, offset = 0x4, fixed_abs, tag = 'smem constant byte address 0x4 - core index']
  #allocation1 [shape = 'u32[144,128]{1,0:T(1,128)}', space=vmem, size = 0x12000, scoped, tag = 'internal scratch']
  %s0 = inlined_call_operand.vmem [shape: f32[128,16], index: 0, kind: input, shape index: {}]
  %s1 = inlined_call_operand.vmem [shape: f32[16,64], index: 1, kind: input, shape index: {}]
  %s2 = inlined_call_operand.vmem [shape: f32[128,64], index: 2, kind: output, shape index: {0}]
  %s3 = inlined_call_operand.vmem [shape: f32[1,2,64], index: 3, kind: output, shape index: {1}]
  %4 = xla_tuple %s2, %s3
  %s5 = sld [smem:[#allocation0]]
  $region26: #{bottleneck_forward.10} parent=0
    _
  %s7 = ssub.s32 1, %s5
  %s8 = scalar_select 0, %s7, %s5
  // Predicated region
  $region2: #{bottleneck_forward.10} parent=0 // pred_check
    _
  $region3: #{bottleneck_forward.10} parent=0 // pred_check_branch
    %10 = sbr.rel (0) target = $region5
  $region4: #{bottleneck_forward.10} parent=0 // pred_region
    _
  $region5: #{bottleneck_forward.10} parent=0 // pred_fallthru
    _
  // Predicated region
  $region6: #{bottleneck_forward.10} parent=0 // pred_check
    _
  $region7: #{bottleneck_forward.10} parent=0 // pred_check_branch
    %12 = sbr.rel (0) target = $region9
  $region8: #{bottleneck_forward.10} parent=0 // pred_region
    _
  $region9: #{bottleneck_forward.10} parent=0 // pred_fallthru
    _
  %v13 = vld [vmem:[%s0] sm:$0xff]
  %v14 = vld [vmem:[%s0 + $0x8] sm:$0xff]
  %v15 = vld [vmem:[%s0 + $0x10] sm:$0xff]
  %v16 = vld [vmem:[%s0 + $0x18] sm:$0xff]
  %v17 = vld [vmem:[%s0 + $0x20] sm:$0xff]
  %v18 = vld [vmem:[%s0 + $0x28] sm:$0xff]
  %v19 = vld [vmem:[%s0 + $0x30] sm:$0xff]
  %v20 = vld [vmem:[%s0 + $0x38] sm:$0xff]
  %v21 = vld [vmem:[%s0 + $0x40] sm:$0xff]
  %v22 = vld [vmem:[%s0 + $0x48] sm:$0xff]
  %v23 = vld [vmem:[%s0 + $0x50] sm:$0xff]
  %v24 = vld [vmem:[%s0 + $0x58] sm:$0xff]
  %v25 = vld [vmem:[%s0 + $0x60] sm:$0xff]
  %v26 = vld [vmem:[%s0 + $0x68] sm:$0xff]
  %v27 = vld [vmem:[%s0 + $0x70] sm:$0xff]
  %v28 = vld [vmem:[%s0 + $0x78] sm:$0xff]
  %v29 = vld [vmem:[%s1] sm:$0xff]
  %v30 = vld [vmem:[%s1 + $0x8] sm:$0xff]
  %vm31 = vcmask 130048
  %v33 = vsel %vm31, %v13, 0
  %v36 = vsel %vm31, %v14, 0
  %v39 = vsel %vm31, %v15, 0
  %v42 = vsel %vm31, %v16, 0
  %v45 = vsel %vm31, %v17, 0
  %v48 = vsel %vm31, %v18, 0
  %v51 = vsel %vm31, %v19, 0
  %v54 = vsel %vm31, %v20, 0
  %v57 = vsel %vm31, %v21, 0
  %v60 = vsel %vm31, %v22, 0
  %v63 = vsel %vm31, %v23, 0
  %v66 = vsel %vm31, %v24, 0
  %v69 = vsel %vm31, %v25, 0
  %v72 = vsel %vm31, %v26, 0
  %v75 = vsel %vm31, %v27, 0
  %v78 = vsel %vm31, %v28, 0
  %80 = vmatprep.subr.mxu0 0.0
  %81 = vmatpush1.msra.mxu0 %v29
  %82 = vmatprep.subr.mxu0 0.0
  %83 = vmatpush1.msra.mxu0 %v30
  %84 = vmatprep.subr.mxu0 0.0
  %85 = vmatpush1.msra.mxu0 0.0
  %86 = vmatprep.subr.mxu0 0.0
  %87 = vmatpush1.msra.mxu0 0.0
  %88 = vmatprep.subr.mxu0 0.0
  %89 = vmatpush1.msra.mxu0 0.0
  %90 = vmatprep.subr.mxu0 0.0
  %91 = vmatpush1.msra.mxu0 0.0
  %92 = vmatprep.subr.mxu0 0.0
  %93 = vmatpush1.msra.mxu0 0.0
  %94 = vmatprep.subr.mxu0 0.0
  %95 = vmatpush1.msra.mxu0 0.0
  %96 = vmatprep.subr.mxu0 0.0
  %97 = vmatpush1.msra.mxu0 0.0
  %98 = vmatprep.subr.mxu0 0.0
  %99 = vmatpush1.msra.mxu0 0.0
  %100 = vmatprep.subr.mxu0 0.0
  %101 = vmatpush1.msra.mxu0 0.0
  %102 = vmatprep.subr.mxu0 0.0
  %103 = vmatpush1.msra.mxu0 0.0
  %104 = vmatprep.subr.mxu0 0.0
  %105 = vmatpush1.msra.mxu0 0.0
  %106 = vmatprep.subr.mxu0 0.0
  %107 = vmatpush1.msra.mxu0 0.0
  %108 = vmatprep.subr.mxu0 0.0
  %109 = vmatpush1.msra.mxu0 0.0
  %110 = vmatprep.subr.mxu0 0.0
  %111 = vmatpush1.msra.mxu0 0.0
  %112 = vmatprep.subr.mxu0 0.0
  %113 = vmatpush1.msra.mxu0 0.0
  %114 = vmatprep.subr.mxu0 0.0
  %115 = vmatpush1.msra.mxu0 0.0
  %116 = vmatprep.subr.mxu0 0.0
  %117 = vmatpush1.msra.mxu0 0.0
  %118 = vmatprep.subr.mxu0 0.0
  %119 = vmatpush1.msra.mxu0 0.0
  %120 = vmatprep.subr.mxu0 0.0
  %121 = vmatpush1.msra.mxu0 0.0
  %122 = vmatprep.subr.mxu0 0.0
  %123 = vmatpush1.msra.mxu0 0.0
  %124 = vmatprep.subr.mxu0 0.0
  %125 = vmatpush1.msra.mxu0 0.0
  %126 = vmatprep.subr.mxu0 0.0
  %127 = vmatpush1.msra.mxu0 0.0
  %128 = vmatprep.subr.mxu0 0.0
  %129 = vmatpush1.msra.mxu0 0.0
  %130 = vmatprep.subr.mxu0 0.0
  %131 = vmatpush1.msra.mxu0 0.0
  %132 = vmatprep.subr.mxu0 0.0
  %133 = vmatpush1.msra.mxu0 0.0
  %134 = vmatprep.subr.mxu0 0.0
  %135 = vmatpush1.msra.mxu0 0.0
  %136 = vmatprep.subr.mxu0 0.0
  %137 = vmatpush1.msra.mxu0 0.0
  %138 = vmatprep.subr.mxu0 0.0
  %139 = vmatpush1.msra.mxu0 0.0
  %140 = vmatprep.subr.mxu0 0.0
  %141 = vmatpush1.msra.mxu0 0.0
  %142 = vmatprep.subr.mxu0 0.0
  %143 = vmatpush1.msra.mxu0 0.0
  %144 = vmatprep.mubr.f32.mxu0 0.0
  %145 = vmatmul.mubr.f32.gmra.mrb[0].mxu0 %v33
  %v146 = vpop.f32.mrb[0].mxu0
  %v147 = vadd.f32 0.0, %v146
  %v148 = vpop.f32.mrb[0].mxu0
  %149 = vmatprep.mubr.f32.mxu0 0.0
  %150 = vmatmul.mubr.f32.gmra.mrb[0].mxu0 %v36
  %v151 = vpop.f32.mrb[0].mxu0
  %v152 = vadd.f32 0.0, %v151
  %v153 = vpop.f32.mrb[0].mxu0
  %154 = vmatprep.mubr.f32.mxu0 0.0
  %155 = vmatmul.mubr.f32.gmra.mrb[0].mxu0 %v39
  %v156 = vpop.f32.mrb[0].mxu0
  %v157 = vadd.f32 0.0, %v156
  %v158 = vpop.f32.mrb[0].mxu0
  %159 = vmatprep.mubr.f32.mxu0 0.0
  %160 = vmatmul.mubr.f32.gmra.mrb[0].mxu0 %v42
  %v161 = vpop.f32.mrb[0].mxu0
  %v162 = vadd.f32 0.0, %v161
  %v163 = vpop.f32.mrb[0].mxu0
  %164 = vmatprep.mubr.f32.mxu0 0.0
  %165 = vmatmul.mubr.f32.gmra.mrb[0].mxu0 %v45
  %v166 = vpop.f32.mrb[0].mxu0
  %v167 = vadd.f32 0.0, %v166
  %v168 = vpop.f32.mrb[0].mxu0
  %169 = vmatprep.mubr.f32.mxu0 0.0
  %170 = vmatmul.mubr.f32.gmra.mrb[0].mxu0 %v48
  %v171 = vpop.f32.mrb[0].mxu0
  %v172 = vadd.f32 0.0, %v171
  %v173 = vpop.f32.mrb[0].mxu0
  %174 = vmatprep.mubr.f32.mxu0 0.0
  %175 = vmatmul.mubr.f32.gmra.mrb[0].mxu0 %v51
  %v176 = vpop.f32.mrb[0].mxu0
  %v177 = vadd.f32 0.0, %v176
  %v178 = vpop.f32.mrb[0].mxu0
  %179 = vmatprep.mubr.f32.mxu0 0.0
  %180 = vmatmul.mubr.f32.gmra.mrb[0].mxu0 %v54
  %v181 = vpop.f32.mrb[0].mxu0
  %v182 = vadd.f32 0.0, %v181
  %v183 = vpop.f32.mrb[0].mxu0
  %184 = vmatprep.mubr.f32.mxu0 0.0
  %185 = vmatmul.mubr.f32.gmra.mrb[0].mxu0 %v57
  %v186 = vpop.f32.mrb[0].mxu0
  %v187 = vadd.f32 0.0, %v186
  %v188 = vpop.f32.mrb[0].mxu0
  %189 = vmatprep.mubr.f32.mxu0 0.0
  %190 = vmatmul.mubr.f32.gmra.mrb[0].mxu0 %v60
  %v191 = vpop.f32.mrb[0].mxu0
  %v192 = vadd.f32 0.0, %v191
  %v193 = vpop.f32.mrb[0].mxu0
  %194 = vmatprep.mubr.f32.mxu0 0.0
  %195 = vmatmul.mubr.f32.gmra.mrb[0].mxu0 %v63
  %v196 = vpop.f32.mrb[0].mxu0
  %v197 = vadd.f32 0.0, %v196
  %v198 = vpop.f32.mrb[0].mxu0
  %199 = vmatprep.mubr.f32.mxu0 0.0
  %200 = vmatmul.mubr.f32.gmra.mrb[0].mxu0 %v66
  %v201 = vpop.f32.mrb[0].mxu0
  %v202 = vadd.f32 0.0, %v201
  %v203 = vpop.f32.mrb[0].mxu0
  %204 = vmatprep.mubr.f32.mxu0 0.0
  %205 = vmatmul.mubr.f32.gmra.mrb[0].mxu0 %v69
  %v206 = vpop.f32.mrb[0].mxu0
  %v207 = vadd.f32 0.0, %v206
  %v208 = vpop.f32.mrb[0].mxu0
  %209 = vmatprep.mubr.f32.mxu0 0.0
  %210 = vmatmul.mubr.f32.gmra.mrb[0].mxu0 %v72
  %v211 = vpop.f32.mrb[0].mxu0
  %v212 = vadd.f32 0.0, %v211
  %v213 = vpop.f32.mrb[0].mxu0
  %214 = vmatprep.mubr.f32.mxu0 0.0
  %215 = vmatmul.mubr.f32.gmra.mrb[0].mxu0 %v75
  %v216 = vpop.f32.mrb[0].mxu0
  %v217 = vadd.f32 0.0, %v216
  %v218 = vpop.f32.mrb[0].mxu0
  %219 = vmatprep.mubr.f32.mxu0 0.0
  %220 = vmatmul.mubr.f32.gmra.mrb[0].mxu0 %v78
  %v221 = vpop.f32.mrb[0].mxu0
  %v222 = vadd.f32 0.0, %v221
  %v223 = vpop.f32.mrb[0].mxu0
  %224 = vdwg.mxu0
  %vm225 = vcmask 523264
  %226 = vst.msk [vmem:[%s2] sm:$0xff] %vm225, %v147
  %227 = vst.msk [vmem:[%s2 + $0x8] sm:$0xff] %vm225, %v152
  %228 = vst.msk [vmem:[%s2 + $0x10] sm:$0xff] %vm225, %v157
  %229 = vst.msk [vmem:[%s2 + $0x18] sm:$0xff] %vm225, %v162
  %230 = vst.msk [vmem:[%s2 + $0x20] sm:$0xff] %vm225, %v167
  %231 = vst.msk [vmem:[%s2 + $0x28] sm:$0xff] %vm225, %v172
  %232 = vst.msk [vmem:[%s2 + $0x30] sm:$0xff] %vm225, %v177
  %233 = vst.msk [vmem:[%s2 + $0x38] sm:$0xff] %vm225, %v182
  %234 = vst.msk [vmem:[%s2 + $0x40] sm:$0xff] %vm225, %v187
  %235 = vst.msk [vmem:[%s2 + $0x48] sm:$0xff] %vm225, %v192
  %236 = vst.msk [vmem:[%s2 + $0x50] sm:$0xff] %vm225, %v197
  %237 = vst.msk [vmem:[%s2 + $0x58] sm:$0xff] %vm225, %v202
  %238 = vst.msk [vmem:[%s2 + $0x60] sm:$0xff] %vm225, %v207
  %239 = vst.msk [vmem:[%s2 + $0x68] sm:$0xff] %vm225, %v212
  %240 = vst.msk [vmem:[%s2 + $0x70] sm:$0xff] %vm225, %v217
  %241 = vst.msk [vmem:[%s2 + $0x78] sm:$0xff] %vm225, %v222
  %v242 = vsel %vm225, %v147, 0.0
  %v243 = vsel %vm225, %v152, 0.0
  %v244 = vadd.f32 %v242, %v243
  %v245 = vsel %vm225, %v157, 0.0
  %v246 = vadd.f32 %v244, %v245
  %v247 = vsel %vm225, %v162, 0.0
  %v248 = vadd.f32 %v246, %v247
  %v249 = vsel %vm225, %v167, 0.0
  %v250 = vadd.f32 %v248, %v249
  %v251 = vsel %vm225, %v172, 0.0
  %v252 = vadd.f32 %v250, %v251
  %v253 = vsel %vm225, %v177, 0.0
  %v254 = vadd.f32 %v252, %v253
  %v255 = vsel %vm225, %v182, 0.0
  %v256 = vadd.f32 %v254, %v255
  %v257 = vsel %vm225, %v187, 0.0
  %v258 = vadd.f32 %v256, %v257
  %v259 = vsel %vm225, %v192, 0.0
  %v260 = vadd.f32 %v258, %v259
  %v261 = vsel %vm225, %v197, 0.0
  %v262 = vadd.f32 %v260, %v261
  %v263 = vsel %vm225, %v202, 0.0
  %v264 = vadd.f32 %v262, %v263
  %v265 = vsel %vm225, %v207, 0.0
  %v266 = vadd.f32 %v264, %v265
  %v267 = vsel %vm225, %v212, 0.0
  %v268 = vadd.f32 %v266, %v267
  %v269 = vsel %vm225, %v217, 0.0
  %v270 = vadd.f32 %v268, %v269
  %v271 = vsel %vm225, %v222, 0.0
  %v272 = vadd.f32 %v270, %v271
  %v273 = vrot.slane %v272, 4
  %v274 = vadd.f32 %v272, %v273
  %v275 = vrot.slane %v274, 2
  %v276 = vadd.f32 %v274, %v275
  %v277 = vrot.slane %v276, 1
  %v278 = vadd.f32 %v276, %v277
  %v279 = vmul.f32 %v147, %v147
  %v280 = vmul.f32 %v152, %v152
  %v281 = vmul.f32 %v157, %v157
  %v282 = vmul.f32 %v162, %v162
  %v283 = vmul.f32 %v167, %v167
  %v284 = vmul.f32 %v172, %v172
  %v285 = vmul.f32 %v177, %v177
  %v286 = vmul.f32 %v182, %v182
  %v287 = vmul.f32 %v187, %v187
  %v288 = vmul.f32 %v192, %v192
  %v289 = vmul.f32 %v197, %v197
  %v290 = vmul.f32 %v202, %v202
  %v291 = vmul.f32 %v207, %v207
  %v292 = vmul.f32 %v212, %v212
  %v293 = vmul.f32 %v217, %v217
  %v294 = vmul.f32 %v222, %v222
  %v295 = vsel %vm225, %v279, 0.0
  %v296 = vsel %vm225, %v280, 0.0
  %v297 = vadd.f32 %v295, %v296
  %v298 = vsel %vm225, %v281, 0.0
  %v299 = vadd.f32 %v297, %v298
  %v300 = vsel %vm225, %v282, 0.0
  %v301 = vadd.f32 %v299, %v300
  %v302 = vsel %vm225, %v283, 0.0
  %v303 = vadd.f32 %v301, %v302
  %v304 = vsel %vm225, %v284, 0.0
  %v305 = vadd.f32 %v303, %v304
  %v306 = vsel %vm225, %v285, 0.0
  %v307 = vadd.f32 %v305, %v306
  %v308 = vsel %vm225, %v286, 0.0
  %v309 = vadd.f32 %v307, %v308
  %v310 = vsel %vm225, %v287, 0.0
  %v311 = vadd.f32 %v309, %v310
  %v312 = vsel %vm225, %v288, 0.0
  %v313 = vadd.f32 %v311, %v312
  %v314 = vsel %vm225, %v289, 0.0
  %v315 = vadd.f32 %v313, %v314
  %v316 = vsel %vm225, %v290, 0.0
  %v317 = vadd.f32 %v315, %v316
  %v318 = vsel %vm225, %v291, 0.0
  %v319 = vadd.f32 %v317, %v318
  %v320 = vsel %vm225, %v292, 0.0
  %v321 = vadd.f32 %v319, %v320
  %v322 = vsel %vm225, %v293, 0.0
  %v323 = vadd.f32 %v321, %v322
  %v324 = vsel %vm225, %v294, 0.0
  %v325 = vadd.f32 %v323, %v324
  %v326 = vrot.slane %v325, 4
  %v327 = vadd.f32 %v325, %v326
  %v328 = vrot.slane %v327, 2
  %v329 = vadd.f32 %v327, %v328
  %v330 = vrot.slane %v329, 1
  %v331 = vadd.f32 %v329, %v330
  %vm332 = vcmask 1040384
  %v333 = vsel %vm332, %v278, %v331
  %vm334 = vcmask 517120
  %335 = vst.msk [vmem:[%s3] sm:$0x3] %vm334, %v333
  // Predicated region
  $region10: #{bottleneck_forward.10} parent=0 // pred_check
    _
  $region11: #{bottleneck_forward.10} parent=0 // pred_check_branch
    %337 = sbr.rel (0) target = $region13
  $region12: #{bottleneck_forward.10} parent=0 // pred_region
    _
  $region13: #{bottleneck_forward.10} parent=0 // pred_fallthru
    _
  // Predicated region
  $region14: #{bottleneck_forward.10} parent=0 // pred_check
    _
  $region15: #{bottleneck_forward.10} parent=0 // pred_check_branch
    %339 = sbr.rel (0) target = $region17
  $region16: #{bottleneck_forward.10} parent=0 // pred_region
    _
  $region17: #{bottleneck_forward.10} parent=0 // pred_fallthru
    _
  // Predicated region
  $region18: #{bottleneck_forward.10} parent=0 // pred_check
    _
  $region19: #{bottleneck_forward.10} parent=0 // pred_check_branch
    %341 = sbr.rel (0) target = $region21
  $region20: #{bottleneck_forward.10} parent=0 // pred_region
    _
  $region21: #{bottleneck_forward.10} parent=0 // pred_fallthru
    _
  // Predicated region
  $region22: #{bottleneck_forward.10} parent=0 // pred_check
    _
  $region23: #{bottleneck_forward.10} parent=0 // pred_check_branch
    %343 = sbr.rel (0) target = $region25
  $region24: #{bottleneck_forward.10} parent=0 // pred_region
    _
  $region25: #{bottleneck_forward.10} parent=0 // pred_fallthru
    _

// kernel: bottleneck_forward.11
$region0: #{bottleneck_forward.11}
  #allocation0 [shape = 'u32[]', space=smem, size = 0x4, offset = 0x4, fixed_abs, tag = 'smem constant byte address 0x4 - core index']
  #allocation1 [shape = 'u32[144,128]{1,0:T(1,128)}', space=vmem, size = 0x12000, scoped, tag = 'internal scratch']
  %s0 = inlined_call_operand.vmem [shape: f32[128,64], index: 0, kind: input, shape index: {}]
  %s1 = inlined_call_operand.vmem [shape: f32[128,64], index: 1, kind: input, shape index: {}]
  %s2 = inlined_call_operand.vmem [shape: f32[1,64], index: 2, kind: input, shape index: {}]
  %s3 = inlined_call_operand.vmem [shape: f32[1,64], index: 3, kind: input, shape index: {}]
  %s4 = inlined_call_operand.vmem [shape: f32[1,64], index: 4, kind: input, shape index: {}]
  %s5 = inlined_call_operand.vmem [shape: f32[1,64], index: 5, kind: input, shape index: {}]
  %s6 = inlined_call_operand.hbm [shape: f32[128,64], index: 6, kind: output, shape index: {}]
  %s7 = sld [smem:[#allocation0]]
  $region34: #{bottleneck_forward.11} parent=0
    _
  %s9 = ssub.s32 1, %s7
  %s10 = scalar_select 0, %s9, %s7
  $region1: #{bottleneck_forward.11} parent=0
    #allocation2 [shape = 'u8[65536]{0}', space=vmem, size = 0x10000, scoped, tag = 'output window, operand 0, single buffered']
    #allocation3 [shape = 's32[1]{0}', space=sflag, size = 0x4, scoped, tag = 'scoped memory for bottleneck_forward.11']
    %11 = vsyncpa [#allocation3], 0
    // Predicated region
    $region2: #{bottleneck_forward.11} parent=1 // pred_check
      _
    $region3: #{bottleneck_forward.11} parent=1 // pred_check_branch
      %13 = sbr.rel (0) target = $region5
    $region4: #{bottleneck_forward.11} parent=1 // pred_region
      _
    $region5: #{bottleneck_forward.11} parent=1 // pred_fallthru
      _
    // Predicated region
    $region6: #{bottleneck_forward.11} parent=1 // pred_check
      _
    $region7: #{bottleneck_forward.11} parent=1 // pred_check_branch
      %15 = sbr.rel (0) target = $region9
    $region8: #{bottleneck_forward.11} parent=1 // pred_region
      _
    $region9: #{bottleneck_forward.11} parent=1 // pred_fallthru
      _
    // Predicated region
    $region10: #{bottleneck_forward.11} parent=1 // pred_check
      _
    $region11: #{bottleneck_forward.11} parent=1 // pred_check_branch
      %17 = sbr.rel (0) target = $region13
    $region12: #{bottleneck_forward.11} parent=1 // pred_region
      _
    $region13: #{bottleneck_forward.11} parent=1 // pred_fallthru
      _
    // Predicated region
    $region14: #{bottleneck_forward.11} parent=1 // pred_check
      _
    $region15: #{bottleneck_forward.11} parent=1 // pred_check_branch
      %19 = sbr.rel (0) target = $region17
    $region16: #{bottleneck_forward.11} parent=1 // pred_region
      _
    $region17: #{bottleneck_forward.11} parent=1 // pred_fallthru
      _
    // Predicated region
    $region18: #{bottleneck_forward.11} parent=1 // pred_check
      _
    $region19: #{bottleneck_forward.11} parent=1 // pred_check_branch
      %21 = sbr.rel (0) target = $region21
    $region20: #{bottleneck_forward.11} parent=1 // pred_region
      _
    $region21: #{bottleneck_forward.11} parent=1 // pred_fallthru
      _
    // Predicated region
    $region22: #{bottleneck_forward.11} parent=1 // pred_check
      _
    $region23: #{bottleneck_forward.11} parent=1 // pred_check_branch
      %23 = sbr.rel (0) target = $region25
    $region24: #{bottleneck_forward.11} parent=1 // pred_region
      _
    $region25: #{bottleneck_forward.11} parent=1 // pred_fallthru
      _
    %v24 = vld [vmem:[%s0] sm:$0xff]
    %v25 = vld [vmem:[%s0 + $0x8] sm:$0xff]
    %v26 = vld [vmem:[%s0 + $0x10] sm:$0xff]
    %v27 = vld [vmem:[%s0 + $0x18] sm:$0xff]
    %v28 = vld [vmem:[%s0 + $0x20] sm:$0xff]
    %v29 = vld [vmem:[%s0 + $0x28] sm:$0xff]
    %v30 = vld [vmem:[%s0 + $0x30] sm:$0xff]
    %v31 = vld [vmem:[%s0 + $0x38] sm:$0xff]
    %v32 = vld [vmem:[%s0 + $0x40] sm:$0xff]
    %v33 = vld [vmem:[%s0 + $0x48] sm:$0xff]
    %v34 = vld [vmem:[%s0 + $0x50] sm:$0xff]
    %v35 = vld [vmem:[%s0 + $0x58] sm:$0xff]
    %v36 = vld [vmem:[%s0 + $0x60] sm:$0xff]
    %v37 = vld [vmem:[%s0 + $0x68] sm:$0xff]
    %v38 = vld [vmem:[%s0 + $0x70] sm:$0xff]
    %v39 = vld [vmem:[%s0 + $0x78] sm:$0xff]
    %v40 = vld [vmem:[%s2] sm:$0x1]
    %v42 = vlaneseq
    %v43 = vshrl.u32 %v42, 7
    %v44 = vsub.s32 0, %v43
    %v45 = vrot.slane %v40, %v44
    %v47 = vmul.f32 %v24, %v45
    %v48 = vmul.f32 %v25, %v45
    %v49 = vmul.f32 %v26, %v45
    %v50 = vmul.f32 %v27, %v45
    %v51 = vmul.f32 %v28, %v45
    %v52 = vmul.f32 %v29, %v45
    %v53 = vmul.f32 %v30, %v45
    %v54 = vmul.f32 %v31, %v45
    %v55 = vmul.f32 %v32, %v45
    %v56 = vmul.f32 %v33, %v45
    %v57 = vmul.f32 %v34, %v45
    %v58 = vmul.f32 %v35, %v45
    %v59 = vmul.f32 %v36, %v45
    %v60 = vmul.f32 %v37, %v45
    %v61 = vmul.f32 %v38, %v45
    %v62 = vmul.f32 %v39, %v45
    %v63 = vld [vmem:[%s3] sm:$0x1]
    %v65 = vlaneseq
    %v66 = vshrl.u32 %v65, 7
    %v67 = vsub.s32 0, %v66
    %v68 = vrot.slane %v63, %v67
    %v70 = vadd.f32 %v47, %v68
    %v71 = vadd.f32 %v48, %v68
    %v72 = vadd.f32 %v49, %v68
    %v73 = vadd.f32 %v50, %v68
    %v74 = vadd.f32 %v51, %v68
    %v75 = vadd.f32 %v52, %v68
    %v76 = vadd.f32 %v53, %v68
    %v77 = vadd.f32 %v54, %v68
    %v78 = vadd.f32 %v55, %v68
    %v79 = vadd.f32 %v56, %v68
    %v80 = vadd.f32 %v57, %v68
    %v81 = vadd.f32 %v58, %v68
    %v82 = vadd.f32 %v59, %v68
    %v83 = vadd.f32 %v60, %v68
    %v84 = vadd.f32 %v61, %v68
    %v85 = vadd.f32 %v62, %v68
    %v86 = vld [vmem:[%s1] sm:$0xff]
    %v87 = vld [vmem:[%s1 + $0x8] sm:$0xff]
    %v88 = vld [vmem:[%s1 + $0x10] sm:$0xff]
    %v89 = vld [vmem:[%s1 + $0x18] sm:$0xff]
    %v90 = vld [vmem:[%s1 + $0x20] sm:$0xff]
    %v91 = vld [vmem:[%s1 + $0x28] sm:$0xff]
    %v92 = vld [vmem:[%s1 + $0x30] sm:$0xff]
    %v93 = vld [vmem:[%s1 + $0x38] sm:$0xff]
    %v94 = vld [vmem:[%s1 + $0x40] sm:$0xff]
    %v95 = vld [vmem:[%s1 + $0x48] sm:$0xff]
    %v96 = vld [vmem:[%s1 + $0x50] sm:$0xff]
    %v97 = vld [vmem:[%s1 + $0x58] sm:$0xff]
    %v98 = vld [vmem:[%s1 + $0x60] sm:$0xff]
    %v99 = vld [vmem:[%s1 + $0x68] sm:$0xff]
    %v100 = vld [vmem:[%s1 + $0x70] sm:$0xff]
    %v101 = vld [vmem:[%s1 + $0x78] sm:$0xff]
    %v102 = vld [vmem:[%s4] sm:$0x1]
    %v104 = vlaneseq
    %v105 = vshrl.u32 %v104, 7
    %v106 = vsub.s32 0, %v105
    %v107 = vrot.slane %v102, %v106
    %v109 = vmul.f32 %v86, %v107
    %v110 = vmul.f32 %v87, %v107
    %v111 = vmul.f32 %v88, %v107
    %v112 = vmul.f32 %v89, %v107
    %v113 = vmul.f32 %v90, %v107
    %v114 = vmul.f32 %v91, %v107
    %v115 = vmul.f32 %v92, %v107
    %v116 = vmul.f32 %v93, %v107
    %v117 = vmul.f32 %v94, %v107
    %v118 = vmul.f32 %v95, %v107
    %v119 = vmul.f32 %v96, %v107
    %v120 = vmul.f32 %v97, %v107
    %v121 = vmul.f32 %v98, %v107
    %v122 = vmul.f32 %v99, %v107
    %v123 = vmul.f32 %v100, %v107
    %v124 = vmul.f32 %v101, %v107
    %v125 = vld [vmem:[%s5] sm:$0x1]
    %v127 = vlaneseq
    %v128 = vshrl.u32 %v127, 7
    %v129 = vsub.s32 0, %v128
    %v130 = vrot.slane %v125, %v129
    %v132 = vadd.f32 %v109, %v130
    %v133 = vadd.f32 %v110, %v130
    %v134 = vadd.f32 %v111, %v130
    %v135 = vadd.f32 %v112, %v130
    %v136 = vadd.f32 %v113, %v130
    %v137 = vadd.f32 %v114, %v130
    %v138 = vadd.f32 %v115, %v130
    %v139 = vadd.f32 %v116, %v130
    %v140 = vadd.f32 %v117, %v130
    %v141 = vadd.f32 %v118, %v130
    %v142 = vadd.f32 %v119, %v130
    %v143 = vadd.f32 %v120, %v130
    %v144 = vadd.f32 %v121, %v130
    %v145 = vadd.f32 %v122, %v130
    %v146 = vadd.f32 %v123, %v130
    %v147 = vadd.f32 %v124, %v130
    %v148 = vadd.f32 %v70, %v132
    %v149 = vadd.f32 %v71, %v133
    %v150 = vadd.f32 %v72, %v134
    %v151 = vadd.f32 %v73, %v135
    %v152 = vadd.f32 %v74, %v136
    %v153 = vadd.f32 %v75, %v137
    %v154 = vadd.f32 %v76, %v138
    %v155 = vadd.f32 %v77, %v139
    %v156 = vadd.f32 %v78, %v140
    %v157 = vadd.f32 %v79, %v141
    %v158 = vadd.f32 %v80, %v142
    %v159 = vadd.f32 %v81, %v143
    %v160 = vadd.f32 %v82, %v144
    %v161 = vadd.f32 %v83, %v145
    %v162 = vadd.f32 %v84, %v146
    %v163 = vadd.f32 %v85, %v147
    %v164 = vmax.f32 %v148, 0.0
    %v165 = vmax.f32 %v149, 0.0
    %v166 = vmax.f32 %v150, 0.0
    %v167 = vmax.f32 %v151, 0.0
    %v168 = vmax.f32 %v152, 0.0
    %v169 = vmax.f32 %v153, 0.0
    %v170 = vmax.f32 %v154, 0.0
    %v171 = vmax.f32 %v155, 0.0
    %v172 = vmax.f32 %v156, 0.0
    %v173 = vmax.f32 %v157, 0.0
    %v174 = vmax.f32 %v158, 0.0
    %v175 = vmax.f32 %v159, 0.0
    %v176 = vmax.f32 %v160, 0.0
    %v177 = vmax.f32 %v161, 0.0
    %v178 = vmax.f32 %v162, 0.0
    %v179 = vmax.f32 %v163, 0.0
    %vm180 = vcmask 523264
    %181 = vst.msk [vmem:[#allocation2] sm:$0xff] %vm180, %v164
    %182 = vst.msk [vmem:[#allocation2 + $0x8] sm:$0xff] %vm180, %v165
    %183 = vst.msk [vmem:[#allocation2 + $0x10] sm:$0xff] %vm180, %v166
    %184 = vst.msk [vmem:[#allocation2 + $0x18] sm:$0xff] %vm180, %v167
    %185 = vst.msk [vmem:[#allocation2 + $0x20] sm:$0xff] %vm180, %v168
    %186 = vst.msk [vmem:[#allocation2 + $0x28] sm:$0xff] %vm180, %v169
    %187 = vst.msk [vmem:[#allocation2 + $0x30] sm:$0xff] %vm180, %v170
    %188 = vst.msk [vmem:[#allocation2 + $0x38] sm:$0xff] %vm180, %v171
    %189 = vst.msk [vmem:[#allocation2 + $0x40] sm:$0xff] %vm180, %v172
    %190 = vst.msk [vmem:[#allocation2 + $0x48] sm:$0xff] %vm180, %v173
    %191 = vst.msk [vmem:[#allocation2 + $0x50] sm:$0xff] %vm180, %v174
    %192 = vst.msk [vmem:[#allocation2 + $0x58] sm:$0xff] %vm180, %v175
    %193 = vst.msk [vmem:[#allocation2 + $0x60] sm:$0xff] %vm180, %v176
    %194 = vst.msk [vmem:[#allocation2 + $0x68] sm:$0xff] %vm180, %v177
    %195 = vst.msk [vmem:[#allocation2 + $0x70] sm:$0xff] %vm180, %v178
    %196 = vst.msk [vmem:[#allocation2 + $0x78] sm:$0xff] %vm180, %v179
    // Predicated region
    $region26: #{bottleneck_forward.11} parent=1 // pred_check
      _
    $region27: #{bottleneck_forward.11} parent=1 // pred_check_branch
      %198 = sbr.rel (0) target = $region29
    $region28: #{bottleneck_forward.11} parent=1 // pred_region
      %s200 = ssub.s32 2048, 2048
      %201 = vsyncadd [#allocation3], %s200
      %s202 = sshll.u32 [#allocation2], 4
      %s203 = int_to_ptr.vmem [resolvable:$true] %s202
      %208 = dma.vmem_to_hbm [thread:$0]  %s203, 2048, %s6, [#allocation3], 128, 128, 8
    $region29: #{bottleneck_forward.11} parent=1 // pred_fallthru
      _
    // Predicated region
    $region30: #{bottleneck_forward.11} parent=1 // pred_check
      _
    $region31: #{bottleneck_forward.11} parent=1 // pred_check_branch
      %210 = sbr.rel (0) target = $region33
    $region32: #{bottleneck_forward.11} parent=1 // pred_region
      %211 = dma.done [#allocation3], 2048
    $region33: #{bottleneck_forward.11} parent=1 // pred_fallthru
      _
    %212 = vsyncpa [#allocation3], 1

</llo_original>
